<compile_context>
chip_gen: v6e
topology: v6e:2x2x1
jax: 0.10.0
libtpu: 0.0.40
codegen_flags: <defaults>
</compile_context>

<pallas_src>
import functools

import jax
import jax.numpy as jnp
from jax.experimental import pallas as pl
from jax.experimental.pallas import tpu as pltpu  # noqa: F401  (TPU backend)


# ----------------------------------------------------------------------------
# In-kernel GRU block (value-level, PyTorch gate order [r | z | n]).
# x is (B*T, D) batch-major; returns (B*T, H) batch-major.
# ----------------------------------------------------------------------------
def _gru_block(x, wih, bih, whh, bhh, *, B, T, H):
    gates = jnp.dot(x, wih, preferred_element_type=jnp.float32) + bih       # (B*T, 3H)
    h = jnp.zeros((B, H), jnp.float32)
    hs = []
    for t in range(T):                                                       # unrolled
        g = jnp.concatenate(
            [gates[b * T + t:b * T + t + 1] for b in range(B)], axis=0)      # (B, 3H)
        hg = jnp.dot(h, whh, preferred_element_type=jnp.float32) + bhh       # (B, 3H)
        r = jax.nn.sigmoid(g[:, 0:H] + hg[:, 0:H])
        z = jax.nn.sigmoid(g[:, H:2 * H] + hg[:, H:2 * H])
        n = jnp.tanh(g[:, 2 * H:3 * H] + r * hg[:, 2 * H:3 * H])
        h = (1.0 - z) * n + z * h
        hs.append(h)
    # assemble batch-major (B*T, H): row b*T + t  =  hs[t][b]
    return jnp.concatenate(
        [jnp.concatenate([hs[t][b:b + 1] for t in range(T)], axis=0) for b in range(B)],
        axis=0)


# ----------------------------------------------------------------------------
# The single fused STGCN kernel.
# ----------------------------------------------------------------------------
def _stgcn_kernel(
    x_ref, b_ref, abd_ref,
    fce_w_ref, fce_b_ref,
    conv_w_ref, conv_b_ref,
    bn_g_ref, bn_b_ref,
    fcb_w_ref, fcb_b_ref,
    gcn1_w_ref, gcn1_b_ref,
    gru1_wih_ref, gru1_bih_ref, gru1_whh_ref, gru1_bhh_ref,
    fcc_w_ref, fcc_b_ref,
    gcn2_w_ref, gcn2_b_ref,
    gru2_wih_ref, gru2_bih_ref, gru2_whh_ref, gru2_bhh_ref,
    fcoe_w_ref, fcoe_b_ref,
    fco_w_ref, fco_b_ref,
    out_ref,
    *, B, T_in, T_out, E, H, n_sp, n_tp, bn_eps,
):
    dot = lambda a, b: jnp.dot(a, b, preferred_element_type=jnp.float32)
    relu = lambda v: jnp.maximum(v, 0.0)

    # ---- fc_embed (Dropout(p=0) == identity) ----
    x = dot(x_ref[...], fce_w_ref[...]) + fce_b_ref[...]                     # (B*T_in, E)

    # ---- Conv1d(k=3, pad=1) + ReLU as a single K=3E matmul on a shifted slab ----
    zero_row = jnp.zeros((1, E), jnp.float32)
    prev_parts, next_parts = [], []
    for b in range(B):
        xb = x[b * T_in:(b + 1) * T_in]                                      # (T_in, E)
        prev_parts.append(jnp.concatenate([zero_row, xb[:T_in - 1]], axis=0))
        next_parts.append(jnp.concatenate([xb[1:], zero_row], axis=0))
    slab = jnp.concatenate(
        [jnp.concatenate(prev_parts, axis=0), x, jnp.concatenate(next_parts, axis=0)],
        axis=1)                                                              # (B*T_in, 3E)
    x_conv = relu(dot(slab, conv_w_ref[...]) + conv_b_ref[...])

    # ---- BatchNorm1d (training-mode batch stats); MaxPool1d(1,1)/Dropout(0) = id ----
    mean = jnp.mean(x_conv, axis=0, keepdims=True)
    var = jnp.mean(jnp.square(x_conv - mean), axis=0, keepdims=True)
    x_bn = bn_g_ref[...] * (x_conv - mean) * jax.lax.rsqrt(var + bn_eps) + bn_b_ref[...]

    x = relu(x_bn)                                                           # second ReLU

    # ---- boundary branch ----
    bfeat = dot(b_ref[...], fcb_w_ref[...]) + fcb_b_ref[...]                 # (B*T_out, E//2)

    abd = abd_ref[...]                                                       # block-diag A_norm

    # ---- GCN block 1 (dense GCN stand-in; all layers fused) ----
    # TODO(synk): GCNConv is never defined in the spec; implemented as dense
    # relu(A_norm @ x @ W + b) with A_norm = D^-1/2 (A + I) D^-1/2 over dim 1 of x.
    for i in range(n_sp):
        x = relu(dot(dot(abd, x), gcn1_w_ref[i]) + gcn1_b_ref[i])

    # ---- GRU block 1 ----
    for i in range(n_tp):
        x = _gru_block(x, gru1_wih_ref[i], gru1_bih_ref[i],
                       gru1_whh_ref[i], gru1_bhh_ref[i], B=B, T=T_in, H=H)

    # keep last T_out steps per batch (identity when T_in == T_out)
    if T_out != T_in:
        x = jnp.concatenate(
            [x[b * T_in + (T_in - T_out):(b + 1) * T_in] for b in range(B)], axis=0)

    # ---- concat with boundary features + fc_concat + ReLU ----
    x = jnp.concatenate([x, bfeat], axis=1)                                  # (B*T_out, H+E//2)
    x = relu(dot(x, fcc_w_ref[...]) + fcc_b_ref[...])

    # ---- GCN block 2 ----
    for i in range(n_sp):
        x = relu(dot(dot(abd, x), gcn2_w_ref[i]) + gcn2_b_ref[i])

    # ---- GRU block 2 ----
    for i in range(n_tp):
        x = _gru_block(x, gru2_wih_ref[i], gru2_bih_ref[i],
                       gru2_whh_ref[i], gru2_bhh_ref[i], B=B, T=T_out, H=H)

    # ---- fc_out_embed + residual + ReLU ----
    # TODO(synk): reference `res = x_conv[:, :, -1:]; res.repeat(1, seq_out, 1)`
    # cannot broadcast against (B, seq_out, E); implement the evident intent:
    # last-time-step conv (post-BN) features broadcast over seq_out.
    x = dot(x, fcoe_w_ref[...]) + fcoe_b_ref[...]                            # (B*T_out, E)
    x = jnp.concatenate(
        [relu(x[b * T_out:(b + 1) * T_out] +
              x_bn[(b + 1) * T_in - 1:(b + 1) * T_in]) for b in range(B)],
        axis=0)

    # ---- fc_out + sigmoid ----
    out_ref[...] = jax.nn.sigmoid(dot(x, fco_w_ref[...]) + fco_b_ref[...])


# ----------------------------------------------------------------------------
# Wrapper: pack weights, build block-diagonal A_norm, one pallas_call.
# ----------------------------------------------------------------------------
def stgcn_forward_pallas(params, X_in, B_in, Adj_in, *, cfg):
    B = X_in.shape[0]
    T_in, T_out = cfg["seq_in"], cfg["seq_out"]
    E, H = cfg["embed_size"], cfg["hidden_dim"]
    n_sp, n_tp = cfg["n_sp_layer"], cfg["n_tp_layer"]
    # The reference reuses the same Adj for both GCN blocks, which only
    # type-checks when seq_in == seq_out (as in the demo).
    assert T_in == T_out

    f32 = jnp.float32
    x_flat = X_in.reshape(B * T_in, -1).astype(f32)
    b_flat = B_in.reshape(B * T_out, -1).astype(f32)

    # normalized adjacency, block-diagonal over the batch
    S = Adj_in.shape[0]
    A_hat = Adj_in.astype(f32) + jnp.eye(S, dtype=f32)
    d_inv_sqrt = jax.lax.rsqrt(jnp.sum(A_hat, axis=-1))
    A_norm = A_hat * d_inv_sqrt[:, None] * d_inv_sqrt[None, :]
    abd = jnp.kron(jnp.eye(B, dtype=f32), A_norm)                            # (B*S, B*S)

    def pack_gcn(ps):
        w = jnp.stack([w for w, _ in ps]).astype(f32)                        # (n_sp, E, E)
        bb = jnp.stack([b.reshape(1, -1) for _, b in ps]).astype(f32)        # (n_sp, 1, E)
        return w, bb

    def pack_gru(ps):
        wih = jnp.stack([p["wih"] for p in ps]).astype(f32)                  # (n_tp, D, 3H)
        bih = jnp.stack([p["bih"].reshape(1, -1) for p in ps]).astype(f32)   # (n_tp, 1, 3H)
        whh = jnp.stack([jnp.concatenate([p["whh"][0], p["whh"][1], p["whh"][2]], axis=1)
                         for p in ps]).astype(f32)                           # (n_tp, H, 3H)
        bhh = jnp.stack([jnp.concatenate([p["bhh"][0], p["bhh"][1], p["bhh"][2]], axis=1)
                         for p in ps]).astype(f32)                           # (n_tp, 1, 3H)
        return wih, bih, whh, bhh

    gcn1_w, gcn1_b = pack_gcn(params["gcn1"])
    gcn2_w, gcn2_b = pack_gcn(params["gcn2"])
    gru1 = pack_gru(params["gru1"])
    gru2 = pack_gru(params["gru2"])
    conv_w = params["conv_w"].astype(f32).reshape(3 * E, E)                  # [w0; w1; w2]

    kernel = functools.partial(
        _stgcn_kernel, B=B, T_in=T_in, T_out=T_out, E=E, H=H,
        n_sp=n_sp, n_tp=n_tp, bn_eps=1e-5)

    out = pl.pallas_call(
        kernel,
        out_shape=jax.ShapeDtypeStruct((B * T_out, cfg["n_out"]), f32),
    )(
        x_flat, b_flat, abd,
        params["fc_embed_w"].astype(f32), params["fc_embed_b"].reshape(1, E).astype(f32),
        conv_w, params["conv_b"].reshape(1, E).astype(f32),
        params["bn_gamma"].reshape(1, E).astype(f32),
        params["bn_beta"].reshape(1, E).astype(f32),
        params["fc_bound_w"].astype(f32),
        params["fc_bound_b"].reshape(1, -1).astype(f32),
        gcn1_w, gcn1_b, *gru1,
        params["fc_concat_w"].astype(f32), params["fc_concat_b"].reshape(1, E).astype(f32),
        gcn2_w, gcn2_b, *gru2,
        params["fc_out_embed_w"].astype(f32),
        params["fc_out_embed_b"].reshape(1, E).astype(f32),
        params["fc_out_w"].astype(f32), params["fc_out_b"].reshape(1, -1).astype(f32),
    )
    # TODO(synk): reference `out.view(B, seq_out, n_node, n_out)` only type-checks
    # when n_node == 1 (fc_out outputs n_out features per step); the demo uses 1.
    return out.reshape(B, T_out, cfg["n_node"], cfg["n_out"])


# ----------------------------------------------------------------------------
# Pure-JAX reference (HIGHEST precision) for correctness checking.
# ----------------------------------------------------------------------------
_HI = jax.lax.Precision.HIGHEST


def _apply_act(y, activation):
    if activation == "relu":
        return jnp.maximum(y, 0.0)
    if activation == "sigmoid":
        return jax.nn.sigmoid(y)
    return y


def _linear_ref(x, w, b, activation=None):
    return _apply_act(jnp.dot(x, w, precision=_HI) + b.reshape(1, -1), activation)


def _conv1d_k3_relu_ref(x_pad, w3, bias):
    T = x_pad.shape[1] - 2
    y = (jnp.einsum("btc,cd->btd", x_pad[:, 0:T], w3[0], precision=_HI)
         + jnp.einsum("btc,cd->btd", x_pad[:, 1:T + 1], w3[1], precision=_HI)
         + jnp.einsum("btc,cd->btd", x_pad[:, 2:T + 2], w3[2], precision=_HI)
         + bias.reshape(1, 1, -1))
    return jnp.maximum(y, 0.0)


def _batchnorm1d(x_btc, gamma, beta, eps=1e-5):
    mean = jnp.mean(x_btc, axis=(0, 1), keepdims=True)
    var = jnp.mean(jnp.square(x_btc - mean), axis=(0, 1), keepdims=True)
    return gamma * (x_btc - mean) * jax.lax.rsqrt(var + eps) + beta


def _gcn_relu_ref(a_norm, x, w, b):
    ax = jnp.einsum("st,bte->bse", a_norm, x, precision=_HI)
    y = jnp.einsum("bse,ef->bsf", ax, w, precision=_HI) + b.reshape(1, 1, -1)
    return jnp.maximum(y, 0.0)


def _gru_layer_ref(x_bte, p):
    B, T, _ = x_bte.shape
    H = p["whh"].shape[-1]
    gates = jnp.einsum("bte,eg->btg", x_bte, p["wih"], precision=_HI) + p["bih"]

    def step(h, g_t):
        xr, xz, xn = g_t[:, :H], g_t[:, H:2 * H], g_t[:, 2 * H:]
        hr = jnp.dot(h, p["whh"][0], precision=_HI) + p["bhh"][0]
        hz = jnp.dot(h, p["whh"][1], precision=_HI) + p["bhh"][1]
        hn = jnp.dot(h, p["whh"][2], precision=_HI) + p["bhh"][2]
        r = jax.nn.sigmoid(xr + hr)
        z = jax.nn.sigmoid(xz + hz)
        n = jnp.tanh(xn + r * hn)
        h_new = (1.0 - z) * n + z * h
        return h_new, h_new

    _, ys = jax.lax.scan(step, jnp.zeros((B, H), jnp.float32), gates.transpose(1, 0, 2))
    return ys.transpose(1, 0, 2)


def stgcn_forward_ref(params, X_in, B_in, Adj_in, *, cfg):
    B = X_in.shape[0]
    T_in, T_out = cfg["seq_in"], cfg["seq_out"]
    E, H = cfg["embed_size"], cfg["hidden_dim"]

    x = X_in.reshape(B, T_in, -1).astype(jnp.float32)
    x = _linear_ref(x.reshape(B * T_in, -1), params["fc_embed_w"],
                    params["fc_embed_b"]).reshape(B, T_in, E)

    x_pad = jnp.pad(x, ((0, 0), (1, 1), (0, 0)))
    x_conv = _conv1d_k3_relu_ref(x_pad, params["conv_w"], params["conv_b"])
    x_conv = _batchnorm1d(x_conv, params["bn_gamma"], params["bn_beta"])

    res = x_conv[:, -1:, :]
    x = jnp.maximum(x_conv, 0.0)

    bfeat = B_in.reshape(B, T_out, -1).astype(jnp.float32)
    bfeat = _linear_ref(bfeat.reshape(B * T_out, -1), params["fc_bound_w"],
                        params["fc_bound_b"]).reshape(B, T_out, E // 2)

    A_hat = Adj_in.astype(jnp.float32) + jnp.eye(Adj_in.shape[0], dtype=jnp.float32)
    d_inv_sqrt = jax.lax.rsqrt(jnp.sum(A_hat, axis=-1))
    A_norm = A_hat * d_inv_sqrt[:, None] * d_inv_sqrt[None, :]

    for w, bb in params["gcn1"]:
        x = _gcn_relu_ref(A_norm, x, w, bb)
    for p in params["gru1"]:
        x = _gru_layer_ref(x, p)

    x = x[:, -T_out:, :]
    x = jnp.concatenate([x, bfeat], axis=-1)
    x = _linear_ref(x.reshape(B * T_out, -1), params["fc_concat_w"],
                    params["fc_concat_b"], activation="relu").reshape(B, T_out, E)

    for w, bb in params["gcn2"]:
        x = _gcn_relu_ref(A_norm, x, w, bb)
    for p in params["gru2"]:
        x = _gru_layer_ref(x, p)

    x_out = _linear_ref(x.reshape(B * T_out, H), params["fc_out_embed_w"],
                        params["fc_out_embed_b"]).reshape(B, T_out, E)
    x_final = jnp.maximum(x_out + res, 0.0)
    out = _linear_ref(x_final.reshape(B * T_out, E), params["fc_out_w"],
                      params["fc_out_b"], activation="sigmoid")
    return out.reshape(B, T_out, cfg["n_node"], cfg["n_out"])


# ----------------------------------------------------------------------------
# Deterministic parameter init
# ----------------------------------------------------------------------------
class _KeyGen:
    def __init__(self, key):
        self._key = key

    def __call__(self):
        self._key, sub = jax.random.split(self._key)
        return sub


def _init_gru(kg, in_dim, hid, scale=0.2):
    return {
        "wih": scale * jax.random.normal(kg(), (in_dim, 3 * hid), jnp.float32),
        "bih": scale * jax.random.normal(kg(), (3 * hid,), jnp.float32),
        "whh": scale * jax.random.normal(kg(), (3, hid, hid), jnp.float32),
        "bhh": scale * jax.random.normal(kg(), (3, 1, hid), jnp.float32),
    }


def init_params(kg, cfg, scale=0.2):
    E, H = cfg["embed_size"], cfg["hidden_dim"]
    f_in = cfg["n_node"] * cfg["n_in"]
    f_b = cfg["n_node"] * cfg["b_in"]

    def nrm(shape):
        return scale * jax.random.normal(kg(), shape, jnp.float32)

    return {
        "fc_embed_w": nrm((f_in, E)), "fc_embed_b": nrm((E,)),
        "conv_w": nrm((3, E, E)), "conv_b": nrm((E,)),
        "bn_gamma": jnp.ones((E,), jnp.float32),
        "bn_beta": jnp.zeros((E,), jnp.float32),
        "fc_bound_w": nrm((f_b, E // 2)), "fc_bound_b": nrm((E // 2,)),
        "gcn1": [(nrm((E, E)), nrm((E,))) for _ in range(cfg["n_sp_layer"])],
        "gru1": [_init_gru(kg, E, H) for _ in range(cfg["n_tp_layer"])],
        "fc_concat_w": nrm((H + E // 2, E)), "fc_concat_b": nrm((E,)),
        "gcn2": [(nrm((E, E)), nrm((E,))) for _ in range(cfg["n_sp_layer"])],
        "gru2": [_init_gru(kg, E, H) for _ in range(cfg["n_tp_layer"])],
        "fc_out_embed_w": nrm((H, E)), "fc_out_embed_b": nrm((E,)),
        "fc_out_w": nrm((E, cfg["n_out"])), "fc_out_b": nrm((cfg["n_out"],)),
    }


if __name__ == "__main__":
    cfg = dict(n_node=1, n_in=16, b_in=1, n_out=1,
               seq_in=8, seq_out=8, embed_size=32, hidden_dim=32,
               n_sp_layer=2, n_tp_layer=1, dropout=0.0)
    batch = 2

    kg = _KeyGen(jax.random.PRNGKey(0))
    params = init_params(kg, cfg)

    X_in = jax.random.normal(kg(), (batch, cfg["seq_in"], cfg["n_node"], cfg["n_in"]),
                             jnp.float32)
    B_in = jax.random.normal(kg(), (batch, cfg["seq_out"], cfg["n_node"], cfg["b_in"]),
                             jnp.float32)
    a = jax.random.uniform(kg(), (cfg["seq_in"], cfg["seq_in"]), jnp.float32)
    Adj_in = 0.5 * (a + a.T)        # symmetric adjacency over the axis the GCN uses

    fwd = jax.jit(functools.partial(stgcn_forward_pallas, cfg=cfg))
    out = jax.block_until_ready(fwd(params, X_in, B_in, Adj_in))

    ref = stgcn_forward_ref(params, X_in, B_in, Adj_in, cfg=cfg)

    assert out.shape == (batch, cfg["seq_out"], cfg["n_node"], cfg["n_out"])
    assert bool(jnp.all(jnp.isfinite(out)))
    assert bool(jnp.all((out >= 0.0) & (out <= 1.0)))
    max_err = float(jnp.max(jnp.abs(out - ref)))
    assert jnp.allclose(out, ref, atol=1e-2, rtol=1e-2), f"max |diff| = {max_err}"

    print("KERNEL_OK")
</pallas_src>

<mosaic_0001>
module attributes {stable_mosaic.version = 11 : i64} {
  func.func @_stgcn_kernel(%arg0: memref<16x16xf32, #tpu.memory_space<vmem>>, %arg1: memref<16x1xf32, #tpu.memory_space<vmem>>, %arg2: memref<16x16xf32, #tpu.memory_space<vmem>>, %arg3: memref<16x32xf32, #tpu.memory_space<vmem>>, %arg4: memref<1x32xf32, #tpu.memory_space<vmem>>, %arg5: memref<96x32xf32, #tpu.memory_space<vmem>>, %arg6: memref<1x32xf32, #tpu.memory_space<vmem>>, %arg7: memref<1x32xf32, #tpu.memory_space<vmem>>, %arg8: memref<1x32xf32, #tpu.memory_space<vmem>>, %arg9: memref<1x16xf32, #tpu.memory_space<vmem>>, %arg10: memref<1x16xf32, #tpu.memory_space<vmem>>, %arg11: memref<2x32x32xf32, #tpu.memory_space<vmem>>, %arg12: memref<2x1x32xf32, #tpu.memory_space<vmem>>, %arg13: memref<1x32x96xf32, #tpu.memory_space<vmem>>, %arg14: memref<1x1x96xf32, #tpu.memory_space<vmem>>, %arg15: memref<1x32x96xf32, #tpu.memory_space<vmem>>, %arg16: memref<1x1x96xf32, #tpu.memory_space<vmem>>, %arg17: memref<48x32xf32, #tpu.memory_space<vmem>>, %arg18: memref<1x32xf32, #tpu.memory_space<vmem>>, %arg19: memref<2x32x32xf32, #tpu.memory_space<vmem>>, %arg20: memref<2x1x32xf32, #tpu.memory_space<vmem>>, %arg21: memref<1x32x96xf32, #tpu.memory_space<vmem>>, %arg22: memref<1x1x96xf32, #tpu.memory_space<vmem>>, %arg23: memref<1x32x96xf32, #tpu.memory_space<vmem>>, %arg24: memref<1x1x96xf32, #tpu.memory_space<vmem>>, %arg25: memref<32x32xf32, #tpu.memory_space<vmem>>, %arg26: memref<1x32xf32, #tpu.memory_space<vmem>>, %arg27: memref<32x1xf32, #tpu.memory_space<vmem>>, %arg28: memref<1x1xf32, #tpu.memory_space<vmem>>, %arg29: memref<16x1xf32, #tpu.memory_space<vmem>>) attributes {dimension_semantics = [], scalar_prefetch = 0 : i64, scratch_operands = 0 : i64, tpu.core_type = #tpu.core_type<tc>} {
    %c0 = arith.constant 0 : index
    %c0_0 = arith.constant 0 : index
    %0 = vector.load %arg0[%c0, %c0_0] : memref<16x16xf32, #tpu.memory_space<vmem>>, vector<16x16xf32>
    %c0_1 = arith.constant 0 : index
    %c0_2 = arith.constant 0 : index
    %1 = vector.load %arg3[%c0_1, %c0_2] : memref<16x32xf32, #tpu.memory_space<vmem>>, vector<16x32xf32>
    %cst = arith.constant dense<0.000000e+00> : vector<16x32xf32>
    %2 = tpu.matmul %0, %1, %cst {dimension_numbers = #tpu.dot_dimension_numbers<[1], [0], [0], [1], [0, 0, 1, 1], [], []>} : vector<16x16xf32>, vector<16x32xf32>, vector<16x32xf32> -> vector<16x32xf32>
    %c0_3 = arith.constant 0 : index
    %c0_4 = arith.constant 0 : index
    %3 = vector.load %arg4[%c0_3, %c0_4] : memref<1x32xf32, #tpu.memory_space<vmem>>, vector<1x32xf32>
    %4 = vector.broadcast %3 : vector<1x32xf32> to vector<16x32xf32>
    %5 = arith.addf %2, %4 : vector<16x32xf32>
    %cst_5 = arith.constant 0.000000e+00 : f32
    %6 = vector.broadcast %cst_5 : f32 to vector<1x32xf32>
    %7 = vector.extract_strided_slice %5 {offsets = [0, 0], sizes = [8, 32], strides = [1, 1]} : vector<16x32xf32> to vector<8x32xf32>
    %8 = vector.extract_strided_slice %7 {offsets = [0, 0], sizes = [7, 32], strides = [1, 1]} : vector<8x32xf32> to vector<7x32xf32>
    %9 = tpu.concatenate %6, %8 in 0 : vector<1x32xf32>, vector<7x32xf32> -> vector<8x32xf32>
    %10 = vector.extract_strided_slice %7 {offsets = [1, 0], sizes = [7, 32], strides = [1, 1]} : vector<8x32xf32> to vector<7x32xf32>
    %11 = tpu.concatenate %10, %6 in 0 : vector<7x32xf32>, vector<1x32xf32> -> vector<8x32xf32>
    %12 = vector.extract_strided_slice %5 {offsets = [8, 0], sizes = [8, 32], strides = [1, 1]} : vector<16x32xf32> to vector<8x32xf32>
    %13 = vector.extract_strided_slice %12 {offsets = [0, 0], sizes = [7, 32], strides = [1, 1]} : vector<8x32xf32> to vector<7x32xf32>
    %14 = tpu.concatenate %6, %13 in 0 : vector<1x32xf32>, vector<7x32xf32> -> vector<8x32xf32>
    %15 = vector.extract_strided_slice %12 {offsets = [1, 0], sizes = [7, 32], strides = [1, 1]} : vector<8x32xf32> to vector<7x32xf32>
    %16 = tpu.concatenate %15, %6 in 0 : vector<7x32xf32>, vector<1x32xf32> -> vector<8x32xf32>
    %17 = tpu.concatenate %9, %14 in 0 : vector<8x32xf32>, vector<8x32xf32> -> vector<16x32xf32>
    %18 = tpu.concatenate %11, %16 in 0 : vector<8x32xf32>, vector<8x32xf32> -> vector<16x32xf32>
    %19 = tpu.concatenate %17, %5, %18 in 1 : vector<16x32xf32>, vector<16x32xf32>, vector<16x32xf32> -> vector<16x96xf32>
    %c0_6 = arith.constant 0 : index
    %c0_7 = arith.constant 0 : index
    %20 = vector.load %arg5[%c0_6, %c0_7] : memref<96x32xf32, #tpu.memory_space<vmem>>, vector<96x32xf32>
    %cst_8 = arith.constant dense<0.000000e+00> : vector<16x32xf32>
    %21 = tpu.matmul %19, %20, %cst_8 {dimension_numbers = #tpu.dot_dimension_numbers<[1], [0], [0], [1], [0, 0, 1, 1], [], []>} : vector<16x96xf32>, vector<96x32xf32>, vector<16x32xf32> -> vector<16x32xf32>
    %c0_9 = arith.constant 0 : index
    %c0_10 = arith.constant 0 : index
    %22 = vector.load %arg6[%c0_9, %c0_10] : memref<1x32xf32, #tpu.memory_space<vmem>>, vector<1x32xf32>
    %23 = vector.broadcast %22 : vector<1x32xf32> to vector<16x32xf32>
    %24 = arith.addf %21, %23 : vector<16x32xf32>
    %cst_11 = arith.constant 0.000000e+00 : f32
    %25 = vector.broadcast %cst_11 : f32 to vector<16x32xf32>
    %26 = arith.maximumf %24, %25 : vector<16x32xf32>
    %cst_12 = arith.constant dense<0.000000e+00> : vector<32xf32>
    %27 = vector.multi_reduction <add>, %26, %cst_12 [0] : vector<16x32xf32> to vector<32xf32>
    %28 = vector.shape_cast %27 : vector<32xf32> to vector<1x32xf32>
    %cst_13 = arith.constant 1.600000e+01 : f32
    %29 = vector.broadcast %cst_13 : f32 to vector<1x32xf32>
    %30 = arith.divf %28, %29 : vector<1x32xf32>
    %31 = vector.broadcast %30 : vector<1x32xf32> to vector<16x32xf32>
    %32 = arith.subf %26, %31 : vector<16x32xf32>
    %33 = arith.mulf %32, %32 : vector<16x32xf32>
    %cst_14 = arith.constant dense<0.000000e+00> : vector<32xf32>
    %34 = vector.multi_reduction <add>, %33, %cst_14 [0] : vector<16x32xf32> to vector<32xf32>
    %35 = vector.shape_cast %34 : vector<32xf32> to vector<1x32xf32>
    %cst_15 = arith.constant 1.600000e+01 : f32
    %36 = vector.broadcast %cst_15 : f32 to vector<1x32xf32>
    %37 = arith.divf %35, %36 : vector<1x32xf32>
    %c0_16 = arith.constant 0 : index
    %c0_17 = arith.constant 0 : index
    %38 = vector.load %arg7[%c0_16, %c0_17] : memref<1x32xf32, #tpu.memory_space<vmem>>, vector<1x32xf32>
    %39 = vector.broadcast %30 : vector<1x32xf32> to vector<16x32xf32>
    %40 = arith.subf %26, %39 : vector<16x32xf32>
    %41 = vector.broadcast %38 : vector<1x32xf32> to vector<16x32xf32>
    %42 = arith.mulf %41, %40 : vector<16x32xf32>
    %cst_18 = arith.constant 9.99999974E-6 : f32
    %43 = vector.broadcast %cst_18 : f32 to vector<1x32xf32>
    %44 = arith.addf %37, %43 : vector<1x32xf32>
    %45 = math.rsqrt %44 : vector<1x32xf32>
    %46 = vector.broadcast %45 : vector<1x32xf32> to vector<16x32xf32>
    %47 = arith.mulf %42, %46 : vector<16x32xf32>
    %c0_19 = arith.constant 0 : index
    %c0_20 = arith.constant 0 : index
    %48 = vector.load %arg8[%c0_19, %c0_20] : memref<1x32xf32, #tpu.memory_space<vmem>>, vector<1x32xf32>
    %49 = vector.broadcast %48 : vector<1x32xf32> to vector<16x32xf32>
    %50 = arith.addf %47, %49 : vector<16x32xf32>
    %cst_21 = arith.constant 0.000000e+00 : f32
    %51 = vector.broadcast %cst_21 : f32 to vector<16x32xf32>
    %52 = arith.maximumf %50, %51 : vector<16x32xf32>
    %c0_22 = arith.constant 0 : index
    %c0_23 = arith.constant 0 : index
    %53 = vector.load %arg1[%c0_22, %c0_23] : memref<16x1xf32, #tpu.memory_space<vmem>>, vector<16x1xf32>
    %c0_24 = arith.constant 0 : index
    %c0_25 = arith.constant 0 : index
    %54 = vector.load %arg9[%c0_24, %c0_25] : memref<1x16xf32, #tpu.memory_space<vmem>>, vector<1x16xf32>
    %cst_26 = arith.constant dense<0.000000e+00> : vector<16x16xf32>
    %55 = tpu.matmul %53, %54, %cst_26 {dimension_numbers = #tpu.dot_dimension_numbers<[1], [0], [0], [1], [0, 0, 1, 1], [], []>} : vector<16x1xf32>, vector<1x16xf32>, vector<16x16xf32> -> vector<16x16xf32>
    %c0_27 = arith.constant 0 : index
    %c0_28 = arith.constant 0 : index
    %56 = vector.load %arg10[%c0_27, %c0_28] : memref<1x16xf32, #tpu.memory_space<vmem>>, vector<1x16xf32>
    %57 = vector.broadcast %56 : vector<1x16xf32> to vector<16x16xf32>
    %58 = arith.addf %55, %57 : vector<16x16xf32>
    %c0_29 = arith.constant 0 : index
    %c0_30 = arith.constant 0 : index
    %59 = vector.load %arg2[%c0_29, %c0_30] : memref<16x16xf32, #tpu.memory_space<vmem>>, vector<16x16xf32>
    %cst_31 = arith.constant dense<0.000000e+00> : vector<16x32xf32>
    %60 = tpu.matmul %59, %52, %cst_31 {dimension_numbers = #tpu.dot_dimension_numbers<[1], [0], [0], [1], [0, 0, 1, 1], [], []>} : vector<16x16xf32>, vector<16x32xf32>, vector<16x32xf32> -> vector<16x32xf32>
    %c0_32 = arith.constant 0 : index
    %c0_33 = arith.constant 0 : index
    %c0_34 = arith.constant 0 : index
    %61 = vector.load %arg11[%c0_32, %c0_33, %c0_34] : memref<2x32x32xf32, #tpu.memory_space<vmem>>, vector<1x32x32xf32>
    %62 = vector.shape_cast %61 : vector<1x32x32xf32> to vector<32x32xf32>
    %cst_35 = arith.constant dense<0.000000e+00> : vector<16x32xf32>
    %63 = tpu.matmul %60, %62, %cst_35 {dimension_numbers = #tpu.dot_dimension_numbers<[1], [0], [0], [1], [0, 0, 1, 1], [], []>} : vector<16x32xf32>, vector<32x32xf32>, vector<16x32xf32> -> vector<16x32xf32>
    %c0_36 = arith.constant 0 : index
    %c0_37 = arith.constant 0 : index
    %c0_38 = arith.constant 0 : index
    %64 = vector.load %arg12[%c0_36, %c0_37, %c0_38] : memref<2x1x32xf32, #tpu.memory_space<vmem>>, vector<1x1x32xf32>
    %65 = vector.shape_cast %64 : vector<1x1x32xf32> to vector<1x32xf32>
    %66 = vector.broadcast %65 : vector<1x32xf32> to vector<16x32xf32>
    %67 = arith.addf %63, %66 : vector<16x32xf32>
    %cst_39 = arith.constant 0.000000e+00 : f32
    %68 = vector.broadcast %cst_39 : f32 to vector<16x32xf32>
    %69 = arith.maximumf %67, %68 : vector<16x32xf32>
    %cst_40 = arith.constant dense<0.000000e+00> : vector<16x32xf32>
    %70 = tpu.matmul %59, %69, %cst_40 {dimension_numbers = #tpu.dot_dimension_numbers<[1], [0], [0], [1], [0, 0, 1, 1], [], []>} : vector<16x16xf32>, vector<16x32xf32>, vector<16x32xf32> -> vector<16x32xf32>
    %c1 = arith.constant 1 : index
    %c0_41 = arith.constant 0 : index
    %c0_42 = arith.constant 0 : index
    %71 = vector.load %arg11[%c1, %c0_41, %c0_42] : memref<2x32x32xf32, #tpu.memory_space<vmem>>, vector<1x32x32xf32>
    %72 = vector.shape_cast %71 : vector<1x32x32xf32> to vector<32x32xf32>
    %cst_43 = arith.constant dense<0.000000e+00> : vector<16x32xf32>
    %73 = tpu.matmul %70, %72, %cst_43 {dimension_numbers = #tpu.dot_dimension_numbers<[1], [0], [0], [1], [0, 0, 1, 1], [], []>} : vector<16x32xf32>, vector<32x32xf32>, vector<16x32xf32> -> vector<16x32xf32>
    %c1_44 = arith.constant 1 : index
    %c0_45 = arith.constant 0 : index
    %c0_46 = arith.constant 0 : index
    %74 = vector.load %arg12[%c1_44, %c0_45, %c0_46] : memref<2x1x32xf32, #tpu.memory_space<vmem>>, vector<1x1x32xf32>
    %75 = vector.shape_cast %74 : vector<1x1x32xf32> to vector<1x32xf32>
    %76 = vector.broadcast %75 : vector<1x32xf32> to vector<16x32xf32>
    %77 = arith.addf %73, %76 : vector<16x32xf32>
    %cst_47 = arith.constant 0.000000e+00 : f32
    %78 = vector.broadcast %cst_47 : f32 to vector<16x32xf32>
    %79 = arith.maximumf %77, %78 : vector<16x32xf32>
    %c0_48 = arith.constant 0 : index
    %c0_49 = arith.constant 0 : index
    %c0_50 = arith.constant 0 : index
    %80 = vector.load %arg13[%c0_48, %c0_49, %c0_50] : memref<1x32x96xf32, #tpu.memory_space<vmem>>, vector<1x32x96xf32>
    %81 = vector.shape_cast %80 : vector<1x32x96xf32> to vector<32x96xf32>
    %c0_51 = arith.constant 0 : index
    %c0_52 = arith.constant 0 : index
    %c0_53 = arith.constant 0 : index
    %82 = vector.load %arg14[%c0_51, %c0_52, %c0_53] : memref<1x1x96xf32, #tpu.memory_space<vmem>>, vector<1x1x96xf32>
    %83 = vector.shape_cast %82 : vector<1x1x96xf32> to vector<1x96xf32>
    %c0_54 = arith.constant 0 : index
    %c0_55 = arith.constant 0 : index
    %c0_56 = arith.constant 0 : index
    %84 = vector.load %arg15[%c0_54, %c0_55, %c0_56] : memref<1x32x96xf32, #tpu.memory_space<vmem>>, vector<1x32x96xf32>
    %85 = vector.shape_cast %84 : vector<1x32x96xf32> to vector<32x96xf32>
    %c0_57 = arith.constant 0 : index
    %c0_58 = arith.constant 0 : index
    %c0_59 = arith.constant 0 : index
    %86 = vector.load %arg16[%c0_57, %c0_58, %c0_59] : memref<1x1x96xf32, #tpu.memory_space<vmem>>, vector<1x1x96xf32>
    %87 = vector.shape_cast %86 : vector<1x1x96xf32> to vector<1x96xf32>
    %cst_60 = arith.constant dense<0.000000e+00> : vector<16x96xf32>
    %88 = tpu.matmul %79, %81, %cst_60 {dimension_numbers = #tpu.dot_dimension_numbers<[1], [0], [0], [1], [0, 0, 1, 1], [], []>} : vector<16x32xf32>, vector<32x96xf32>, vector<16x96xf32> -> vector<16x96xf32>
    %89 = vector.broadcast %83 : vector<1x96xf32> to vector<16x96xf32>
    %90 = arith.addf %88, %89 : vector<16x96xf32>
    %cst_61 = arith.constant 0.000000e+00 : f32
    %91 = vector.broadcast %cst_61 : f32 to vector<2x32xf32>
    %92 = vector.extract_strided_slice %90 {offsets = [0, 0], sizes = [1, 96], strides = [1, 1]} : vector<16x96xf32> to vector<1x96xf32>
    %93 = vector.extract_strided_slice %90 {offsets = [8, 0], sizes = [1, 96], strides = [1, 1]} : vector<16x96xf32> to vector<1x96xf32>
    %94 = tpu.concatenate %92, %93 in 0 : vector<1x96xf32>, vector<1x96xf32> -> vector<2x96xf32>
    %cst_62 = arith.constant dense<0.000000e+00> : vector<2x96xf32>
    %95 = tpu.matmul %91, %85, %cst_62 {dimension_numbers = #tpu.dot_dimension_numbers<[1], [0], [0], [1], [0, 0, 1, 1], [], []>} : vector<2x32xf32>, vector<32x96xf32>, vector<2x96xf32> -> vector<2x96xf32>
    %96 = vector.broadcast %87 : vector<1x96xf32> to vector<2x96xf32>
    %97 = arith.addf %95, %96 : vector<2x96xf32>
    %98 = vector.extract_strided_slice %94 {offsets = [0, 0], sizes = [2, 32], strides = [1, 1]} : vector<2x96xf32> to vector<2x32xf32>
    %99 = vector.extract_strided_slice %97 {offsets = [0, 0], sizes = [2, 32], strides = [1, 1]} : vector<2x96xf32> to vector<2x32xf32>
    %100 = arith.addf %98, %99 : vector<2x32xf32>
    %101 = arith.negf %100 : vector<2x32xf32>
    %102 = math.exp %101 : vector<2x32xf32>
    %cst_63 = arith.constant 1.000000e+00 : f32
    %103 = vector.broadcast %cst_63 : f32 to vector<2x32xf32>
    %104 = arith.addf %103, %102 : vector<2x32xf32>
    %105 = arith.divf %103, %104 : vector<2x32xf32>
    %106 = vector.extract_strided_slice %94 {offsets = [0, 32], sizes = [2, 32], strides = [1, 1]} : vector<2x96xf32> to vector<2x32xf32>
    %107 = vector.extract_strided_slice %97 {offsets = [0, 32], sizes = [2, 32], strides = [1, 1]} : vector<2x96xf32> to vector<2x32xf32>
    %108 = arith.addf %106, %107 : vector<2x32xf32>
    %109 = arith.negf %108 : vector<2x32xf32>
    %110 = math.exp %109 : vector<2x32xf32>
    %cst_64 = arith.constant 1.000000e+00 : f32
    %111 = vector.broadcast %cst_64 : f32 to vector<2x32xf32>
    %112 = arith.addf %111, %110 : vector<2x32xf32>
    %113 = arith.divf %111, %112 : vector<2x32xf32>
    %114 = vector.extract_strided_slice %94 {offsets = [0, 64], sizes = [2, 32], strides = [1, 1]} : vector<2x96xf32> to vector<2x32xf32>
    %115 = vector.extract_strided_slice %97 {offsets = [0, 64], sizes = [2, 32], strides = [1, 1]} : vector<2x96xf32> to vector<2x32xf32>
    %116 = arith.mulf %105, %115 : vector<2x32xf32>
    %117 = arith.addf %114, %116 : vector<2x32xf32>
    %118 = math.tanh %117 : vector<2x32xf32>
    %cst_65 = arith.constant 1.000000e+00 : f32
    %119 = vector.broadcast %cst_65 : f32 to vector<2x32xf32>
    %120 = arith.subf %119, %113 : vector<2x32xf32>
    %121 = arith.mulf %120, %118 : vector<2x32xf32>
    %122 = arith.mulf %113, %91 : vector<2x32xf32>
    %123 = arith.addf %121, %122 : vector<2x32xf32>
    %124 = vector.extract_strided_slice %90 {offsets = [1, 0], sizes = [1, 96], strides = [1, 1]} : vector<16x96xf32> to vector<1x96xf32>
    %125 = vector.extract_strided_slice %90 {offsets = [9, 0], sizes = [1, 96], strides = [1, 1]} : vector<16x96xf32> to vector<1x96xf32>
    %126 = tpu.concatenate %124, %125 in 0 : vector<1x96xf32>, vector<1x96xf32> -> vector<2x96xf32>
    %cst_66 = arith.constant dense<0.000000e+00> : vector<2x96xf32>
    %127 = tpu.matmul %123, %85, %cst_66 {dimension_numbers = #tpu.dot_dimension_numbers<[1], [0], [0], [1], [0, 0, 1, 1], [], []>} : vector<2x32xf32>, vector<32x96xf32>, vector<2x96xf32> -> vector<2x96xf32>
    %128 = vector.broadcast %87 : vector<1x96xf32> to vector<2x96xf32>
    %129 = arith.addf %127, %128 : vector<2x96xf32>
    %130 = vector.extract_strided_slice %126 {offsets = [0, 0], sizes = [2, 32], strides = [1, 1]} : vector<2x96xf32> to vector<2x32xf32>
    %131 = vector.extract_strided_slice %129 {offsets = [0, 0], sizes = [2, 32], strides = [1, 1]} : vector<2x96xf32> to vector<2x32xf32>
    %132 = arith.addf %130, %131 : vector<2x32xf32>
    %133 = arith.negf %132 : vector<2x32xf32>
    %134 = math.exp %133 : vector<2x32xf32>
    %cst_67 = arith.constant 1.000000e+00 : f32
    %135 = vector.broadcast %cst_67 : f32 to vector<2x32xf32>
    %136 = arith.addf %135, %134 : vector<2x32xf32>
    %137 = arith.divf %135, %136 : vector<2x32xf32>
    %138 = vector.extract_strided_slice %126 {offsets = [0, 32], sizes = [2, 32], strides = [1, 1]} : vector<2x96xf32> to vector<2x32xf32>
    %139 = vector.extract_strided_slice %129 {offsets = [0, 32], sizes = [2, 32], strides = [1, 1]} : vector<2x96xf32> to vector<2x32xf32>
    %140 = arith.addf %138, %139 : vector<2x32xf32>
    %141 = arith.negf %140 : vector<2x32xf32>
    %142 = math.exp %141 : vector<2x32xf32>
    %cst_68 = arith.constant 1.000000e+00 : f32
    %143 = vector.broadcast %cst_68 : f32 to vector<2x32xf32>
    %144 = arith.addf %143, %142 : vector<2x32xf32>
    %145 = arith.divf %143, %144 : vector<2x32xf32>
    %146 = vector.extract_strided_slice %126 {offsets = [0, 64], sizes = [2, 32], strides = [1, 1]} : vector<2x96xf32> to vector<2x32xf32>
    %147 = vector.extract_strided_slice %129 {offsets = [0, 64], sizes = [2, 32], strides = [1, 1]} : vector<2x96xf32> to vector<2x32xf32>
    %148 = arith.mulf %137, %147 : vector<2x32xf32>
    %149 = arith.addf %146, %148 : vector<2x32xf32>
    %150 = math.tanh %149 : vector<2x32xf32>
    %cst_69 = arith.constant 1.000000e+00 : f32
    %151 = vector.broadcast %cst_69 : f32 to vector<2x32xf32>
    %152 = arith.subf %151, %145 : vector<2x32xf32>
    %153 = arith.mulf %152, %150 : vector<2x32xf32>
    %154 = arith.mulf %145, %123 : vector<2x32xf32>
    %155 = arith.addf %153, %154 : vector<2x32xf32>
    %156 = vector.extract_strided_slice %90 {offsets = [2, 0], sizes = [1, 96], strides = [1, 1]} : vector<16x96xf32> to vector<1x96xf32>
    %157 = vector.extract_strided_slice %90 {offsets = [10, 0], sizes = [1, 96], strides = [1, 1]} : vector<16x96xf32> to vector<1x96xf32>
    %158 = tpu.concatenate %156, %157 in 0 : vector<1x96xf32>, vector<1x96xf32> -> vector<2x96xf32>
    %cst_70 = arith.constant dense<0.000000e+00> : vector<2x96xf32>
    %159 = tpu.matmul %155, %85, %cst_70 {dimension_numbers = #tpu.dot_dimension_numbers<[1], [0], [0], [1], [0, 0, 1, 1], [], []>} : vector<2x32xf32>, vector<32x96xf32>, vector<2x96xf32> -> vector<2x96xf32>
    %160 = vector.broadcast %87 : vector<1x96xf32> to vector<2x96xf32>
    %161 = arith.addf %159, %160 : vector<2x96xf32>
    %162 = vector.extract_strided_slice %158 {offsets = [0, 0], sizes = [2, 32], strides = [1, 1]} : vector<2x96xf32> to vector<2x32xf32>
    %163 = vector.extract_strided_slice %161 {offsets = [0, 0], sizes = [2, 32], strides = [1, 1]} : vector<2x96xf32> to vector<2x32xf32>
    %164 = arith.addf %162, %163 : vector<2x32xf32>
    %165 = arith.negf %164 : vector<2x32xf32>
    %166 = math.exp %165 : vector<2x32xf32>
    %cst_71 = arith.constant 1.000000e+00 : f32
    %167 = vector.broadcast %cst_71 : f32 to vector<2x32xf32>
    %168 = arith.addf %167, %166 : vector<2x32xf32>
    %169 = arith.divf %167, %168 : vector<2x32xf32>
    %170 = vector.extract_strided_slice %158 {offsets = [0, 32], sizes = [2, 32], strides = [1, 1]} : vector<2x96xf32> to vector<2x32xf32>
    %171 = vector.extract_strided_slice %161 {offsets = [0, 32], sizes = [2, 32], strides = [1, 1]} : vector<2x96xf32> to vector<2x32xf32>
    %172 = arith.addf %170, %171 : vector<2x32xf32>
    %173 = arith.negf %172 : vector<2x32xf32>
    %174 = math.exp %173 : vector<2x32xf32>
    %cst_72 = arith.constant 1.000000e+00 : f32
    %175 = vector.broadcast %cst_72 : f32 to vector<2x32xf32>
    %176 = arith.addf %175, %174 : vector<2x32xf32>
    %177 = arith.divf %175, %176 : vector<2x32xf32>
    %178 = vector.extract_strided_slice %158 {offsets = [0, 64], sizes = [2, 32], strides = [1, 1]} : vector<2x96xf32> to vector<2x32xf32>
    %179 = vector.extract_strided_slice %161 {offsets = [0, 64], sizes = [2, 32], strides = [1, 1]} : vector<2x96xf32> to vector<2x32xf32>
    %180 = arith.mulf %169, %179 : vector<2x32xf32>
    %181 = arith.addf %178, %180 : vector<2x32xf32>
    %182 = math.tanh %181 : vector<2x32xf32>
    %cst_73 = arith.constant 1.000000e+00 : f32
    %183 = vector.broadcast %cst_73 : f32 to vector<2x32xf32>
    %184 = arith.subf %183, %177 : vector<2x32xf32>
    %185 = arith.mulf %184, %182 : vector<2x32xf32>
    %186 = arith.mulf %177, %155 : vector<2x32xf32>
    %187 = arith.addf %185, %186 : vector<2x32xf32>
    %188 = vector.extract_strided_slice %90 {offsets = [3, 0], sizes = [1, 96], strides = [1, 1]} : vector<16x96xf32> to vector<1x96xf32>
    %189 = vector.extract_strided_slice %90 {offsets = [11, 0], sizes = [1, 96], strides = [1, 1]} : vector<16x96xf32> to vector<1x96xf32>
    %190 = tpu.concatenate %188, %189 in 0 : vector<1x96xf32>, vector<1x96xf32> -> vector<2x96xf32>
    %cst_74 = arith.constant dense<0.000000e+00> : vector<2x96xf32>
    %191 = tpu.matmul %187, %85, %cst_74 {dimension_numbers = #tpu.dot_dimension_numbers<[1], [0], [0], [1], [0, 0, 1, 1], [], []>} : vector<2x32xf32>, vector<32x96xf32>, vector<2x96xf32> -> vector<2x96xf32>
    %192 = vector.broadcast %87 : vector<1x96xf32> to vector<2x96xf32>
    %193 = arith.addf %191, %192 : vector<2x96xf32>
    %194 = vector.extract_strided_slice %190 {offsets = [0, 0], sizes = [2, 32], strides = [1, 1]} : vector<2x96xf32> to vector<2x32xf32>
    %195 = vector.extract_strided_slice %193 {offsets = [0, 0], sizes = [2, 32], strides = [1, 1]} : vector<2x96xf32> to vector<2x32xf32>
    %196 = arith.addf %194, %195 : vector<2x32xf32>
    %197 = arith.negf %196 : vector<2x32xf32>
    %198 = math.exp %197 : vector<2x32xf32>
    %cst_75 = arith.constant 1.000000e+00 : f32
    %199 = vector.broadcast %cst_75 : f32 to vector<2x32xf32>
    %200 = arith.addf %199, %198 : vector<2x32xf32>
    %201 = arith.divf %199, %200 : vector<2x32xf32>
    %202 = vector.extract_strided_slice %190 {offsets = [0, 32], sizes = [2, 32], strides = [1, 1]} : vector<2x96xf32> to vector<2x32xf32>
    %203 = vector.extract_strided_slice %193 {offsets = [0, 32], sizes = [2, 32], strides = [1, 1]} : vector<2x96xf32> to vector<2x32xf32>
    %204 = arith.addf %202, %203 : vector<2x32xf32>
    %205 = arith.negf %204 : vector<2x32xf32>
    %206 = math.exp %205 : vector<2x32xf32>
    %cst_76 = arith.constant 1.000000e+00 : f32
    %207 = vector.broadcast %cst_76 : f32 to vector<2x32xf32>
    %208 = arith.addf %207, %206 : vector<2x32xf32>
    %209 = arith.divf %207, %208 : vector<2x32xf32>
    %210 = vector.extract_strided_slice %190 {offsets = [0, 64], sizes = [2, 32], strides = [1, 1]} : vector<2x96xf32> to vector<2x32xf32>
    %211 = vector.extract_strided_slice %193 {offsets = [0, 64], sizes = [2, 32], strides = [1, 1]} : vector<2x96xf32> to vector<2x32xf32>
    %212 = arith.mulf %201, %211 : vector<2x32xf32>
    %213 = arith.addf %210, %212 : vector<2x32xf32>
    %214 = math.tanh %213 : vector<2x32xf32>
    %cst_77 = arith.constant 1.000000e+00 : f32
    %215 = vector.broadcast %cst_77 : f32 to vector<2x32xf32>
    %216 = arith.subf %215, %209 : vector<2x32xf32>
    %217 = arith.mulf %216, %214 : vector<2x32xf32>
    %218 = arith.mulf %209, %187 : vector<2x32xf32>
    %219 = arith.addf %217, %218 : vector<2x32xf32>
    %220 = vector.extract_strided_slice %90 {offsets = [4, 0], sizes = [1, 96], strides = [1, 1]} : vector<16x96xf32> to vector<1x96xf32>
    %221 = vector.extract_strided_slice %90 {offsets = [12, 0], sizes = [1, 96], strides = [1, 1]} : vector<16x96xf32> to vector<1x96xf32>
    %222 = tpu.concatenate %220, %221 in 0 : vector<1x96xf32>, vector<1x96xf32> -> vector<2x96xf32>
    %cst_78 = arith.constant dense<0.000000e+00> : vector<2x96xf32>
    %223 = tpu.matmul %219, %85, %cst_78 {dimension_numbers = #tpu.dot_dimension_numbers<[1], [0], [0], [1], [0, 0, 1, 1], [], []>} : vector<2x32xf32>, vector<32x96xf32>, vector<2x96xf32> -> vector<2x96xf32>
    %224 = vector.broadcast %87 : vector<1x96xf32> to vector<2x96xf32>
    %225 = arith.addf %223, %224 : vector<2x96xf32>
    %226 = vector.extract_strided_slice %222 {offsets = [0, 0], sizes = [2, 32], strides = [1, 1]} : vector<2x96xf32> to vector<2x32xf32>
    %227 = vector.extract_strided_slice %225 {offsets = [0, 0], sizes = [2, 32], strides = [1, 1]} : vector<2x96xf32> to vector<2x32xf32>
    %228 = arith.addf %226, %227 : vector<2x32xf32>
    %229 = arith.negf %228 : vector<2x32xf32>
    %230 = math.exp %229 : vector<2x32xf32>
    %cst_79 = arith.constant 1.000000e+00 : f32
    %231 = vector.broadcast %cst_79 : f32 to vector<2x32xf32>
    %232 = arith.addf %231, %230 : vector<2x32xf32>
    %233 = arith.divf %231, %232 : vector<2x32xf32>
    %234 = vector.extract_strided_slice %222 {offsets = [0, 32], sizes = [2, 32], strides = [1, 1]} : vector<2x96xf32> to vector<2x32xf32>
    %235 = vector.extract_strided_slice %225 {offsets = [0, 32], sizes = [2, 32], strides = [1, 1]} : vector<2x96xf32> to vector<2x32xf32>
    %236 = arith.addf %234, %235 : vector<2x32xf32>
    %237 = arith.negf %236 : vector<2x32xf32>
    %238 = math.exp %237 : vector<2x32xf32>
    %cst_80 = arith.constant 1.000000e+00 : f32
    %239 = vector.broadcast %cst_80 : f32 to vector<2x32xf32>
    %240 = arith.addf %239, %238 : vector<2x32xf32>
    %241 = arith.divf %239, %240 : vector<2x32xf32>
    %242 = vector.extract_strided_slice %222 {offsets = [0, 64], sizes = [2, 32], strides = [1, 1]} : vector<2x96xf32> to vector<2x32xf32>
    %243 = vector.extract_strided_slice %225 {offsets = [0, 64], sizes = [2, 32], strides = [1, 1]} : vector<2x96xf32> to vector<2x32xf32>
    %244 = arith.mulf %233, %243 : vector<2x32xf32>
    %245 = arith.addf %242, %244 : vector<2x32xf32>
    %246 = math.tanh %245 : vector<2x32xf32>
    %cst_81 = arith.constant 1.000000e+00 : f32
    %247 = vector.broadcast %cst_81 : f32 to vector<2x32xf32>
    %248 = arith.subf %247, %241 : vector<2x32xf32>
    %249 = arith.mulf %248, %246 : vector<2x32xf32>
    %250 = arith.mulf %241, %219 : vector<2x32xf32>
    %251 = arith.addf %249, %250 : vector<2x32xf32>
    %252 = vector.extract_strided_slice %90 {offsets = [5, 0], sizes = [1, 96], strides = [1, 1]} : vector<16x96xf32> to vector<1x96xf32>
    %253 = vector.extract_strided_slice %90 {offsets = [13, 0], sizes = [1, 96], strides = [1, 1]} : vector<16x96xf32> to vector<1x96xf32>
    %254 = tpu.concatenate %252, %253 in 0 : vector<1x96xf32>, vector<1x96xf32> -> vector<2x96xf32>
    %cst_82 = arith.constant dense<0.000000e+00> : vector<2x96xf32>
    %255 = tpu.matmul %251, %85, %cst_82 {dimension_numbers = #tpu.dot_dimension_numbers<[1], [0], [0], [1], [0, 0, 1, 1], [], []>} : vector<2x32xf32>, vector<32x96xf32>, vector<2x96xf32> -> vector<2x96xf32>
    %256 = vector.broadcast %87 : vector<1x96xf32> to vector<2x96xf32>
    %257 = arith.addf %255, %256 : vector<2x96xf32>
    %258 = vector.extract_strided_slice %254 {offsets = [0, 0], sizes = [2, 32], strides = [1, 1]} : vector<2x96xf32> to vector<2x32xf32>
    %259 = vector.extract_strided_slice %257 {offsets = [0, 0], sizes = [2, 32], strides = [1, 1]} : vector<2x96xf32> to vector<2x32xf32>
    %260 = arith.addf %258, %259 : vector<2x32xf32>
    %261 = arith.negf %260 : vector<2x32xf32>
    %262 = math.exp %261 : vector<2x32xf32>
    %cst_83 = arith.constant 1.000000e+00 : f32
    %263 = vector.broadcast %cst_83 : f32 to vector<2x32xf32>
    %264 = arith.addf %263, %262 : vector<2x32xf32>
    %265 = arith.divf %263, %264 : vector<2x32xf32>
    %266 = vector.extract_strided_slice %254 {offsets = [0, 32], sizes = [2, 32], strides = [1, 1]} : vector<2x96xf32> to vector<2x32xf32>
    %267 = vector.extract_strided_slice %257 {offsets = [0, 32], sizes = [2, 32], strides = [1, 1]} : vector<2x96xf32> to vector<2x32xf32>
    %268 = arith.addf %266, %267 : vector<2x32xf32>
    %269 = arith.negf %268 : vector<2x32xf32>
    %270 = math.exp %269 : vector<2x32xf32>
    %cst_84 = arith.constant 1.000000e+00 : f32
    %271 = vector.broadcast %cst_84 : f32 to vector<2x32xf32>
    %272 = arith.addf %271, %270 : vector<2x32xf32>
    %273 = arith.divf %271, %272 : vector<2x32xf32>
    %274 = vector.extract_strided_slice %254 {offsets = [0, 64], sizes = [2, 32], strides = [1, 1]} : vector<2x96xf32> to vector<2x32xf32>
    %275 = vector.extract_strided_slice %257 {offsets = [0, 64], sizes = [2, 32], strides = [1, 1]} : vector<2x96xf32> to vector<2x32xf32>
    %276 = arith.mulf %265, %275 : vector<2x32xf32>
    %277 = arith.addf %274, %276 : vector<2x32xf32>
    %278 = math.tanh %277 : vector<2x32xf32>
    %cst_85 = arith.constant 1.000000e+00 : f32
    %279 = vector.broadcast %cst_85 : f32 to vector<2x32xf32>
    %280 = arith.subf %279, %273 : vector<2x32xf32>
    %281 = arith.mulf %280, %278 : vector<2x32xf32>
    %282 = arith.mulf %273, %251 : vector<2x32xf32>
    %283 = arith.addf %281, %282 : vector<2x32xf32>
    %284 = vector.extract_strided_slice %90 {offsets = [6, 0], sizes = [1, 96], strides = [1, 1]} : vector<16x96xf32> to vector<1x96xf32>
    %285 = vector.extract_strided_slice %90 {offsets = [14, 0], sizes = [1, 96], strides = [1, 1]} : vector<16x96xf32> to vector<1x96xf32>
    %286 = tpu.concatenate %284, %285 in 0 : vector<1x96xf32>, vector<1x96xf32> -> vector<2x96xf32>
    %cst_86 = arith.constant dense<0.000000e+00> : vector<2x96xf32>
    %287 = tpu.matmul %283, %85, %cst_86 {dimension_numbers = #tpu.dot_dimension_numbers<[1], [0], [0], [1], [0, 0, 1, 1], [], []>} : vector<2x32xf32>, vector<32x96xf32>, vector<2x96xf32> -> vector<2x96xf32>
    %288 = vector.broadcast %87 : vector<1x96xf32> to vector<2x96xf32>
    %289 = arith.addf %287, %288 : vector<2x96xf32>
    %290 = vector.extract_strided_slice %286 {offsets = [0, 0], sizes = [2, 32], strides = [1, 1]} : vector<2x96xf32> to vector<2x32xf32>
    %291 = vector.extract_strided_slice %289 {offsets = [0, 0], sizes = [2, 32], strides = [1, 1]} : vector<2x96xf32> to vector<2x32xf32>
    %292 = arith.addf %290, %291 : vector<2x32xf32>
    %293 = arith.negf %292 : vector<2x32xf32>
    %294 = math.exp %293 : vector<2x32xf32>
    %cst_87 = arith.constant 1.000000e+00 : f32
    %295 = vector.broadcast %cst_87 : f32 to vector<2x32xf32>
    %296 = arith.addf %295, %294 : vector<2x32xf32>
    %297 = arith.divf %295, %296 : vector<2x32xf32>
    %298 = vector.extract_strided_slice %286 {offsets = [0, 32], sizes = [2, 32], strides = [1, 1]} : vector<2x96xf32> to vector<2x32xf32>
    %299 = vector.extract_strided_slice %289 {offsets = [0, 32], sizes = [2, 32], strides = [1, 1]} : vector<2x96xf32> to vector<2x32xf32>
    %300 = arith.addf %298, %299 : vector<2x32xf32>
    %301 = arith.negf %300 : vector<2x32xf32>
    %302 = math.exp %301 : vector<2x32xf32>
    %cst_88 = arith.constant 1.000000e+00 : f32
    %303 = vector.broadcast %cst_88 : f32 to vector<2x32xf32>
    %304 = arith.addf %303, %302 : vector<2x32xf32>
    %305 = arith.divf %303, %304 : vector<2x32xf32>
    %306 = vector.extract_strided_slice %286 {offsets = [0, 64], sizes = [2, 32], strides = [1, 1]} : vector<2x96xf32> to vector<2x32xf32>
    %307 = vector.extract_strided_slice %289 {offsets = [0, 64], sizes = [2, 32], strides = [1, 1]} : vector<2x96xf32> to vector<2x32xf32>
    %308 = arith.mulf %297, %307 : vector<2x32xf32>
    %309 = arith.addf %306, %308 : vector<2x32xf32>
    %310 = math.tanh %309 : vector<2x32xf32>
    %cst_89 = arith.constant 1.000000e+00 : f32
    %311 = vector.broadcast %cst_89 : f32 to vector<2x32xf32>
    %312 = arith.subf %311, %305 : vector<2x32xf32>
    %313 = arith.mulf %312, %310 : vector<2x32xf32>
    %314 = arith.mulf %305, %283 : vector<2x32xf32>
    %315 = arith.addf %313, %314 : vector<2x32xf32>
    %316 = vector.extract_strided_slice %90 {offsets = [7, 0], sizes = [1, 96], strides = [1, 1]} : vector<16x96xf32> to vector<1x96xf32>
    %317 = vector.extract_strided_slice %90 {offsets = [15, 0], sizes = [1, 96], strides = [1, 1]} : vector<16x96xf32> to vector<1x96xf32>
    %318 = tpu.concatenate %316, %317 in 0 : vector<1x96xf32>, vector<1x96xf32> -> vector<2x96xf32>
    %cst_90 = arith.constant dense<0.000000e+00> : vector<2x96xf32>
    %319 = tpu.matmul %315, %85, %cst_90 {dimension_numbers = #tpu.dot_dimension_numbers<[1], [0], [0], [1], [0, 0, 1, 1], [], []>} : vector<2x32xf32>, vector<32x96xf32>, vector<2x96xf32> -> vector<2x96xf32>
    %320 = vector.broadcast %87 : vector<1x96xf32> to vector<2x96xf32>
    %321 = arith.addf %319, %320 : vector<2x96xf32>
    %322 = vector.extract_strided_slice %318 {offsets = [0, 0], sizes = [2, 32], strides = [1, 1]} : vector<2x96xf32> to vector<2x32xf32>
    %323 = vector.extract_strided_slice %321 {offsets = [0, 0], sizes = [2, 32], strides = [1, 1]} : vector<2x96xf32> to vector<2x32xf32>
    %324 = arith.addf %322, %323 : vector<2x32xf32>
    %325 = arith.negf %324 : vector<2x32xf32>
    %326 = math.exp %325 : vector<2x32xf32>
    %cst_91 = arith.constant 1.000000e+00 : f32
    %327 = vector.broadcast %cst_91 : f32 to vector<2x32xf32>
    %328 = arith.addf %327, %326 : vector<2x32xf32>
    %329 = arith.divf %327, %328 : vector<2x32xf32>
    %330 = vector.extract_strided_slice %318 {offsets = [0, 32], sizes = [2, 32], strides = [1, 1]} : vector<2x96xf32> to vector<2x32xf32>
    %331 = vector.extract_strided_slice %321 {offsets = [0, 32], sizes = [2, 32], strides = [1, 1]} : vector<2x96xf32> to vector<2x32xf32>
    %332 = arith.addf %330, %331 : vector<2x32xf32>
    %333 = arith.negf %332 : vector<2x32xf32>
    %334 = math.exp %333 : vector<2x32xf32>
    %cst_92 = arith.constant 1.000000e+00 : f32
    %335 = vector.broadcast %cst_92 : f32 to vector<2x32xf32>
    %336 = arith.addf %335, %334 : vector<2x32xf32>
    %337 = arith.divf %335, %336 : vector<2x32xf32>
    %338 = vector.extract_strided_slice %318 {offsets = [0, 64], sizes = [2, 32], strides = [1, 1]} : vector<2x96xf32> to vector<2x32xf32>
    %339 = vector.extract_strided_slice %321 {offsets = [0, 64], sizes = [2, 32], strides = [1, 1]} : vector<2x96xf32> to vector<2x32xf32>
    %340 = arith.mulf %329, %339 : vector<2x32xf32>
    %341 = arith.addf %338, %340 : vector<2x32xf32>
    %342 = math.tanh %341 : vector<2x32xf32>
    %cst_93 = arith.constant 1.000000e+00 : f32
    %343 = vector.broadcast %cst_93 : f32 to vector<2x32xf32>
    %344 = arith.subf %343, %337 : vector<2x32xf32>
    %345 = arith.mulf %344, %342 : vector<2x32xf32>
    %346 = arith.mulf %337, %315 : vector<2x32xf32>
    %347 = arith.addf %345, %346 : vector<2x32xf32>
    %348 = vector.extract_strided_slice %123 {offsets = [0, 0], sizes = [1, 32], strides = [1, 1]} : vector<2x32xf32> to vector<1x32xf32>
    %349 = vector.extract_strided_slice %155 {offsets = [0, 0], sizes = [1, 32], strides = [1, 1]} : vector<2x32xf32> to vector<1x32xf32>
    %350 = vector.extract_strided_slice %187 {offsets = [0, 0], sizes = [1, 32], strides = [1, 1]} : vector<2x32xf32> to vector<1x32xf32>
    %351 = vector.extract_strided_slice %219 {offsets = [0, 0], sizes = [1, 32], strides = [1, 1]} : vector<2x32xf32> to vector<1x32xf32>
    %352 = vector.extract_strided_slice %251 {offsets = [0, 0], sizes = [1, 32], strides = [1, 1]} : vector<2x32xf32> to vector<1x32xf32>
    %353 = vector.extract_strided_slice %283 {offsets = [0, 0], sizes = [1, 32], strides = [1, 1]} : vector<2x32xf32> to vector<1x32xf32>
    %354 = vector.extract_strided_slice %315 {offsets = [0, 0], sizes = [1, 32], strides = [1, 1]} : vector<2x32xf32> to vector<1x32xf32>
    %355 = vector.extract_strided_slice %347 {offsets = [0, 0], sizes = [1, 32], strides = [1, 1]} : vector<2x32xf32> to vector<1x32xf32>
    %356 = tpu.concatenate %348, %349, %350, %351, %352, %353, %354, %355 in 0 : vector<1x32xf32>, vector<1x32xf32>, vector<1x32xf32>, vector<1x32xf32>, vector<1x32xf32>, vector<1x32xf32>, vector<1x32xf32>, vector<1x32xf32> -> vector<8x32xf32>
    %357 = vector.extract_strided_slice %123 {offsets = [1, 0], sizes = [1, 32], strides = [1, 1]} : vector<2x32xf32> to vector<1x32xf32>
    %358 = vector.extract_strided_slice %155 {offsets = [1, 0], sizes = [1, 32], strides = [1, 1]} : vector<2x32xf32> to vector<1x32xf32>
    %359 = vector.extract_strided_slice %187 {offsets = [1, 0], sizes = [1, 32], strides = [1, 1]} : vector<2x32xf32> to vector<1x32xf32>
    %360 = vector.extract_strided_slice %219 {offsets = [1, 0], sizes = [1, 32], strides = [1, 1]} : vector<2x32xf32> to vector<1x32xf32>
    %361 = vector.extract_strided_slice %251 {offsets = [1, 0], sizes = [1, 32], strides = [1, 1]} : vector<2x32xf32> to vector<1x32xf32>
    %362 = vector.extract_strided_slice %283 {offsets = [1, 0], sizes = [1, 32], strides = [1, 1]} : vector<2x32xf32> to vector<1x32xf32>
    %363 = vector.extract_strided_slice %315 {offsets = [1, 0], sizes = [1, 32], strides = [1, 1]} : vector<2x32xf32> to vector<1x32xf32>
    %364 = vector.extract_strided_slice %347 {offsets = [1, 0], sizes = [1, 32], strides = [1, 1]} : vector<2x32xf32> to vector<1x32xf32>
    %365 = tpu.concatenate %357, %358, %359, %360, %361, %362, %363, %364 in 0 : vector<1x32xf32>, vector<1x32xf32>, vector<1x32xf32>, vector<1x32xf32>, vector<1x32xf32>, vector<1x32xf32>, vector<1x32xf32>, vector<1x32xf32> -> vector<8x32xf32>
    %366 = tpu.concatenate %356, %365 in 0 : vector<8x32xf32>, vector<8x32xf32> -> vector<16x32xf32>
    %367 = tpu.concatenate %366, %58 in 1 : vector<16x32xf32>, vector<16x16xf32> -> vector<16x48xf32>
    %c0_94 = arith.constant 0 : index
    %c0_95 = arith.constant 0 : index
    %368 = vector.load %arg17[%c0_94, %c0_95] : memref<48x32xf32, #tpu.memory_space<vmem>>, vector<48x32xf32>
    %cst_96 = arith.constant dense<0.000000e+00> : vector<16x32xf32>
    %369 = tpu.matmul %367, %368, %cst_96 {dimension_numbers = #tpu.dot_dimension_numbers<[1], [0], [0], [1], [0, 0, 1, 1], [], []>} : vector<16x48xf32>, vector<48x32xf32>, vector<16x32xf32> -> vector<16x32xf32>
    %c0_97 = arith.constant 0 : index
    %c0_98 = arith.constant 0 : index
    %370 = vector.load %arg18[%c0_97, %c0_98] : memref<1x32xf32, #tpu.memory_space<vmem>>, vector<1x32xf32>
    %371 = vector.broadcast %370 : vector<1x32xf32> to vector<16x32xf32>
    %372 = arith.addf %369, %371 : vector<16x32xf32>
    %cst_99 = arith.constant 0.000000e+00 : f32
    %373 = vector.broadcast %cst_99 : f32 to vector<16x32xf32>
    %374 = arith.maximumf %372, %373 : vector<16x32xf32>
    %cst_100 = arith.constant dense<0.000000e+00> : vector<16x32xf32>
    %375 = tpu.matmul %59, %374, %cst_100 {dimension_numbers = #tpu.dot_dimension_numbers<[1], [0], [0], [1], [0, 0, 1, 1], [], []>} : vector<16x16xf32>, vector<16x32xf32>, vector<16x32xf32> -> vector<16x32xf32>
    %c0_101 = arith.constant 0 : index
    %c0_102 = arith.constant 0 : index
    %c0_103 = arith.constant 0 : index
    %376 = vector.load %arg19[%c0_101, %c0_102, %c0_103] : memref<2x32x32xf32, #tpu.memory_space<vmem>>, vector<1x32x32xf32>
    %377 = vector.shape_cast %376 : vector<1x32x32xf32> to vector<32x32xf32>
    %cst_104 = arith.constant dense<0.000000e+00> : vector<16x32xf32>
    %378 = tpu.matmul %375, %377, %cst_104 {dimension_numbers = #tpu.dot_dimension_numbers<[1], [0], [0], [1], [0, 0, 1, 1], [], []>} : vector<16x32xf32>, vector<32x32xf32>, vector<16x32xf32> -> vector<16x32xf32>
    %c0_105 = arith.constant 0 : index
    %c0_106 = arith.constant 0 : index
    %c0_107 = arith.constant 0 : index
    %379 = vector.load %arg20[%c0_105, %c0_106, %c0_107] : memref<2x1x32xf32, #tpu.memory_space<vmem>>, vector<1x1x32xf32>
    %380 = vector.shape_cast %379 : vector<1x1x32xf32> to vector<1x32xf32>
    %381 = vector.broadcast %380 : vector<1x32xf32> to vector<16x32xf32>
    %382 = arith.addf %378, %381 : vector<16x32xf32>
    %cst_108 = arith.constant 0.000000e+00 : f32
    %383 = vector.broadcast %cst_108 : f32 to vector<16x32xf32>
    %384 = arith.maximumf %382, %383 : vector<16x32xf32>
    %cst_109 = arith.constant dense<0.000000e+00> : vector<16x32xf32>
    %385 = tpu.matmul %59, %384, %cst_109 {dimension_numbers = #tpu.dot_dimension_numbers<[1], [0], [0], [1], [0, 0, 1, 1], [], []>} : vector<16x16xf32>, vector<16x32xf32>, vector<16x32xf32> -> vector<16x32xf32>
    %c1_110 = arith.constant 1 : index
    %c0_111 = arith.constant 0 : index
    %c0_112 = arith.constant 0 : index
    %386 = vector.load %arg19[%c1_110, %c0_111, %c0_112] : memref<2x32x32xf32, #tpu.memory_space<vmem>>, vector<1x32x32xf32>
    %387 = vector.shape_cast %386 : vector<1x32x32xf32> to vector<32x32xf32>
    %cst_113 = arith.constant dense<0.000000e+00> : vector<16x32xf32>
    %388 = tpu.matmul %385, %387, %cst_113 {dimension_numbers = #tpu.dot_dimension_numbers<[1], [0], [0], [1], [0, 0, 1, 1], [], []>} : vector<16x32xf32>, vector<32x32xf32>, vector<16x32xf32> -> vector<16x32xf32>
    %c1_114 = arith.constant 1 : index
    %c0_115 = arith.constant 0 : index
    %c0_116 = arith.constant 0 : index
    %389 = vector.load %arg20[%c1_114, %c0_115, %c0_116] : memref<2x1x32xf32, #tpu.memory_space<vmem>>, vector<1x1x32xf32>
    %390 = vector.shape_cast %389 : vector<1x1x32xf32> to vector<1x32xf32>
    %391 = vector.broadcast %390 : vector<1x32xf32> to vector<16x32xf32>
    %392 = arith.addf %388, %391 : vector<16x32xf32>
    %cst_117 = arith.constant 0.000000e+00 : f32
    %393 = vector.broadcast %cst_117 : f32 to vector<16x32xf32>
    %394 = arith.maximumf %392, %393 : vector<16x32xf32>
    %c0_118 = arith.constant 0 : index
    %c0_119 = arith.constant 0 : index
    %c0_120 = arith.constant 0 : index
    %395 = vector.load %arg21[%c0_118, %c0_119, %c0_120] : memref<1x32x96xf32, #tpu.memory_space<vmem>>, vector<1x32x96xf32>
    %396 = vector.shape_cast %395 : vector<1x32x96xf32> to vector<32x96xf32>
    %c0_121 = arith.constant 0 : index
    %c0_122 = arith.constant 0 : index
    %c0_123 = arith.constant 0 : index
    %397 = vector.load %arg22[%c0_121, %c0_122, %c0_123] : memref<1x1x96xf32, #tpu.memory_space<vmem>>, vector<1x1x96xf32>
    %398 = vector.shape_cast %397 : vector<1x1x96xf32> to vector<1x96xf32>
    %c0_124 = arith.constant 0 : index
    %c0_125 = arith.constant 0 : index
    %c0_126 = arith.constant 0 : index
    %399 = vector.load %arg23[%c0_124, %c0_125, %c0_126] : memref<1x32x96xf32, #tpu.memory_space<vmem>>, vector<1x32x96xf32>
    %400 = vector.shape_cast %399 : vector<1x32x96xf32> to vector<32x96xf32>
    %c0_127 = arith.constant 0 : index
    %c0_128 = arith.constant 0 : index
    %c0_129 = arith.constant 0 : index
    %401 = vector.load %arg24[%c0_127, %c0_128, %c0_129] : memref<1x1x96xf32, #tpu.memory_space<vmem>>, vector<1x1x96xf32>
    %402 = vector.shape_cast %401 : vector<1x1x96xf32> to vector<1x96xf32>
    %cst_130 = arith.constant dense<0.000000e+00> : vector<16x96xf32>
    %403 = tpu.matmul %394, %396, %cst_130 {dimension_numbers = #tpu.dot_dimension_numbers<[1], [0], [0], [1], [0, 0, 1, 1], [], []>} : vector<16x32xf32>, vector<32x96xf32>, vector<16x96xf32> -> vector<16x96xf32>
    %404 = vector.broadcast %398 : vector<1x96xf32> to vector<16x96xf32>
    %405 = arith.addf %403, %404 : vector<16x96xf32>
    %cst_131 = arith.constant 0.000000e+00 : f32
    %406 = vector.broadcast %cst_131 : f32 to vector<2x32xf32>
    %407 = vector.extract_strided_slice %405 {offsets = [0, 0], sizes = [1, 96], strides = [1, 1]} : vector<16x96xf32> to vector<1x96xf32>
    %408 = vector.extract_strided_slice %405 {offsets = [8, 0], sizes = [1, 96], strides = [1, 1]} : vector<16x96xf32> to vector<1x96xf32>
    %409 = tpu.concatenate %407, %408 in 0 : vector<1x96xf32>, vector<1x96xf32> -> vector<2x96xf32>
    %cst_132 = arith.constant dense<0.000000e+00> : vector<2x96xf32>
    %410 = tpu.matmul %406, %400, %cst_132 {dimension_numbers = #tpu.dot_dimension_numbers<[1], [0], [0], [1], [0, 0, 1, 1], [], []>} : vector<2x32xf32>, vector<32x96xf32>, vector<2x96xf32> -> vector<2x96xf32>
    %411 = vector.broadcast %402 : vector<1x96xf32> to vector<2x96xf32>
    %412 = arith.addf %410, %411 : vector<2x96xf32>
    %413 = vector.extract_strided_slice %409 {offsets = [0, 0], sizes = [2, 32], strides = [1, 1]} : vector<2x96xf32> to vector<2x32xf32>
    %414 = vector.extract_strided_slice %412 {offsets = [0, 0], sizes = [2, 32], strides = [1, 1]} : vector<2x96xf32> to vector<2x32xf32>
    %415 = arith.addf %413, %414 : vector<2x32xf32>
    %416 = arith.negf %415 : vector<2x32xf32>
    %417 = math.exp %416 : vector<2x32xf32>
    %cst_133 = arith.constant 1.000000e+00 : f32
    %418 = vector.broadcast %cst_133 : f32 to vector<2x32xf32>
    %419 = arith.addf %418, %417 : vector<2x32xf32>
    %420 = arith.divf %418, %419 : vector<2x32xf32>
    %421 = vector.extract_strided_slice %409 {offsets = [0, 32], sizes = [2, 32], strides = [1, 1]} : vector<2x96xf32> to vector<2x32xf32>
    %422 = vector.extract_strided_slice %412 {offsets = [0, 32], sizes = [2, 32], strides = [1, 1]} : vector<2x96xf32> to vector<2x32xf32>
    %423 = arith.addf %421, %422 : vector<2x32xf32>
    %424 = arith.negf %423 : vector<2x32xf32>
    %425 = math.exp %424 : vector<2x32xf32>
    %cst_134 = arith.constant 1.000000e+00 : f32
    %426 = vector.broadcast %cst_134 : f32 to vector<2x32xf32>
    %427 = arith.addf %426, %425 : vector<2x32xf32>
    %428 = arith.divf %426, %427 : vector<2x32xf32>
    %429 = vector.extract_strided_slice %409 {offsets = [0, 64], sizes = [2, 32], strides = [1, 1]} : vector<2x96xf32> to vector<2x32xf32>
    %430 = vector.extract_strided_slice %412 {offsets = [0, 64], sizes = [2, 32], strides = [1, 1]} : vector<2x96xf32> to vector<2x32xf32>
    %431 = arith.mulf %420, %430 : vector<2x32xf32>
    %432 = arith.addf %429, %431 : vector<2x32xf32>
    %433 = math.tanh %432 : vector<2x32xf32>
    %cst_135 = arith.constant 1.000000e+00 : f32
    %434 = vector.broadcast %cst_135 : f32 to vector<2x32xf32>
    %435 = arith.subf %434, %428 : vector<2x32xf32>
    %436 = arith.mulf %435, %433 : vector<2x32xf32>
    %437 = arith.mulf %428, %406 : vector<2x32xf32>
    %438 = arith.addf %436, %437 : vector<2x32xf32>
    %439 = vector.extract_strided_slice %405 {offsets = [1, 0], sizes = [1, 96], strides = [1, 1]} : vector<16x96xf32> to vector<1x96xf32>
    %440 = vector.extract_strided_slice %405 {offsets = [9, 0], sizes = [1, 96], strides = [1, 1]} : vector<16x96xf32> to vector<1x96xf32>
    %441 = tpu.concatenate %439, %440 in 0 : vector<1x96xf32>, vector<1x96xf32> -> vector<2x96xf32>
    %cst_136 = arith.constant dense<0.000000e+00> : vector<2x96xf32>
    %442 = tpu.matmul %438, %400, %cst_136 {dimension_numbers = #tpu.dot_dimension_numbers<[1], [0], [0], [1], [0, 0, 1, 1], [], []>} : vector<2x32xf32>, vector<32x96xf32>, vector<2x96xf32> -> vector<2x96xf32>
    %443 = vector.broadcast %402 : vector<1x96xf32> to vector<2x96xf32>
    %444 = arith.addf %442, %443 : vector<2x96xf32>
    %445 = vector.extract_strided_slice %441 {offsets = [0, 0], sizes = [2, 32], strides = [1, 1]} : vector<2x96xf32> to vector<2x32xf32>
    %446 = vector.extract_strided_slice %444 {offsets = [0, 0], sizes = [2, 32], strides = [1, 1]} : vector<2x96xf32> to vector<2x32xf32>
    %447 = arith.addf %445, %446 : vector<2x32xf32>
    %448 = arith.negf %447 : vector<2x32xf32>
    %449 = math.exp %448 : vector<2x32xf32>
    %cst_137 = arith.constant 1.000000e+00 : f32
    %450 = vector.broadcast %cst_137 : f32 to vector<2x32xf32>
    %451 = arith.addf %450, %449 : vector<2x32xf32>
    %452 = arith.divf %450, %451 : vector<2x32xf32>
    %453 = vector.extract_strided_slice %441 {offsets = [0, 32], sizes = [2, 32], strides = [1, 1]} : vector<2x96xf32> to vector<2x32xf32>
    %454 = vector.extract_strided_slice %444 {offsets = [0, 32], sizes = [2, 32], strides = [1, 1]} : vector<2x96xf32> to vector<2x32xf32>
    %455 = arith.addf %453, %454 : vector<2x32xf32>
    %456 = arith.negf %455 : vector<2x32xf32>
    %457 = math.exp %456 : vector<2x32xf32>
    %cst_138 = arith.constant 1.000000e+00 : f32
    %458 = vector.broadcast %cst_138 : f32 to vector<2x32xf32>
    %459 = arith.addf %458, %457 : vector<2x32xf32>
    %460 = arith.divf %458, %459 : vector<2x32xf32>
    %461 = vector.extract_strided_slice %441 {offsets = [0, 64], sizes = [2, 32], strides = [1, 1]} : vector<2x96xf32> to vector<2x32xf32>
    %462 = vector.extract_strided_slice %444 {offsets = [0, 64], sizes = [2, 32], strides = [1, 1]} : vector<2x96xf32> to vector<2x32xf32>
    %463 = arith.mulf %452, %462 : vector<2x32xf32>
    %464 = arith.addf %461, %463 : vector<2x32xf32>
    %465 = math.tanh %464 : vector<2x32xf32>
    %cst_139 = arith.constant 1.000000e+00 : f32
    %466 = vector.broadcast %cst_139 : f32 to vector<2x32xf32>
    %467 = arith.subf %466, %460 : vector<2x32xf32>
    %468 = arith.mulf %467, %465 : vector<2x32xf32>
    %469 = arith.mulf %460, %438 : vector<2x32xf32>
    %470 = arith.addf %468, %469 : vector<2x32xf32>
    %471 = vector.extract_strided_slice %405 {offsets = [2, 0], sizes = [1, 96], strides = [1, 1]} : vector<16x96xf32> to vector<1x96xf32>
    %472 = vector.extract_strided_slice %405 {offsets = [10, 0], sizes = [1, 96], strides = [1, 1]} : vector<16x96xf32> to vector<1x96xf32>
    %473 = tpu.concatenate %471, %472 in 0 : vector<1x96xf32>, vector<1x96xf32> -> vector<2x96xf32>
    %cst_140 = arith.constant dense<0.000000e+00> : vector<2x96xf32>
    %474 = tpu.matmul %470, %400, %cst_140 {dimension_numbers = #tpu.dot_dimension_numbers<[1], [0], [0], [1], [0, 0, 1, 1], [], []>} : vector<2x32xf32>, vector<32x96xf32>, vector<2x96xf32> -> vector<2x96xf32>
    %475 = vector.broadcast %402 : vector<1x96xf32> to vector<2x96xf32>
    %476 = arith.addf %474, %475 : vector<2x96xf32>
    %477 = vector.extract_strided_slice %473 {offsets = [0, 0], sizes = [2, 32], strides = [1, 1]} : vector<2x96xf32> to vector<2x32xf32>
    %478 = vector.extract_strided_slice %476 {offsets = [0, 0], sizes = [2, 32], strides = [1, 1]} : vector<2x96xf32> to vector<2x32xf32>
    %479 = arith.addf %477, %478 : vector<2x32xf32>
    %480 = arith.negf %479 : vector<2x32xf32>
    %481 = math.exp %480 : vector<2x32xf32>
    %cst_141 = arith.constant 1.000000e+00 : f32
    %482 = vector.broadcast %cst_141 : f32 to vector<2x32xf32>
    %483 = arith.addf %482, %481 : vector<2x32xf32>
    %484 = arith.divf %482, %483 : vector<2x32xf32>
    %485 = vector.extract_strided_slice %473 {offsets = [0, 32], sizes = [2, 32], strides = [1, 1]} : vector<2x96xf32> to vector<2x32xf32>
    %486 = vector.extract_strided_slice %476 {offsets = [0, 32], sizes = [2, 32], strides = [1, 1]} : vector<2x96xf32> to vector<2x32xf32>
    %487 = arith.addf %485, %486 : vector<2x32xf32>
    %488 = arith.negf %487 : vector<2x32xf32>
    %489 = math.exp %488 : vector<2x32xf32>
    %cst_142 = arith.constant 1.000000e+00 : f32
    %490 = vector.broadcast %cst_142 : f32 to vector<2x32xf32>
    %491 = arith.addf %490, %489 : vector<2x32xf32>
    %492 = arith.divf %490, %491 : vector<2x32xf32>
    %493 = vector.extract_strided_slice %473 {offsets = [0, 64], sizes = [2, 32], strides = [1, 1]} : vector<2x96xf32> to vector<2x32xf32>
    %494 = vector.extract_strided_slice %476 {offsets = [0, 64], sizes = [2, 32], strides = [1, 1]} : vector<2x96xf32> to vector<2x32xf32>
    %495 = arith.mulf %484, %494 : vector<2x32xf32>
    %496 = arith.addf %493, %495 : vector<2x32xf32>
    %497 = math.tanh %496 : vector<2x32xf32>
    %cst_143 = arith.constant 1.000000e+00 : f32
    %498 = vector.broadcast %cst_143 : f32 to vector<2x32xf32>
    %499 = arith.subf %498, %492 : vector<2x32xf32>
    %500 = arith.mulf %499, %497 : vector<2x32xf32>
    %501 = arith.mulf %492, %470 : vector<2x32xf32>
    %502 = arith.addf %500, %501 : vector<2x32xf32>
    %503 = vector.extract_strided_slice %405 {offsets = [3, 0], sizes = [1, 96], strides = [1, 1]} : vector<16x96xf32> to vector<1x96xf32>
    %504 = vector.extract_strided_slice %405 {offsets = [11, 0], sizes = [1, 96], strides = [1, 1]} : vector<16x96xf32> to vector<1x96xf32>
    %505 = tpu.concatenate %503, %504 in 0 : vector<1x96xf32>, vector<1x96xf32> -> vector<2x96xf32>
    %cst_144 = arith.constant dense<0.000000e+00> : vector<2x96xf32>
    %506 = tpu.matmul %502, %400, %cst_144 {dimension_numbers = #tpu.dot_dimension_numbers<[1], [0], [0], [1], [0, 0, 1, 1], [], []>} : vector<2x32xf32>, vector<32x96xf32>, vector<2x96xf32> -> vector<2x96xf32>
    %507 = vector.broadcast %402 : vector<1x96xf32> to vector<2x96xf32>
    %508 = arith.addf %506, %507 : vector<2x96xf32>
    %509 = vector.extract_strided_slice %505 {offsets = [0, 0], sizes = [2, 32], strides = [1, 1]} : vector<2x96xf32> to vector<2x32xf32>
    %510 = vector.extract_strided_slice %508 {offsets = [0, 0], sizes = [2, 32], strides = [1, 1]} : vector<2x96xf32> to vector<2x32xf32>
    %511 = arith.addf %509, %510 : vector<2x32xf32>
    %512 = arith.negf %511 : vector<2x32xf32>
    %513 = math.exp %512 : vector<2x32xf32>
    %cst_145 = arith.constant 1.000000e+00 : f32
    %514 = vector.broadcast %cst_145 : f32 to vector<2x32xf32>
    %515 = arith.addf %514, %513 : vector<2x32xf32>
    %516 = arith.divf %514, %515 : vector<2x32xf32>
    %517 = vector.extract_strided_slice %505 {offsets = [0, 32], sizes = [2, 32], strides = [1, 1]} : vector<2x96xf32> to vector<2x32xf32>
    %518 = vector.extract_strided_slice %508 {offsets = [0, 32], sizes = [2, 32], strides = [1, 1]} : vector<2x96xf32> to vector<2x32xf32>
    %519 = arith.addf %517, %518 : vector<2x32xf32>
    %520 = arith.negf %519 : vector<2x32xf32>
    %521 = math.exp %520 : vector<2x32xf32>
    %cst_146 = arith.constant 1.000000e+00 : f32
    %522 = vector.broadcast %cst_146 : f32 to vector<2x32xf32>
    %523 = arith.addf %522, %521 : vector<2x32xf32>
    %524 = arith.divf %522, %523 : vector<2x32xf32>
    %525 = vector.extract_strided_slice %505 {offsets = [0, 64], sizes = [2, 32], strides = [1, 1]} : vector<2x96xf32> to vector<2x32xf32>
    %526 = vector.extract_strided_slice %508 {offsets = [0, 64], sizes = [2, 32], strides = [1, 1]} : vector<2x96xf32> to vector<2x32xf32>
    %527 = arith.mulf %516, %526 : vector<2x32xf32>
    %528 = arith.addf %525, %527 : vector<2x32xf32>
    %529 = math.tanh %528 : vector<2x32xf32>
    %cst_147 = arith.constant 1.000000e+00 : f32
    %530 = vector.broadcast %cst_147 : f32 to vector<2x32xf32>
    %531 = arith.subf %530, %524 : vector<2x32xf32>
    %532 = arith.mulf %531, %529 : vector<2x32xf32>
    %533 = arith.mulf %524, %502 : vector<2x32xf32>
    %534 = arith.addf %532, %533 : vector<2x32xf32>
    %535 = vector.extract_strided_slice %405 {offsets = [4, 0], sizes = [1, 96], strides = [1, 1]} : vector<16x96xf32> to vector<1x96xf32>
    %536 = vector.extract_strided_slice %405 {offsets = [12, 0], sizes = [1, 96], strides = [1, 1]} : vector<16x96xf32> to vector<1x96xf32>
    %537 = tpu.concatenate %535, %536 in 0 : vector<1x96xf32>, vector<1x96xf32> -> vector<2x96xf32>
    %cst_148 = arith.constant dense<0.000000e+00> : vector<2x96xf32>
    %538 = tpu.matmul %534, %400, %cst_148 {dimension_numbers = #tpu.dot_dimension_numbers<[1], [0], [0], [1], [0, 0, 1, 1], [], []>} : vector<2x32xf32>, vector<32x96xf32>, vector<2x96xf32> -> vector<2x96xf32>
    %539 = vector.broadcast %402 : vector<1x96xf32> to vector<2x96xf32>
    %540 = arith.addf %538, %539 : vector<2x96xf32>
    %541 = vector.extract_strided_slice %537 {offsets = [0, 0], sizes = [2, 32], strides = [1, 1]} : vector<2x96xf32> to vector<2x32xf32>
    %542 = vector.extract_strided_slice %540 {offsets = [0, 0], sizes = [2, 32], strides = [1, 1]} : vector<2x96xf32> to vector<2x32xf32>
    %543 = arith.addf %541, %542 : vector<2x32xf32>
    %544 = arith.negf %543 : vector<2x32xf32>
    %545 = math.exp %544 : vector<2x32xf32>
    %cst_149 = arith.constant 1.000000e+00 : f32
    %546 = vector.broadcast %cst_149 : f32 to vector<2x32xf32>
    %547 = arith.addf %546, %545 : vector<2x32xf32>
    %548 = arith.divf %546, %547 : vector<2x32xf32>
    %549 = vector.extract_strided_slice %537 {offsets = [0, 32], sizes = [2, 32], strides = [1, 1]} : vector<2x96xf32> to vector<2x32xf32>
    %550 = vector.extract_strided_slice %540 {offsets = [0, 32], sizes = [2, 32], strides = [1, 1]} : vector<2x96xf32> to vector<2x32xf32>
    %551 = arith.addf %549, %550 : vector<2x32xf32>
    %552 = arith.negf %551 : vector<2x32xf32>
    %553 = math.exp %552 : vector<2x32xf32>
    %cst_150 = arith.constant 1.000000e+00 : f32
    %554 = vector.broadcast %cst_150 : f32 to vector<2x32xf32>
    %555 = arith.addf %554, %553 : vector<2x32xf32>
    %556 = arith.divf %554, %555 : vector<2x32xf32>
    %557 = vector.extract_strided_slice %537 {offsets = [0, 64], sizes = [2, 32], strides = [1, 1]} : vector<2x96xf32> to vector<2x32xf32>
    %558 = vector.extract_strided_slice %540 {offsets = [0, 64], sizes = [2, 32], strides = [1, 1]} : vector<2x96xf32> to vector<2x32xf32>
    %559 = arith.mulf %548, %558 : vector<2x32xf32>
    %560 = arith.addf %557, %559 : vector<2x32xf32>
    %561 = math.tanh %560 : vector<2x32xf32>
    %cst_151 = arith.constant 1.000000e+00 : f32
    %562 = vector.broadcast %cst_151 : f32 to vector<2x32xf32>
    %563 = arith.subf %562, %556 : vector<2x32xf32>
    %564 = arith.mulf %563, %561 : vector<2x32xf32>
    %565 = arith.mulf %556, %534 : vector<2x32xf32>
    %566 = arith.addf %564, %565 : vector<2x32xf32>
    %567 = vector.extract_strided_slice %405 {offsets = [5, 0], sizes = [1, 96], strides = [1, 1]} : vector<16x96xf32> to vector<1x96xf32>
    %568 = vector.extract_strided_slice %405 {offsets = [13, 0], sizes = [1, 96], strides = [1, 1]} : vector<16x96xf32> to vector<1x96xf32>
    %569 = tpu.concatenate %567, %568 in 0 : vector<1x96xf32>, vector<1x96xf32> -> vector<2x96xf32>
    %cst_152 = arith.constant dense<0.000000e+00> : vector<2x96xf32>
    %570 = tpu.matmul %566, %400, %cst_152 {dimension_numbers = #tpu.dot_dimension_numbers<[1], [0], [0], [1], [0, 0, 1, 1], [], []>} : vector<2x32xf32>, vector<32x96xf32>, vector<2x96xf32> -> vector<2x96xf32>
    %571 = vector.broadcast %402 : vector<1x96xf32> to vector<2x96xf32>
    %572 = arith.addf %570, %571 : vector<2x96xf32>
    %573 = vector.extract_strided_slice %569 {offsets = [0, 0], sizes = [2, 32], strides = [1, 1]} : vector<2x96xf32> to vector<2x32xf32>
    %574 = vector.extract_strided_slice %572 {offsets = [0, 0], sizes = [2, 32], strides = [1, 1]} : vector<2x96xf32> to vector<2x32xf32>
    %575 = arith.addf %573, %574 : vector<2x32xf32>
    %576 = arith.negf %575 : vector<2x32xf32>
    %577 = math.exp %576 : vector<2x32xf32>
    %cst_153 = arith.constant 1.000000e+00 : f32
    %578 = vector.broadcast %cst_153 : f32 to vector<2x32xf32>
    %579 = arith.addf %578, %577 : vector<2x32xf32>
    %580 = arith.divf %578, %579 : vector<2x32xf32>
    %581 = vector.extract_strided_slice %569 {offsets = [0, 32], sizes = [2, 32], strides = [1, 1]} : vector<2x96xf32> to vector<2x32xf32>
    %582 = vector.extract_strided_slice %572 {offsets = [0, 32], sizes = [2, 32], strides = [1, 1]} : vector<2x96xf32> to vector<2x32xf32>
    %583 = arith.addf %581, %582 : vector<2x32xf32>
    %584 = arith.negf %583 : vector<2x32xf32>
    %585 = math.exp %584 : vector<2x32xf32>
    %cst_154 = arith.constant 1.000000e+00 : f32
    %586 = vector.broadcast %cst_154 : f32 to vector<2x32xf32>
    %587 = arith.addf %586, %585 : vector<2x32xf32>
    %588 = arith.divf %586, %587 : vector<2x32xf32>
    %589 = vector.extract_strided_slice %569 {offsets = [0, 64], sizes = [2, 32], strides = [1, 1]} : vector<2x96xf32> to vector<2x32xf32>
    %590 = vector.extract_strided_slice %572 {offsets = [0, 64], sizes = [2, 32], strides = [1, 1]} : vector<2x96xf32> to vector<2x32xf32>
    %591 = arith.mulf %580, %590 : vector<2x32xf32>
    %592 = arith.addf %589, %591 : vector<2x32xf32>
    %593 = math.tanh %592 : vector<2x32xf32>
    %cst_155 = arith.constant 1.000000e+00 : f32
    %594 = vector.broadcast %cst_155 : f32 to vector<2x32xf32>
    %595 = arith.subf %594, %588 : vector<2x32xf32>
    %596 = arith.mulf %595, %593 : vector<2x32xf32>
    %597 = arith.mulf %588, %566 : vector<2x32xf32>
    %598 = arith.addf %596, %597 : vector<2x32xf32>
    %599 = vector.extract_strided_slice %405 {offsets = [6, 0], sizes = [1, 96], strides = [1, 1]} : vector<16x96xf32> to vector<1x96xf32>
    %600 = vector.extract_strided_slice %405 {offsets = [14, 0], sizes = [1, 96], strides = [1, 1]} : vector<16x96xf32> to vector<1x96xf32>
    %601 = tpu.concatenate %599, %600 in 0 : vector<1x96xf32>, vector<1x96xf32> -> vector<2x96xf32>
    %cst_156 = arith.constant dense<0.000000e+00> : vector<2x96xf32>
    %602 = tpu.matmul %598, %400, %cst_156 {dimension_numbers = #tpu.dot_dimension_numbers<[1], [0], [0], [1], [0, 0, 1, 1], [], []>} : vector<2x32xf32>, vector<32x96xf32>, vector<2x96xf32> -> vector<2x96xf32>
    %603 = vector.broadcast %402 : vector<1x96xf32> to vector<2x96xf32>
    %604 = arith.addf %602, %603 : vector<2x96xf32>
    %605 = vector.extract_strided_slice %601 {offsets = [0, 0], sizes = [2, 32], strides = [1, 1]} : vector<2x96xf32> to vector<2x32xf32>
    %606 = vector.extract_strided_slice %604 {offsets = [0, 0], sizes = [2, 32], strides = [1, 1]} : vector<2x96xf32> to vector<2x32xf32>
    %607 = arith.addf %605, %606 : vector<2x32xf32>
    %608 = arith.negf %607 : vector<2x32xf32>
    %609 = math.exp %608 : vector<2x32xf32>
    %cst_157 = arith.constant 1.000000e+00 : f32
    %610 = vector.broadcast %cst_157 : f32 to vector<2x32xf32>
    %611 = arith.addf %610, %609 : vector<2x32xf32>
    %612 = arith.divf %610, %611 : vector<2x32xf32>
    %613 = vector.extract_strided_slice %601 {offsets = [0, 32], sizes = [2, 32], strides = [1, 1]} : vector<2x96xf32> to vector<2x32xf32>
    %614 = vector.extract_strided_slice %604 {offsets = [0, 32], sizes = [2, 32], strides = [1, 1]} : vector<2x96xf32> to vector<2x32xf32>
    %615 = arith.addf %613, %614 : vector<2x32xf32>
    %616 = arith.negf %615 : vector<2x32xf32>
    %617 = math.exp %616 : vector<2x32xf32>
    %cst_158 = arith.constant 1.000000e+00 : f32
    %618 = vector.broadcast %cst_158 : f32 to vector<2x32xf32>
    %619 = arith.addf %618, %617 : vector<2x32xf32>
    %620 = arith.divf %618, %619 : vector<2x32xf32>
    %621 = vector.extract_strided_slice %601 {offsets = [0, 64], sizes = [2, 32], strides = [1, 1]} : vector<2x96xf32> to vector<2x32xf32>
    %622 = vector.extract_strided_slice %604 {offsets = [0, 64], sizes = [2, 32], strides = [1, 1]} : vector<2x96xf32> to vector<2x32xf32>
    %623 = arith.mulf %612, %622 : vector<2x32xf32>
    %624 = arith.addf %621, %623 : vector<2x32xf32>
    %625 = math.tanh %624 : vector<2x32xf32>
    %cst_159 = arith.constant 1.000000e+00 : f32
    %626 = vector.broadcast %cst_159 : f32 to vector<2x32xf32>
    %627 = arith.subf %626, %620 : vector<2x32xf32>
    %628 = arith.mulf %627, %625 : vector<2x32xf32>
    %629 = arith.mulf %620, %598 : vector<2x32xf32>
    %630 = arith.addf %628, %629 : vector<2x32xf32>
    %631 = vector.extract_strided_slice %405 {offsets = [7, 0], sizes = [1, 96], strides = [1, 1]} : vector<16x96xf32> to vector<1x96xf32>
    %632 = vector.extract_strided_slice %405 {offsets = [15, 0], sizes = [1, 96], strides = [1, 1]} : vector<16x96xf32> to vector<1x96xf32>
    %633 = tpu.concatenate %631, %632 in 0 : vector<1x96xf32>, vector<1x96xf32> -> vector<2x96xf32>
    %cst_160 = arith.constant dense<0.000000e+00> : vector<2x96xf32>
    %634 = tpu.matmul %630, %400, %cst_160 {dimension_numbers = #tpu.dot_dimension_numbers<[1], [0], [0], [1], [0, 0, 1, 1], [], []>} : vector<2x32xf32>, vector<32x96xf32>, vector<2x96xf32> -> vector<2x96xf32>
    %635 = vector.broadcast %402 : vector<1x96xf32> to vector<2x96xf32>
    %636 = arith.addf %634, %635 : vector<2x96xf32>
    %637 = vector.extract_strided_slice %633 {offsets = [0, 0], sizes = [2, 32], strides = [1, 1]} : vector<2x96xf32> to vector<2x32xf32>
    %638 = vector.extract_strided_slice %636 {offsets = [0, 0], sizes = [2, 32], strides = [1, 1]} : vector<2x96xf32> to vector<2x32xf32>
    %639 = arith.addf %637, %638 : vector<2x32xf32>
    %640 = arith.negf %639 : vector<2x32xf32>
    %641 = math.exp %640 : vector<2x32xf32>
    %cst_161 = arith.constant 1.000000e+00 : f32
    %642 = vector.broadcast %cst_161 : f32 to vector<2x32xf32>
    %643 = arith.addf %642, %641 : vector<2x32xf32>
    %644 = arith.divf %642, %643 : vector<2x32xf32>
    %645 = vector.extract_strided_slice %633 {offsets = [0, 32], sizes = [2, 32], strides = [1, 1]} : vector<2x96xf32> to vector<2x32xf32>
    %646 = vector.extract_strided_slice %636 {offsets = [0, 32], sizes = [2, 32], strides = [1, 1]} : vector<2x96xf32> to vector<2x32xf32>
    %647 = arith.addf %645, %646 : vector<2x32xf32>
    %648 = arith.negf %647 : vector<2x32xf32>
    %649 = math.exp %648 : vector<2x32xf32>
    %cst_162 = arith.constant 1.000000e+00 : f32
    %650 = vector.broadcast %cst_162 : f32 to vector<2x32xf32>
    %651 = arith.addf %650, %649 : vector<2x32xf32>
    %652 = arith.divf %650, %651 : vector<2x32xf32>
    %653 = vector.extract_strided_slice %633 {offsets = [0, 64], sizes = [2, 32], strides = [1, 1]} : vector<2x96xf32> to vector<2x32xf32>
    %654 = vector.extract_strided_slice %636 {offsets = [0, 64], sizes = [2, 32], strides = [1, 1]} : vector<2x96xf32> to vector<2x32xf32>
    %655 = arith.mulf %644, %654 : vector<2x32xf32>
    %656 = arith.addf %653, %655 : vector<2x32xf32>
    %657 = math.tanh %656 : vector<2x32xf32>
    %cst_163 = arith.constant 1.000000e+00 : f32
    %658 = vector.broadcast %cst_163 : f32 to vector<2x32xf32>
    %659 = arith.subf %658, %652 : vector<2x32xf32>
    %660 = arith.mulf %659, %657 : vector<2x32xf32>
    %661 = arith.mulf %652, %630 : vector<2x32xf32>
    %662 = arith.addf %660, %661 : vector<2x32xf32>
    %663 = vector.extract_strided_slice %438 {offsets = [0, 0], sizes = [1, 32], strides = [1, 1]} : vector<2x32xf32> to vector<1x32xf32>
    %664 = vector.extract_strided_slice %470 {offsets = [0, 0], sizes = [1, 32], strides = [1, 1]} : vector<2x32xf32> to vector<1x32xf32>
    %665 = vector.extract_strided_slice %502 {offsets = [0, 0], sizes = [1, 32], strides = [1, 1]} : vector<2x32xf32> to vector<1x32xf32>
    %666 = vector.extract_strided_slice %534 {offsets = [0, 0], sizes = [1, 32], strides = [1, 1]} : vector<2x32xf32> to vector<1x32xf32>
    %667 = vector.extract_strided_slice %566 {offsets = [0, 0], sizes = [1, 32], strides = [1, 1]} : vector<2x32xf32> to vector<1x32xf32>
    %668 = vector.extract_strided_slice %598 {offsets = [0, 0], sizes = [1, 32], strides = [1, 1]} : vector<2x32xf32> to vector<1x32xf32>
    %669 = vector.extract_strided_slice %630 {offsets = [0, 0], sizes = [1, 32], strides = [1, 1]} : vector<2x32xf32> to vector<1x32xf32>
    %670 = vector.extract_strided_slice %662 {offsets = [0, 0], sizes = [1, 32], strides = [1, 1]} : vector<2x32xf32> to vector<1x32xf32>
    %671 = tpu.concatenate %663, %664, %665, %666, %667, %668, %669, %670 in 0 : vector<1x32xf32>, vector<1x32xf32>, vector<1x32xf32>, vector<1x32xf32>, vector<1x32xf32>, vector<1x32xf32>, vector<1x32xf32>, vector<1x32xf32> -> vector<8x32xf32>
    %672 = vector.extract_strided_slice %438 {offsets = [1, 0], sizes = [1, 32], strides = [1, 1]} : vector<2x32xf32> to vector<1x32xf32>
    %673 = vector.extract_strided_slice %470 {offsets = [1, 0], sizes = [1, 32], strides = [1, 1]} : vector<2x32xf32> to vector<1x32xf32>
    %674 = vector.extract_strided_slice %502 {offsets = [1, 0], sizes = [1, 32], strides = [1, 1]} : vector<2x32xf32> to vector<1x32xf32>
    %675 = vector.extract_strided_slice %534 {offsets = [1, 0], sizes = [1, 32], strides = [1, 1]} : vector<2x32xf32> to vector<1x32xf32>
    %676 = vector.extract_strided_slice %566 {offsets = [1, 0], sizes = [1, 32], strides = [1, 1]} : vector<2x32xf32> to vector<1x32xf32>
    %677 = vector.extract_strided_slice %598 {offsets = [1, 0], sizes = [1, 32], strides = [1, 1]} : vector<2x32xf32> to vector<1x32xf32>
    %678 = vector.extract_strided_slice %630 {offsets = [1, 0], sizes = [1, 32], strides = [1, 1]} : vector<2x32xf32> to vector<1x32xf32>
    %679 = vector.extract_strided_slice %662 {offsets = [1, 0], sizes = [1, 32], strides = [1, 1]} : vector<2x32xf32> to vector<1x32xf32>
    %680 = tpu.concatenate %672, %673, %674, %675, %676, %677, %678, %679 in 0 : vector<1x32xf32>, vector<1x32xf32>, vector<1x32xf32>, vector<1x32xf32>, vector<1x32xf32>, vector<1x32xf32>, vector<1x32xf32>, vector<1x32xf32> -> vector<8x32xf32>
    %681 = tpu.concatenate %671, %680 in 0 : vector<8x32xf32>, vector<8x32xf32> -> vector<16x32xf32>
    %c0_164 = arith.constant 0 : index
    %c0_165 = arith.constant 0 : index
    %682 = vector.load %arg25[%c0_164, %c0_165] : memref<32x32xf32, #tpu.memory_space<vmem>>, vector<32x32xf32>
    %cst_166 = arith.constant dense<0.000000e+00> : vector<16x32xf32>
    %683 = tpu.matmul %681, %682, %cst_166 {dimension_numbers = #tpu.dot_dimension_numbers<[1], [0], [0], [1], [0, 0, 1, 1], [], []>} : vector<16x32xf32>, vector<32x32xf32>, vector<16x32xf32> -> vector<16x32xf32>
    %c0_167 = arith.constant 0 : index
    %c0_168 = arith.constant 0 : index
    %684 = vector.load %arg26[%c0_167, %c0_168] : memref<1x32xf32, #tpu.memory_space<vmem>>, vector<1x32xf32>
    %685 = vector.broadcast %684 : vector<1x32xf32> to vector<16x32xf32>
    %686 = arith.addf %683, %685 : vector<16x32xf32>
    %687 = vector.extract_strided_slice %686 {offsets = [0, 0], sizes = [8, 32], strides = [1, 1]} : vector<16x32xf32> to vector<8x32xf32>
    %688 = vector.extract_strided_slice %50 {offsets = [7, 0], sizes = [1, 32], strides = [1, 1]} : vector<16x32xf32> to vector<1x32xf32>
    %689 = vector.broadcast %688 : vector<1x32xf32> to vector<8x32xf32>
    %690 = arith.addf %687, %689 : vector<8x32xf32>
    %cst_169 = arith.constant 0.000000e+00 : f32
    %691 = vector.broadcast %cst_169 : f32 to vector<8x32xf32>
    %692 = arith.maximumf %690, %691 : vector<8x32xf32>
    %693 = vector.extract_strided_slice %686 {offsets = [8, 0], sizes = [8, 32], strides = [1, 1]} : vector<16x32xf32> to vector<8x32xf32>
    %694 = vector.extract_strided_slice %50 {offsets = [15, 0], sizes = [1, 32], strides = [1, 1]} : vector<16x32xf32> to vector<1x32xf32>
    %695 = vector.broadcast %694 : vector<1x32xf32> to vector<8x32xf32>
    %696 = arith.addf %693, %695 : vector<8x32xf32>
    %cst_170 = arith.constant 0.000000e+00 : f32
    %697 = vector.broadcast %cst_170 : f32 to vector<8x32xf32>
    %698 = arith.maximumf %696, %697 : vector<8x32xf32>
    %699 = tpu.concatenate %692, %698 in 0 : vector<8x32xf32>, vector<8x32xf32> -> vector<16x32xf32>
    %c0_171 = arith.constant 0 : index
    %c0_172 = arith.constant 0 : index
    %700 = vector.load %arg27[%c0_171, %c0_172] : memref<32x1xf32, #tpu.memory_space<vmem>>, vector<32x1xf32>
    %cst_173 = arith.constant dense<0.000000e+00> : vector<16x1xf32>
    %701 = tpu.matmul %699, %700, %cst_173 {dimension_numbers = #tpu.dot_dimension_numbers<[1], [0], [0], [1], [0, 0, 1, 1], [], []>} : vector<16x32xf32>, vector<32x1xf32>, vector<16x1xf32> -> vector<16x1xf32>
    %c0_174 = arith.constant 0 : index
    %c0_175 = arith.constant 0 : index
    %702 = vector.load %arg28[%c0_174, %c0_175] : memref<1x1xf32, #tpu.memory_space<vmem>>, vector<1x1xf32>
    %703 = vector.broadcast %702 : vector<1x1xf32> to vector<16x1xf32>
    %704 = arith.addf %701, %703 : vector<16x1xf32>
    %705 = arith.negf %704 : vector<16x1xf32>
    %706 = math.exp %705 : vector<16x1xf32>
    %cst_176 = arith.constant 1.000000e+00 : f32
    %707 = vector.broadcast %cst_176 : f32 to vector<16x1xf32>
    %708 = arith.addf %707, %706 : vector<16x1xf32>
    %709 = arith.divf %707, %708 : vector<16x1xf32>
    %c0_177 = arith.constant 0 : index
    %c0_178 = arith.constant 0 : index
    %710 = vector.load %arg29[%c0_177, %c0_178] : memref<16x1xf32, #tpu.memory_space<vmem>>, vector<16x1xf32>
    tpu.vector_store %arg29[%c0_177, %c0_178], %709 {strides = array<i32>} : memref<16x1xf32, #tpu.memory_space<vmem>>, vector<16x1xf32>,
    return
  }
}

</mosaic_0001>

<llo_original>
// kernel: stgcn_forward_pallas.1
$region0: #{stgcn_forward_pallas.1}
  #allocation0 [shape = 'u32[]', space=smem, size = 0x4, offset = 0x4, fixed_abs, tag = 'smem constant byte address 0x4 - core index']
  #allocation1 [shape = 'u32[144,128]{1,0:T(1,128)}', space=vmem, size = 0x12000, scoped, tag = 'internal scratch']
  #allocation2 [shape = 'f32[1,1]{1,0:T(1,128)S(1)}', space=vmem, size = 0x200, scoped, tag = 'scoped memory for stgcn_forward_pallas.1']
  %s0 = inlined_call_operand.smem [shape: u32[30], index: -1, kind: input, shape index: {}]
  %s1 = sld [smem:[%s0]]
  %s2 = scalar_lea.smem %s0, 1
  %s3 = sld [smem:[%s2]]
  %s4 = scalar_lea.smem %s0, 2
  %s5 = sld [smem:[%s4]]
  %s6 = scalar_lea.smem %s0, 3
  %s7 = sld [smem:[%s6]]
  %s8 = scalar_lea.smem %s0, 4
  %s9 = sld [smem:[%s8]]
  %s10 = scalar_lea.smem %s0, 5
  %s11 = sld [smem:[%s10]]
  %s12 = scalar_lea.smem %s0, 6
  %s13 = sld [smem:[%s12]]
  %s14 = scalar_lea.smem %s0, 7
  %s15 = sld [smem:[%s14]]
  %s16 = scalar_lea.smem %s0, 8
  %s17 = sld [smem:[%s16]]
  %s18 = scalar_lea.smem %s0, 9
  %s19 = sld [smem:[%s18]]
  %s20 = scalar_lea.smem %s0, 10
  %s21 = sld [smem:[%s20]]
  %s22 = scalar_lea.smem %s0, 11
  %s23 = sld [smem:[%s22]]
  %s24 = scalar_lea.smem %s0, 12
  %s25 = sld [smem:[%s24]]
  %s26 = scalar_lea.smem %s0, 13
  %s27 = sld [smem:[%s26]]
  %s28 = scalar_lea.smem %s0, 14
  %s29 = sld [smem:[%s28]]
  %s30 = scalar_lea.smem %s0, 15
  %s31 = sld [smem:[%s30]]
  %s32 = scalar_lea.smem %s0, 16
  %s33 = sld [smem:[%s32]]
  %s34 = scalar_lea.smem %s0, 17
  %s35 = sld [smem:[%s34]]
  %s36 = scalar_lea.smem %s0, 18
  %s37 = sld [smem:[%s36]]
  %s38 = scalar_lea.smem %s0, 19
  %s39 = sld [smem:[%s38]]
  %s40 = scalar_lea.smem %s0, 20
  %s41 = sld [smem:[%s40]]
  %s42 = scalar_lea.smem %s0, 21
  %s43 = sld [smem:[%s42]]
  %s44 = scalar_lea.smem %s0, 22
  %s45 = sld [smem:[%s44]]
  %s46 = scalar_lea.smem %s0, 23
  %s47 = sld [smem:[%s46]]
  %s48 = scalar_lea.smem %s0, 24
  %s49 = sld [smem:[%s48]]
  %s50 = scalar_lea.smem %s0, 25
  %s51 = sld [smem:[%s50]]
  %s52 = scalar_lea.smem %s0, 26
  %s53 = sld [smem:[%s52]]
  %s54 = scalar_lea.smem %s0, 27
  %s55 = sld [smem:[%s54]]
  %s56 = scalar_lea.smem %s0, 28
  %s57 = sld [smem:[%s56]]
  %s58 = scalar_lea.smem %s0, 29
  %s59 = sld [smem:[%s58]]
  %s60 = sld [smem:[#allocation0]]
  $region126: #{stgcn_forward_pallas.1} parent=0
    _
  %s62 = ssub.s32 1, %s60
  %s63 = scalar_select 0, %s62, %s60
  %v64 = vstv %s57
  %65 = vst [vmem:[#allocation2] sm:$0x1] %v64
  // Predicated region
  $region2: #{stgcn_forward_pallas.1} parent=0 // pred_check
    _
  $region3: #{stgcn_forward_pallas.1} parent=0 // pred_check_branch
    %67 = sbr.rel (0) target = $region5
  $region4: #{stgcn_forward_pallas.1} parent=0 // pred_region
    _
  $region5: #{stgcn_forward_pallas.1} parent=0 // pred_fallthru
    _
  // Predicated region
  $region6: #{stgcn_forward_pallas.1} parent=0 // pred_check
    _
  $region7: #{stgcn_forward_pallas.1} parent=0 // pred_check_branch
    %69 = sbr.rel (0) target = $region9
  $region8: #{stgcn_forward_pallas.1} parent=0 // pred_region
    _
  $region9: #{stgcn_forward_pallas.1} parent=0 // pred_fallthru
    _
  // Predicated region
  $region10: #{stgcn_forward_pallas.1} parent=0 // pred_check
    _
  $region11: #{stgcn_forward_pallas.1} parent=0 // pred_check_branch
    %71 = sbr.rel (0) target = $region13
  $region12: #{stgcn_forward_pallas.1} parent=0 // pred_region
    _
  $region13: #{stgcn_forward_pallas.1} parent=0 // pred_fallthru
    _
  // Predicated region
  $region14: #{stgcn_forward_pallas.1} parent=0 // pred_check
    _
  $region15: #{stgcn_forward_pallas.1} parent=0 // pred_check_branch
    %73 = sbr.rel (0) target = $region17
  $region16: #{stgcn_forward_pallas.1} parent=0 // pred_region
    _
  $region17: #{stgcn_forward_pallas.1} parent=0 // pred_fallthru
    _
  // Predicated region
  $region18: #{stgcn_forward_pallas.1} parent=0 // pred_check
    _
  $region19: #{stgcn_forward_pallas.1} parent=0 // pred_check_branch
    %75 = sbr.rel (0) target = $region21
  $region20: #{stgcn_forward_pallas.1} parent=0 // pred_region
    _
  $region21: #{stgcn_forward_pallas.1} parent=0 // pred_fallthru
    _
  // Predicated region
  $region22: #{stgcn_forward_pallas.1} parent=0 // pred_check
    _
  $region23: #{stgcn_forward_pallas.1} parent=0 // pred_check_branch
    %77 = sbr.rel (0) target = $region25
  $region24: #{stgcn_forward_pallas.1} parent=0 // pred_region
    _
  $region25: #{stgcn_forward_pallas.1} parent=0 // pred_fallthru
    _
  // Predicated region
  $region26: #{stgcn_forward_pallas.1} parent=0 // pred_check
    _
  $region27: #{stgcn_forward_pallas.1} parent=0 // pred_check_branch
    %79 = sbr.rel (0) target = $region29
  $region28: #{stgcn_forward_pallas.1} parent=0 // pred_region
    _
  $region29: #{stgcn_forward_pallas.1} parent=0 // pred_fallthru
    _
  // Predicated region
  $region30: #{stgcn_forward_pallas.1} parent=0 // pred_check
    _
  $region31: #{stgcn_forward_pallas.1} parent=0 // pred_check_branch
    %81 = sbr.rel (0) target = $region33
  $region32: #{stgcn_forward_pallas.1} parent=0 // pred_region
    _
  $region33: #{stgcn_forward_pallas.1} parent=0 // pred_fallthru
    _
  // Predicated region
  $region34: #{stgcn_forward_pallas.1} parent=0 // pred_check
    _
  $region35: #{stgcn_forward_pallas.1} parent=0 // pred_check_branch
    %83 = sbr.rel (0) target = $region37
  $region36: #{stgcn_forward_pallas.1} parent=0 // pred_region
    _
  $region37: #{stgcn_forward_pallas.1} parent=0 // pred_fallthru
    _
  // Predicated region
  $region38: #{stgcn_forward_pallas.1} parent=0 // pred_check
    _
  $region39: #{stgcn_forward_pallas.1} parent=0 // pred_check_branch
    %85 = sbr.rel (0) target = $region41
  $region40: #{stgcn_forward_pallas.1} parent=0 // pred_region
    _
  $region41: #{stgcn_forward_pallas.1} parent=0 // pred_fallthru
    _
  // Predicated region
  $region42: #{stgcn_forward_pallas.1} parent=0 // pred_check
    _
  $region43: #{stgcn_forward_pallas.1} parent=0 // pred_check_branch
    %87 = sbr.rel (0) target = $region45
  $region44: #{stgcn_forward_pallas.1} parent=0 // pred_region
    _
  $region45: #{stgcn_forward_pallas.1} parent=0 // pred_fallthru
    _
  // Predicated region
  $region46: #{stgcn_forward_pallas.1} parent=0 // pred_check
    _
  $region47: #{stgcn_forward_pallas.1} parent=0 // pred_check_branch
    %89 = sbr.rel (0) target = $region49
  $region48: #{stgcn_forward_pallas.1} parent=0 // pred_region
    _
  $region49: #{stgcn_forward_pallas.1} parent=0 // pred_fallthru
    _
  // Predicated region
  $region50: #{stgcn_forward_pallas.1} parent=0 // pred_check
    _
  $region51: #{stgcn_forward_pallas.1} parent=0 // pred_check_branch
    %91 = sbr.rel (0) target = $region53
  $region52: #{stgcn_forward_pallas.1} parent=0 // pred_region
    _
  $region53: #{stgcn_forward_pallas.1} parent=0 // pred_fallthru
    _
  // Predicated region
  $region54: #{stgcn_forward_pallas.1} parent=0 // pred_check
    _
  $region55: #{stgcn_forward_pallas.1} parent=0 // pred_check_branch
    %93 = sbr.rel (0) target = $region57
  $region56: #{stgcn_forward_pallas.1} parent=0 // pred_region
    _
  $region57: #{stgcn_forward_pallas.1} parent=0 // pred_fallthru
    _
  // Predicated region
  $region58: #{stgcn_forward_pallas.1} parent=0 // pred_check
    _
  $region59: #{stgcn_forward_pallas.1} parent=0 // pred_check_branch
    %95 = sbr.rel (0) target = $region61
  $region60: #{stgcn_forward_pallas.1} parent=0 // pred_region
    _
  $region61: #{stgcn_forward_pallas.1} parent=0 // pred_fallthru
    _
  // Predicated region
  $region62: #{stgcn_forward_pallas.1} parent=0 // pred_check
    _
  $region63: #{stgcn_forward_pallas.1} parent=0 // pred_check_branch
    %97 = sbr.rel (0) target = $region65
  $region64: #{stgcn_forward_pallas.1} parent=0 // pred_region
    _
  $region65: #{stgcn_forward_pallas.1} parent=0 // pred_fallthru
    _
  // Predicated region
  $region66: #{stgcn_forward_pallas.1} parent=0 // pred_check
    _
  $region67: #{stgcn_forward_pallas.1} parent=0 // pred_check_branch
    %99 = sbr.rel (0) target = $region69
  $region68: #{stgcn_forward_pallas.1} parent=0 // pred_region
    _
  $region69: #{stgcn_forward_pallas.1} parent=0 // pred_fallthru
    _
  // Predicated region
  $region70: #{stgcn_forward_pallas.1} parent=0 // pred_check
    _
  $region71: #{stgcn_forward_pallas.1} parent=0 // pred_check_branch
    %101 = sbr.rel (0) target = $region73
  $region72: #{stgcn_forward_pallas.1} parent=0 // pred_region
    _
  $region73: #{stgcn_forward_pallas.1} parent=0 // pred_fallthru
    _
  // Predicated region
  $region74: #{stgcn_forward_pallas.1} parent=0 // pred_check
    _
  $region75: #{stgcn_forward_pallas.1} parent=0 // pred_check_branch
    %103 = sbr.rel (0) target = $region77
  $region76: #{stgcn_forward_pallas.1} parent=0 // pred_region
    _
  $region77: #{stgcn_forward_pallas.1} parent=0 // pred_fallthru
    _
  // Predicated region
  $region78: #{stgcn_forward_pallas.1} parent=0 // pred_check
    _
  $region79: #{stgcn_forward_pallas.1} parent=0 // pred_check_branch
    %105 = sbr.rel (0) target = $region81
  $region80: #{stgcn_forward_pallas.1} parent=0 // pred_region
    _
  $region81: #{stgcn_forward_pallas.1} parent=0 // pred_fallthru
    _
  // Predicated region
  $region82: #{stgcn_forward_pallas.1} parent=0 // pred_check
    _
  $region83: #{stgcn_forward_pallas.1} parent=0 // pred_check_branch
    %107 = sbr.rel (0) target = $region85
  $region84: #{stgcn_forward_pallas.1} parent=0 // pred_region
    _
  $region85: #{stgcn_forward_pallas.1} parent=0 // pred_fallthru
    _
  // Predicated region
  $region86: #{stgcn_forward_pallas.1} parent=0 // pred_check
    _
  $region87: #{stgcn_forward_pallas.1} parent=0 // pred_check_branch
    %109 = sbr.rel (0) target = $region89
  $region88: #{stgcn_forward_pallas.1} parent=0 // pred_region
    _
  $region89: #{stgcn_forward_pallas.1} parent=0 // pred_fallthru
    _
  // Predicated region
  $region90: #{stgcn_forward_pallas.1} parent=0 // pred_check
    _
  $region91: #{stgcn_forward_pallas.1} parent=0 // pred_check_branch
    %111 = sbr.rel (0) target = $region93
  $region92: #{stgcn_forward_pallas.1} parent=0 // pred_region
    _
  $region93: #{stgcn_forward_pallas.1} parent=0 // pred_fallthru
    _
  // Predicated region
  $region94: #{stgcn_forward_pallas.1} parent=0 // pred_check
    _
  $region95: #{stgcn_forward_pallas.1} parent=0 // pred_check_branch
    %113 = sbr.rel (0) target = $region97
  $region96: #{stgcn_forward_pallas.1} parent=0 // pred_region
    _
  $region97: #{stgcn_forward_pallas.1} parent=0 // pred_fallthru
    _
  // Predicated region
  $region98: #{stgcn_forward_pallas.1} parent=0 // pred_check
    _
  $region99: #{stgcn_forward_pallas.1} parent=0 // pred_check_branch
    %115 = sbr.rel (0) target = $region101
  $region100: #{stgcn_forward_pallas.1} parent=0 // pred_region
    _
  $region101: #{stgcn_forward_pallas.1} parent=0 // pred_fallthru
    _
  // Predicated region
  $region102: #{stgcn_forward_pallas.1} parent=0 // pred_check
    _
  $region103: #{stgcn_forward_pallas.1} parent=0 // pred_check_branch
    %117 = sbr.rel (0) target = $region105
  $region104: #{stgcn_forward_pallas.1} parent=0 // pred_region
    _
  $region105: #{stgcn_forward_pallas.1} parent=0 // pred_fallthru
    _
  // Predicated region
  $region106: #{stgcn_forward_pallas.1} parent=0 // pred_check
    _
  $region107: #{stgcn_forward_pallas.1} parent=0 // pred_check_branch
    %119 = sbr.rel (0) target = $region109
  $region108: #{stgcn_forward_pallas.1} parent=0 // pred_region
    _
  $region109: #{stgcn_forward_pallas.1} parent=0 // pred_fallthru
    _
  // Predicated region
  $region110: #{stgcn_forward_pallas.1} parent=0 // pred_check
    _
  $region111: #{stgcn_forward_pallas.1} parent=0 // pred_check_branch
    %121 = sbr.rel (0) target = $region113
  $region112: #{stgcn_forward_pallas.1} parent=0 // pred_region
    _
  $region113: #{stgcn_forward_pallas.1} parent=0 // pred_fallthru
    _
  // Predicated region
  $region114: #{stgcn_forward_pallas.1} parent=0 // pred_check
    _
  $region115: #{stgcn_forward_pallas.1} parent=0 // pred_check_branch
    %123 = sbr.rel (0) target = $region117
  $region116: #{stgcn_forward_pallas.1} parent=0 // pred_region
    _
  $region117: #{stgcn_forward_pallas.1} parent=0 // pred_fallthru
    _
  %v124 = vld [vmem:[%s1] sm:$0xff]
  %v125 = vld [vmem:[%s1 + $0x8] sm:$0xff]
  %v126 = vld [vmem:[%s7] sm:$0xff]
  %v127 = vld [vmem:[%s7 + $0x8] sm:$0xff]
  %v128 = vld [vmem:[%s9] sm:$0x1]
  %v130 = vlaneseq
  %v131 = vshrl.u32 %v130, 7
  %v132 = vsub.s32 0, %v131
  %v133 = vrot.slane %v128, %v132
  %vm135 = vcmask 130048
  %v137 = vsel %vm135, %v124, 0
  %v140 = vsel %vm135, %v125, 0
  %142 = vmatprep.subr.mxu0 0.0
  %143 = vmatpush1.msra.mxu0 0.0
  %144 = vmatprep.subr.mxu0 0.0
  %145 = vmatpush1.msra.mxu0 0.0
  %146 = vmatprep.subr.mxu0 0.0
  %147 = vmatpush1.msra.mxu0 0.0
  %148 = vmatprep.subr.mxu0 0.0
  %149 = vmatpush1.msra.mxu0 0.0
  %150 = vmatprep.subr.mxu0 0.0
  %151 = vmatpush1.msra.mxu0 0.0
  %152 = vmatprep.subr.mxu0 0.0
  %153 = vmatpush1.msra.mxu0 0.0
  %154 = vmatprep.subr.mxu0 0.0
  %155 = vmatpush1.msra.mxu0 0.0
  %156 = vmatprep.subr.mxu0 0.0
  %157 = vmatpush1.msra.mxu0 0.0
  %158 = vmatprep.subr.mxu0 0.0
  %159 = vmatpush1.msra.mxu0 0.0
  %160 = vmatprep.subr.mxu0 0.0
  %161 = vmatpush1.msra.mxu0 0.0
  %162 = vmatprep.subr.mxu0 0.0
  %163 = vmatpush1.msra.mxu0 0.0
  %164 = vmatprep.subr.mxu0 0.0
  %165 = vmatpush1.msra.mxu0 0.0
  %166 = vmatprep.subr.mxu0 0.0
  %167 = vmatpush1.msra.mxu0 0.0
  %168 = vmatprep.subr.mxu0 0.0
  %169 = vmatpush1.msra.mxu0 0.0
  %170 = vmatprep.subr.mxu0 0.0
  %171 = vmatpush1.msra.mxu0 %v127
  %172 = vmatprep.subr.mxu0 0.0
  %173 = vmatpush1.msra.mxu0 %v126
  %174 = vmatprep.subr.mxu0 0.0
  %175 = vmatpush2.msra.mxu0 0.0
  %176 = vmatprep.subr.mxu0 0.0
  %177 = vmatpush2.msra.mxu0 0.0
  %178 = vmatprep.subr.mxu0 0.0
  %179 = vmatpush2.msra.mxu0 0.0
  %180 = vmatprep.subr.mxu0 0.0
  %181 = vmatpush2.msra.mxu0 0.0
  %182 = vmatprep.subr.mxu0 0.0
  %183 = vmatpush2.msra.mxu0 0.0
  %184 = vmatprep.subr.mxu0 0.0
  %185 = vmatpush2.msra.mxu0 0.0
  %186 = vmatprep.subr.mxu0 0.0
  %187 = vmatpush2.msra.mxu0 0.0
  %188 = vmatprep.subr.mxu0 0.0
  %189 = vmatpush2.msra.mxu0 0.0
  %190 = vmatprep.subr.mxu0 0.0
  %191 = vmatpush2.msra.mxu0 0.0
  %192 = vmatprep.subr.mxu0 0.0
  %193 = vmatpush2.msra.mxu0 0.0
  %194 = vmatprep.subr.mxu0 0.0
  %195 = vmatpush2.msra.mxu0 0.0
  %196 = vmatprep.subr.mxu0 0.0
  %197 = vmatpush2.msra.mxu0 0.0
  %198 = vmatprep.subr.mxu0 0.0
  %199 = vmatpush2.msra.mxu0 0.0
  %200 = vmatprep.subr.mxu0 0.0
  %201 = vmatpush2.msra.mxu0 0.0
  %202 = vmatprep.subr.mxu0 0.0
  %203 = vmatpush2.msra.mxu0 0.0
  %204 = vmatprep.subr.mxu0 0.0
  %205 = vmatpush2.msra.mxu0 0.0
  %206 = vmatprep.mubr.f32.mxu0 0.0
  %207 = vmatmul.mubr.f32.gmra.mxu0 %v137
  %v208 = vpop.f32.mrf.mxu0
  %v209 = vadd.f32 %v133, %v208
  %v210 = vpop.f32.mrf.mxu0
  %211 = vmatprep.mubr.f32.mxu0 0.0
  %212 = vmatmul.mubr.f32.gmra.mxu0 %v140
  %v213 = vpop.f32.mrf.mxu0
  %v214 = vadd.f32 %v133, %v213
  %v215 = vpop.f32.mrf.mxu0
  %216 = vdwg.mxu0
  %v218 = vrot.slane %v209, 7
  %vm220 = vcmask 1040384
  %v221 = vsel %vm220, 0.0, %v218
  %v222 = vrot.slane %v209, 1
  %vm224 = vcmask 1046528
  %v225 = vsel %vm224, %v222, 0.0
  %v227 = vrot.slane %v214, 7
  %v229 = vsel %vm220, 0.0, %v227
  %v230 = vrot.slane %v214, 1
  %v232 = vsel %vm224, %v230, 0.0
  %233 = vrot.lane.b32.xlu0 %v209, 32
  %v234 = vpop.permute.xlu0 %233
  %235 = vrot.lane.b32.xlu0 %v214, 32
  %v236 = vpop.permute.xlu0 %235
  %241 = vrot.lane.b32.xlu0 %v225, 64
  %v242 = vpop.permute.xlu0 %241
  %243 = vrot.lane.b32.xlu0 %v232, 64
  %v244 = vpop.permute.xlu0 %243
  %vm247 = vcmask 261120
  %v248 = vsel %vm247, %v221, %v234
  %v249 = vsel %vm247, %v229, %v236
  %vm250 = vcmask 523264
  %v251 = vsel %vm250, %v248, %v242
  %v252 = vsel %vm250, %v249, %v244
  %v253 = vld [vmem:[%s11] sm:$0xff]
  %v254 = vld [vmem:[%s11 + $0x8] sm:$0xff]
  %v255 = vld [vmem:[%s11 + $0x10] sm:$0xff]
  %v256 = vld [vmem:[%s11 + $0x18] sm:$0xff]
  %v257 = vld [vmem:[%s11 + $0x20] sm:$0xff]
  %v258 = vld [vmem:[%s11 + $0x28] sm:$0xff]
  %v259 = vld [vmem:[%s11 + $0x30] sm:$0xff]
  %v260 = vld [vmem:[%s11 + $0x38] sm:$0xff]
  %v261 = vld [vmem:[%s11 + $0x40] sm:$0xff]
  %v262 = vld [vmem:[%s11 + $0x48] sm:$0xff]
  %v263 = vld [vmem:[%s11 + $0x50] sm:$0xff]
  %v264 = vld [vmem:[%s11 + $0x58] sm:$0xff]
  %v265 = vld [vmem:[%s13] sm:$0x1]
  %v267 = vlaneseq
  %v268 = vshrl.u32 %v267, 7
  %v269 = vsub.s32 0, %v268
  %v270 = vrot.slane %v265, %v269
  %vm272 = vcmask 785408
  %v274 = vsel %vm272, %v251, 0
  %v277 = vsel %vm272, %v252, 0
  %279 = vmatprep.subr.mxu0 0.0
  %280 = vmatpush1.msra.mxu0 0.0
  %281 = vmatprep.subr.mxu0 0.0
  %282 = vmatpush1.msra.mxu0 0.0
  %283 = vmatprep.subr.mxu0 0.0
  %284 = vmatpush1.msra.mxu0 0.0
  %285 = vmatprep.subr.mxu0 0.0
  %286 = vmatpush1.msra.mxu0 0.0
  %287 = vmatprep.subr.mxu0 0.0
  %288 = vmatpush1.msra.mxu0 %v264
  %289 = vmatprep.subr.mxu0 0.0
  %290 = vmatpush1.msra.mxu0 %v263
  %291 = vmatprep.subr.mxu0 0.0
  %292 = vmatpush1.msra.mxu0 %v262
  %293 = vmatprep.subr.mxu0 0.0
  %294 = vmatpush1.msra.mxu0 %v261
  %295 = vmatprep.subr.mxu0 0.0
  %296 = vmatpush1.msra.mxu0 %v260
  %297 = vmatprep.subr.mxu0 0.0
  %298 = vmatpush1.msra.mxu0 %v259
  %299 = vmatprep.subr.mxu0 0.0
  %300 = vmatpush1.msra.mxu0 %v258
  %301 = vmatprep.subr.mxu0 0.0
  %302 = vmatpush1.msra.mxu0 %v257
  %303 = vmatprep.subr.mxu0 0.0
  %304 = vmatpush1.msra.mxu0 %v256
  %305 = vmatprep.subr.mxu0 0.0
  %306 = vmatpush1.msra.mxu0 %v255
  %307 = vmatprep.subr.mxu0 0.0
  %308 = vmatpush1.msra.mxu0 %v254
  %309 = vmatprep.subr.mxu0 0.0
  %310 = vmatpush1.msra.mxu0 %v253
  %311 = vmatprep.subr.mxu0 0.0
  %312 = vmatpush2.msra.mxu0 0.0
  %313 = vmatprep.subr.mxu0 0.0
  %314 = vmatpush2.msra.mxu0 0.0
  %315 = vmatprep.subr.mxu0 0.0
  %316 = vmatpush2.msra.mxu0 0.0
  %317 = vmatprep.subr.mxu0 0.0
  %318 = vmatpush2.msra.mxu0 0.0
  %319 = vmatprep.subr.mxu0 0.0
  %320 = vmatpush2.msra.mxu0 0.0
  %321 = vmatprep.subr.mxu0 0.0
  %322 = vmatpush2.msra.mxu0 0.0
  %323 = vmatprep.subr.mxu0 0.0
  %324 = vmatpush2.msra.mxu0 0.0
  %325 = vmatprep.subr.mxu0 0.0
  %326 = vmatpush2.msra.mxu0 0.0
  %327 = vmatprep.subr.mxu0 0.0
  %328 = vmatpush2.msra.mxu0 0.0
  %329 = vmatprep.subr.mxu0 0.0
  %330 = vmatpush2.msra.mxu0 0.0
  %331 = vmatprep.subr.mxu0 0.0
  %332 = vmatpush2.msra.mxu0 0.0
  %333 = vmatprep.subr.mxu0 0.0
  %334 = vmatpush2.msra.mxu0 0.0
  %335 = vmatprep.subr.mxu0 0.0
  %336 = vmatpush2.msra.mxu0 0.0
  %337 = vmatprep.subr.mxu0 0.0
  %338 = vmatpush2.msra.mxu0 0.0
  %339 = vmatprep.subr.mxu0 0.0
  %340 = vmatpush2.msra.mxu0 0.0
  %341 = vmatprep.subr.mxu0 0.0
  %342 = vmatpush2.msra.mxu0 0.0
  %343 = vmatprep.mubr.f32.mxu0 0.0
  %344 = vmatmul.mubr.f32.gmra.mxu0 %v274
  %v345 = vpop.f32.mrf.mxu0
  %v346 = vadd.f32 %v270, %v345
  %v347 = vpop.f32.mrf.mxu0
  %348 = vmatprep.mubr.f32.mxu0 0.0
  %349 = vmatmul.mubr.f32.gmra.mxu0 %v277
  %v350 = vpop.f32.mrf.mxu0
  %v351 = vadd.f32 %v270, %v350
  %v352 = vpop.f32.mrf.mxu0
  %353 = vdwg.mxu0
  %v354 = vmax.f32 %v346, 0.0
  %v355 = vmax.f32 %v351, 0.0
  %v356 = vsel %vm247, %v354, 0.0
  %v357 = vsel %vm247, %v355, 0.0
  %v358 = vadd.f32 %v356, %v357
  %v359 = vrot.slane %v358, 4
  %v360 = vadd.f32 %v358, %v359
  %v361 = vrot.slane %v360, 2
  %v362 = vadd.f32 %v360, %v361
  %v363 = vrot.slane %v362, 1
  %v364 = vadd.f32 %v362, %v363
  %v365 = vrcp.pop 16.0
  %v366 = vmul.f32 %v364, %v365
  %v367 = vsub.f32 %v354, %v366
  %v368 = vsub.f32 %v355, %v366
  %v369 = vmul.f32 %v367, %v367
  %v370 = vmul.f32 %v368, %v368
  %v371 = vsel %vm247, %v369, 0.0
  %v372 = vsel %vm247, %v370, 0.0
  %v373 = vadd.f32 %v371, %v372
  %v374 = vrot.slane %v373, 4
  %v375 = vadd.f32 %v373, %v374
  %v376 = vrot.slane %v375, 2
  %v377 = vadd.f32 %v375, %v376
  %v378 = vrot.slane %v377, 1
  %v379 = vadd.f32 %v377, %v378
  %v380 = vmul.f32 %v379, %v365
  %v381 = vld [vmem:[%s15] sm:$0x1]
  %v383 = vlaneseq
  %v384 = vshrl.u32 %v383, 7
  %v385 = vsub.s32 0, %v384
  %v386 = vrot.slane %v381, %v385
  %v388 = vmul.f32 %v386, %v367
  %v389 = vmul.f32 %v386, %v368
  %v390 = vadd.f32 %v380, 1e-05
  %v391 = vrsqrt.pop %v390
  %v392 = vmul.f32 %v388, %v391
  %v393 = vmul.f32 %v389, %v391
  %v394 = vld [vmem:[%s17] sm:$0x1]
  %v396 = vlaneseq
  %v397 = vshrl.u32 %v396, 7
  %v398 = vsub.s32 0, %v397
  %v399 = vrot.slane %v394, %v398
  %v401 = vadd.f32 %v392, %v399
  %v402 = vadd.f32 %v393, %v399
  %v403 = vmax.f32 %v401, 0.0
  %v404 = vmax.f32 %v402, 0.0
  %v405 = vld [vmem:[%s3] sm:$0xff]
  %v406 = vld [vmem:[%s3 + $0x8] sm:$0xff]
  %v407 = vld [vmem:[%s19] sm:$0x1]
  %v408 = vld [vmem:[%s21] sm:$0x1]
  %v410 = vlaneseq
  %v411 = vshrl.u32 %v410, 7
  %v412 = vsub.s32 0, %v411
  %v413 = vrot.slane %v408, %v412
  %vm415 = vcmask 7168
  %v417 = vsel %vm415, %v405, 0
  %v420 = vsel %vm415, %v406, 0
  %v423 = vsel %vm220, %v407, 0
  %425 = vmatprep.subr.mxu0 0.0
  %426 = vmatpush1.msra.mxu0 0.0
  %427 = vmatprep.subr.mxu0 0.0
  %428 = vmatpush1.msra.mxu0 0.0
  %429 = vmatprep.subr.mxu0 0.0
  %430 = vmatpush1.msra.mxu0 0.0
  %431 = vmatprep.subr.mxu0 0.0
  %432 = vmatpush1.msra.mxu0 0.0
  %433 = vmatprep.subr.mxu0 0.0
  %434 = vmatpush1.msra.mxu0 0.0
  %435 = vmatprep.subr.mxu0 0.0
  %436 = vmatpush1.msra.mxu0 0.0
  %437 = vmatprep.subr.mxu0 0.0
  %438 = vmatpush1.msra.mxu0 0.0
  %439 = vmatprep.subr.mxu0 0.0
  %440 = vmatpush1.msra.mxu0 0.0
  %441 = vmatprep.subr.mxu0 0.0
  %442 = vmatpush1.msra.mxu0 0.0
  %443 = vmatprep.subr.mxu0 0.0
  %444 = vmatpush1.msra.mxu0 0.0
  %445 = vmatprep.subr.mxu0 0.0
  %446 = vmatpush1.msra.mxu0 0.0
  %447 = vmatprep.subr.mxu0 0.0
  %448 = vmatpush1.msra.mxu0 0.0
  %449 = vmatprep.subr.mxu0 0.0
  %450 = vmatpush1.msra.mxu0 0.0
  %451 = vmatprep.subr.mxu0 0.0
  %452 = vmatpush1.msra.mxu0 0.0
  %453 = vmatprep.subr.mxu0 0.0
  %454 = vmatpush1.msra.mxu0 0.0
  %455 = vmatprep.subr.mxu0 0.0
  %456 = vmatpush1.msra.mxu0 %v423
  %457 = vmatprep.subr.mxu0 0.0
  %458 = vmatpush2.msra.mxu0 0.0
  %459 = vmatprep.subr.mxu0 0.0
  %460 = vmatpush2.msra.mxu0 0.0
  %461 = vmatprep.subr.mxu0 0.0
  %462 = vmatpush2.msra.mxu0 0.0
  %463 = vmatprep.subr.mxu0 0.0
  %464 = vmatpush2.msra.mxu0 0.0
  %465 = vmatprep.subr.mxu0 0.0
  %466 = vmatpush2.msra.mxu0 0.0
  %467 = vmatprep.subr.mxu0 0.0
  %468 = vmatpush2.msra.mxu0 0.0
  %469 = vmatprep.subr.mxu0 0.0
  %470 = vmatpush2.msra.mxu0 0.0
  %471 = vmatprep.subr.mxu0 0.0
  %472 = vmatpush2.msra.mxu0 0.0
  %473 = vmatprep.subr.mxu0 0.0
  %474 = vmatpush2.msra.mxu0 0.0
  %475 = vmatprep.subr.mxu0 0.0
  %476 = vmatpush2.msra.mxu0 0.0
  %477 = vmatprep.subr.mxu0 0.0
  %478 = vmatpush2.msra.mxu0 0.0
  %479 = vmatprep.subr.mxu0 0.0
  %480 = vmatpush2.msra.mxu0 0.0
  %481 = vmatprep.subr.mxu0 0.0
  %482 = vmatpush2.msra.mxu0 0.0
  %483 = vmatprep.subr.mxu0 0.0
  %484 = vmatpush2.msra.mxu0 0.0
  %485 = vmatprep.subr.mxu0 0.0
  %486 = vmatpush2.msra.mxu0 0.0
  %487 = vmatprep.subr.mxu0 0.0
  %488 = vmatpush2.msra.mxu0 0.0
  %489 = vmatprep.mubr.f32.mxu0 0.0
  %490 = vmatmul.mubr.f32.gmra.mxu0 %v417
  %v491 = vpop.f32.mrf.mxu0
  %v492 = vadd.f32 %v413, %v491
  %v493 = vpop.f32.mrf.mxu0
  %494 = vmatprep.mubr.f32.mxu0 0.0
  %495 = vmatmul.mubr.f32.gmra.mxu0 %v420
  %v496 = vpop.f32.mrf.mxu0
  %v497 = vadd.f32 %v413, %v496
  %v498 = vpop.f32.mrf.mxu0
  %499 = vdwg.mxu0
  %v500 = vld [vmem:[%s5] sm:$0xff]
  %v501 = vld [vmem:[%s5 + $0x8] sm:$0xff]
  %v503 = vsel %vm135, %v500, 0
  %v506 = vsel %vm135, %v501, 0
  %508 = vmatprep.subr.mxu0 0.0
  %509 = vmatpush1.msra.mxu0 0.0
  %510 = vmatprep.subr.mxu0 0.0
  %511 = vmatpush1.msra.mxu0 0.0
  %512 = vmatprep.subr.mxu0 0.0
  %513 = vmatpush1.msra.mxu0 0.0
  %514 = vmatprep.subr.mxu0 0.0
  %515 = vmatpush1.msra.mxu0 0.0
  %516 = vmatprep.subr.mxu0 0.0
  %517 = vmatpush1.msra.mxu0 0.0
  %518 = vmatprep.subr.mxu0 0.0
  %519 = vmatpush1.msra.mxu0 0.0
  %520 = vmatprep.subr.mxu0 0.0
  %521 = vmatpush1.msra.mxu0 0.0
  %522 = vmatprep.subr.mxu0 0.0
  %523 = vmatpush1.msra.mxu0 0.0
  %524 = vmatprep.subr.mxu0 0.0
  %525 = vmatpush1.msra.mxu0 0.0
  %526 = vmatprep.subr.mxu0 0.0
  %527 = vmatpush1.msra.mxu0 0.0
  %528 = vmatprep.subr.mxu0 0.0
  %529 = vmatpush1.msra.mxu0 0.0
  %530 = vmatprep.subr.mxu0 0.0
  %531 = vmatpush1.msra.mxu0 0.0
  %532 = vmatprep.subr.mxu0 0.0
  %533 = vmatpush1.msra.mxu0 0.0
  %534 = vmatprep.subr.mxu0 0.0
  %535 = vmatpush1.msra.mxu0 0.0
  %536 = vmatprep.subr.mxu0 0.0
  %537 = vmatpush1.msra.mxu0 %v404
  %538 = vmatprep.subr.mxu0 0.0
  %539 = vmatpush1.msra.mxu0 %v403
  %540 = vmatprep.subr.mxu0 0.0
  %541 = vmatpush2.msra.mxu0 0.0
  %542 = vmatprep.subr.mxu0 0.0
  %543 = vmatpush2.msra.mxu0 0.0
  %544 = vmatprep.subr.mxu0 0.0
  %545 = vmatpush2.msra.mxu0 0.0
  %546 = vmatprep.subr.mxu0 0.0
  %547 = vmatpush2.msra.mxu0 0.0
  %548 = vmatprep.subr.mxu0 0.0
  %549 = vmatpush2.msra.mxu0 0.0
  %550 = vmatprep.subr.mxu0 0.0
  %551 = vmatpush2.msra.mxu0 0.0
  %552 = vmatprep.subr.mxu0 0.0
  %553 = vmatpush2.msra.mxu0 0.0
  %554 = vmatprep.subr.mxu0 0.0
  %555 = vmatpush2.msra.mxu0 0.0
  %556 = vmatprep.subr.mxu0 0.0
  %557 = vmatpush2.msra.mxu0 0.0
  %558 = vmatprep.subr.mxu0 0.0
  %559 = vmatpush2.msra.mxu0 0.0
  %560 = vmatprep.subr.mxu0 0.0
  %561 = vmatpush2.msra.mxu0 0.0
  %562 = vmatprep.subr.mxu0 0.0
  %563 = vmatpush2.msra.mxu0 0.0
  %564 = vmatprep.subr.mxu0 0.0
  %565 = vmatpush2.msra.mxu0 0.0
  %566 = vmatprep.subr.mxu0 0.0
  %567 = vmatpush2.msra.mxu0 0.0
  %568 = vmatprep.subr.mxu0 0.0
  %569 = vmatpush2.msra.mxu0 0.0
  %570 = vmatprep.subr.mxu0 0.0
  %571 = vmatpush2.msra.mxu0 0.0
  %572 = vmatprep.mubr.f32.mxu0 0.0
  %573 = vmatmul.mubr.f32.gmra.mxu0 %v503
  %v574 = vpop.f32.mrf.mxu0
  %v575 = vadd.f32 0.0, %v574
  %v576 = vpop.f32.mrf.mxu0
  %577 = vmatprep.mubr.f32.mxu0 0.0
  %578 = vmatmul.mubr.f32.gmra.mxu0 %v506
  %v579 = vpop.f32.mrf.mxu0
  %v580 = vadd.f32 0.0, %v579
  %v581 = vpop.f32.mrf.mxu0
  %582 = vdwg.mxu0
  %v583 = vld [vmem:[%s23] sm:$0xff]
  %v584 = vld [vmem:[%s23 + $0x8] sm:$0xff]
  %v585 = vld [vmem:[%s23 + $0x10] sm:$0xff]
  %v586 = vld [vmem:[%s23 + $0x18] sm:$0xff]
  %v587 = vld [vmem:[%s25] sm:$0x1]
  %v589 = vlaneseq
  %v590 = vshrl.u32 %v589, 7
  %v591 = vsub.s32 0, %v590
  %v592 = vrot.slane %v587, %v591
  %v595 = vsel %vm247, %v575, 0
  %v598 = vsel %vm247, %v580, 0
  %600 = vmatprep.subr.mxu0 0.0
  %601 = vmatpush1.msra.mxu0 0.0
  %602 = vmatprep.subr.mxu0 0.0
  %603 = vmatpush1.msra.mxu0 0.0
  %604 = vmatprep.subr.mxu0 0.0
  %605 = vmatpush1.msra.mxu0 0.0
  %606 = vmatprep.subr.mxu0 0.0
  %607 = vmatpush1.msra.mxu0 0.0
  %608 = vmatprep.subr.mxu0 0.0
  %609 = vmatpush1.msra.mxu0 0.0
  %610 = vmatprep.subr.mxu0 0.0
  %611 = vmatpush1.msra.mxu0 0.0
  %612 = vmatprep.subr.mxu0 0.0
  %613 = vmatpush1.msra.mxu0 0.0
  %614 = vmatprep.subr.mxu0 0.0
  %615 = vmatpush1.msra.mxu0 0.0
  %616 = vmatprep.subr.mxu0 0.0
  %617 = vmatpush1.msra.mxu0 0.0
  %618 = vmatprep.subr.mxu0 0.0
  %619 = vmatpush1.msra.mxu0 0.0
  %620 = vmatprep.subr.mxu0 0.0
  %621 = vmatpush1.msra.mxu0 0.0
  %622 = vmatprep.subr.mxu0 0.0
  %623 = vmatpush1.msra.mxu0 0.0
  %624 = vmatprep.subr.mxu0 0.0
  %625 = vmatpush1.msra.mxu0 %v586
  %626 = vmatprep.subr.mxu0 0.0
  %627 = vmatpush1.msra.mxu0 %v585
  %628 = vmatprep.subr.mxu0 0.0
  %629 = vmatpush1.msra.mxu0 %v584
  %630 = vmatprep.subr.mxu0 0.0
  %631 = vmatpush1.msra.mxu0 %v583
  %632 = vmatprep.subr.mxu0 0.0
  %633 = vmatpush2.msra.mxu0 0.0
  %634 = vmatprep.subr.mxu0 0.0
  %635 = vmatpush2.msra.mxu0 0.0
  %636 = vmatprep.subr.mxu0 0.0
  %637 = vmatpush2.msra.mxu0 0.0
  %638 = vmatprep.subr.mxu0 0.0
  %639 = vmatpush2.msra.mxu0 0.0
  %640 = vmatprep.subr.mxu0 0.0
  %641 = vmatpush2.msra.mxu0 0.0
  %642 = vmatprep.subr.mxu0 0.0
  %643 = vmatpush2.msra.mxu0 0.0
  %644 = vmatprep.subr.mxu0 0.0
  %645 = vmatpush2.msra.mxu0 0.0
  %646 = vmatprep.subr.mxu0 0.0
  %647 = vmatpush2.msra.mxu0 0.0
  %648 = vmatprep.subr.mxu0 0.0
  %649 = vmatpush2.msra.mxu0 0.0
  %650 = vmatprep.subr.mxu0 0.0
  %651 = vmatpush2.msra.mxu0 0.0
  %652 = vmatprep.subr.mxu0 0.0
  %653 = vmatpush2.msra.mxu0 0.0
  %654 = vmatprep.subr.mxu0 0.0
  %655 = vmatpush2.msra.mxu0 0.0
  %656 = vmatprep.subr.mxu0 0.0
  %657 = vmatpush2.msra.mxu0 0.0
  %658 = vmatprep.subr.mxu0 0.0
  %659 = vmatpush2.msra.mxu0 0.0
  %660 = vmatprep.subr.mxu0 0.0
  %661 = vmatpush2.msra.mxu0 0.0
  %662 = vmatprep.subr.mxu0 0.0
  %663 = vmatpush2.msra.mxu0 0.0
  %664 = vmatprep.mubr.f32.mxu0 0.0
  %665 = vmatmul.mubr.f32.gmra.mxu0 %v595
  %v666 = vpop.f32.mrf.mxu0
  %v667 = vadd.f32 %v592, %v666
  %v668 = vpop.f32.mrf.mxu0
  %669 = vmatprep.mubr.f32.mxu0 0.0
  %670 = vmatmul.mubr.f32.gmra.mxu0 %v598
  %v671 = vpop.f32.mrf.mxu0
  %v672 = vadd.f32 %v592, %v671
  %v673 = vpop.f32.mrf.mxu0
  %674 = vdwg.mxu0
  %v675 = vmax.f32 %v667, 0.0
  %v676 = vmax.f32 %v672, 0.0
  %677 = vmatprep.subr.mxu0 0.0
  %678 = vmatpush1.msra.mxu0 0.0
  %679 = vmatprep.subr.mxu0 0.0
  %680 = vmatpush1.msra.mxu0 0.0
  %681 = vmatprep.subr.mxu0 0.0
  %682 = vmatpush1.msra.mxu0 0.0
  %683 = vmatprep.subr.mxu0 0.0
  %684 = vmatpush1.msra.mxu0 0.0
  %685 = vmatprep.subr.mxu0 0.0
  %686 = vmatpush1.msra.mxu0 0.0
  %687 = vmatprep.subr.mxu0 0.0
  %688 = vmatpush1.msra.mxu0 0.0
  %689 = vmatprep.subr.mxu0 0.0
  %690 = vmatpush1.msra.mxu0 0.0
  %691 = vmatprep.subr.mxu0 0.0
  %692 = vmatpush1.msra.mxu0 0.0
  %693 = vmatprep.subr.mxu0 0.0
  %694 = vmatpush1.msra.mxu0 0.0
  %695 = vmatprep.subr.mxu0 0.0
  %696 = vmatpush1.msra.mxu0 0.0
  %697 = vmatprep.subr.mxu0 0.0
  %698 = vmatpush1.msra.mxu0 0.0
  %699 = vmatprep.subr.mxu0 0.0
  %700 = vmatpush1.msra.mxu0 0.0
  %701 = vmatprep.subr.mxu0 0.0
  %702 = vmatpush1.msra.mxu0 0.0
  %703 = vmatprep.subr.mxu0 0.0
  %704 = vmatpush1.msra.mxu0 0.0
  %705 = vmatprep.subr.mxu0 0.0
  %706 = vmatpush1.msra.mxu0 %v676
  %707 = vmatprep.subr.mxu0 0.0
  %708 = vmatpush1.msra.mxu0 %v675
  %709 = vmatprep.subr.mxu0 0.0
  %710 = vmatpush2.msra.mxu0 0.0
  %711 = vmatprep.subr.mxu0 0.0
  %712 = vmatpush2.msra.mxu0 0.0
  %713 = vmatprep.subr.mxu0 0.0
  %714 = vmatpush2.msra.mxu0 0.0
  %715 = vmatprep.subr.mxu0 0.0
  %716 = vmatpush2.msra.mxu0 0.0
  %717 = vmatprep.subr.mxu0 0.0
  %718 = vmatpush2.msra.mxu0 0.0
  %719 = vmatprep.subr.mxu0 0.0
  %720 = vmatpush2.msra.mxu0 0.0
  %721 = vmatprep.subr.mxu0 0.0
  %722 = vmatpush2.msra.mxu0 0.0
  %723 = vmatprep.subr.mxu0 0.0
  %724 = vmatpush2.msra.mxu0 0.0
  %725 = vmatprep.subr.mxu0 0.0
  %726 = vmatpush2.msra.mxu0 0.0
  %727 = vmatprep.subr.mxu0 0.0
  %728 = vmatpush2.msra.mxu0 0.0
  %729 = vmatprep.subr.mxu0 0.0
  %730 = vmatpush2.msra.mxu0 0.0
  %731 = vmatprep.subr.mxu0 0.0
  %732 = vmatpush2.msra.mxu0 0.0
  %733 = vmatprep.subr.mxu0 0.0
  %734 = vmatpush2.msra.mxu0 0.0
  %735 = vmatprep.subr.mxu0 0.0
  %736 = vmatpush2.msra.mxu0 0.0
  %737 = vmatprep.subr.mxu0 0.0
  %738 = vmatpush2.msra.mxu0 0.0
  %739 = vmatprep.subr.mxu0 0.0
  %740 = vmatpush2.msra.mxu0 0.0
  %741 = vmatprep.mubr.f32.mxu0 0.0
  %742 = vmatmul.mubr.f32.gmra.mxu0 %v503
  %v743 = vpop.f32.mrf.mxu0
  %v744 = vadd.f32 0.0, %v743
  %v745 = vpop.f32.mrf.mxu0
  %746 = vmatprep.mubr.f32.mxu0 0.0
  %747 = vmatmul.mubr.f32.gmra.mxu0 %v506
  %v748 = vpop.f32.mrf.mxu0
  %v749 = vadd.f32 0.0, %v748
  %v750 = vpop.f32.mrf.mxu0
  %751 = vdwg.mxu0
  %s752 = scalar_lea.vmem %s23, 32
  %v753 = vld [vmem:[%s752] sm:$0xff]
  %v754 = vld [vmem:[%s752 + $0x8] sm:$0xff]
  %v755 = vld [vmem:[%s752 + $0x10] sm:$0xff]
  %v756 = vld [vmem:[%s752 + $0x18] sm:$0xff]
  %s757 = scalar_lea.vmem %s25, 1
  %v758 = vld [vmem:[%s757] sm:$0x1]
  %v760 = vlaneseq
  %v761 = vshrl.u32 %v760, 7
  %v762 = vsub.s32 0, %v761
  %v763 = vrot.slane %v758, %v762
  %v766 = vsel %vm247, %v744, 0
  %v769 = vsel %vm247, %v749, 0
  %771 = vmatprep.subr.mxu0 0.0
  %772 = vmatpush1.msra.mxu0 0.0
  %773 = vmatprep.subr.mxu0 0.0
  %774 = vmatpush1.msra.mxu0 0.0
  %775 = vmatprep.subr.mxu0 0.0
  %776 = vmatpush1.msra.mxu0 0.0
  %777 = vmatprep.subr.mxu0 0.0
  %778 = vmatpush1.msra.mxu0 0.0
  %779 = vmatprep.subr.mxu0 0.0
  %780 = vmatpush1.msra.mxu0 0.0
  %781 = vmatprep.subr.mxu0 0.0
  %782 = vmatpush1.msra.mxu0 0.0
  %783 = vmatprep.subr.mxu0 0.0
  %784 = vmatpush1.msra.mxu0 0.0
  %785 = vmatprep.subr.mxu0 0.0
  %786 = vmatpush1.msra.mxu0 0.0
  %787 = vmatprep.subr.mxu0 0.0
  %788 = vmatpush1.msra.mxu0 0.0
  %789 = vmatprep.subr.mxu0 0.0
  %790 = vmatpush1.msra.mxu0 0.0
  %791 = vmatprep.subr.mxu0 0.0
  %792 = vmatpush1.msra.mxu0 0.0
  %793 = vmatprep.subr.mxu0 0.0
  %794 = vmatpush1.msra.mxu0 0.0
  %795 = vmatprep.subr.mxu0 0.0
  %796 = vmatpush1.msra.mxu0 %v756
  %797 = vmatprep.subr.mxu0 0.0
  %798 = vmatpush1.msra.mxu0 %v755
  %799 = vmatprep.subr.mxu0 0.0
  %800 = vmatpush1.msra.mxu0 %v754
  %801 = vmatprep.subr.mxu0 0.0
  %802 = vmatpush1.msra.mxu0 %v753
  %803 = vmatprep.subr.mxu0 0.0
  %804 = vmatpush2.msra.mxu0 0.0
  %805 = vmatprep.subr.mxu0 0.0
  %806 = vmatpush2.msra.mxu0 0.0
  %807 = vmatprep.subr.mxu0 0.0
  %808 = vmatpush2.msra.mxu0 0.0
  %809 = vmatprep.subr.mxu0 0.0
  %810 = vmatpush2.msra.mxu0 0.0
  %811 = vmatprep.subr.mxu0 0.0
  %812 = vmatpush2.msra.mxu0 0.0
  %813 = vmatprep.subr.mxu0 0.0
  %814 = vmatpush2.msra.mxu0 0.0
  %815 = vmatprep.subr.mxu0 0.0
  %816 = vmatpush2.msra.mxu0 0.0
  %817 = vmatprep.subr.mxu0 0.0
  %818 = vmatpush2.msra.mxu0 0.0
  %819 = vmatprep.subr.mxu0 0.0
  %820 = vmatpush2.msra.mxu0 0.0
  %821 = vmatprep.subr.mxu0 0.0
  %822 = vmatpush2.msra.mxu0 0.0
  %823 = vmatprep.subr.mxu0 0.0
  %824 = vmatpush2.msra.mxu0 0.0
  %825 = vmatprep.subr.mxu0 0.0
  %826 = vmatpush2.msra.mxu0 0.0
  %827 = vmatprep.subr.mxu0 0.0
  %828 = vmatpush2.msra.mxu0 0.0
  %829 = vmatprep.subr.mxu0 0.0
  %830 = vmatpush2.msra.mxu0 0.0
  %831 = vmatprep.subr.mxu0 0.0
  %832 = vmatpush2.msra.mxu0 0.0
  %833 = vmatprep.subr.mxu0 0.0
  %834 = vmatpush2.msra.mxu0 0.0
  %835 = vmatprep.mubr.f32.mxu0 0.0
  %836 = vmatmul.mubr.f32.gmra.mxu0 %v766
  %v837 = vpop.f32.mrf.mxu0
  %v838 = vadd.f32 %v763, %v837
  %v839 = vpop.f32.mrf.mxu0
  %840 = vmatprep.mubr.f32.mxu0 0.0
  %841 = vmatmul.mubr.f32.gmra.mxu0 %v769
  %v842 = vpop.f32.mrf.mxu0
  %v843 = vadd.f32 %v763, %v842
  %v844 = vpop.f32.mrf.mxu0
  %845 = vdwg.mxu0
  %v846 = vmax.f32 %v838, 0.0
  %v847 = vmax.f32 %v843, 0.0
  %v848 = vld [vmem:[%s27] sm:$0xff]
  %v849 = vld [vmem:[%s27 + $0x8] sm:$0xff]
  %v850 = vld [vmem:[%s27 + $0x10] sm:$0xff]
  %v851 = vld [vmem:[%s27 + $0x18] sm:$0xff]
  %v852 = vld [vmem:[%s29] sm:$0x1]
  %v853 = vld [vmem:[%s31] sm:$0xff]
  %v854 = vld [vmem:[%s31 + $0x8] sm:$0xff]
  %v855 = vld [vmem:[%s31 + $0x10] sm:$0xff]
  %v856 = vld [vmem:[%s31 + $0x18] sm:$0xff]
  %v857 = vld [vmem:[%s33] sm:$0x1]
  %v859 = vlaneseq
  %v860 = vshrl.u32 %v859, 7
  %v861 = vsub.s32 0, %v860
  %v862 = vrot.slane %v852, %v861
  %v865 = vsel %vm247, %v846, 0
  %v868 = vsel %vm247, %v847, 0
  %870 = vmatprep.subr.mxu0 0.0
  %871 = vmatpush1.msra.mxu0 0.0
  %872 = vmatprep.subr.mxu0 0.0
  %873 = vmatpush1.msra.mxu0 0.0
  %874 = vmatprep.subr.mxu0 0.0
  %875 = vmatpush1.msra.mxu0 0.0
  %876 = vmatprep.subr.mxu0 0.0
  %877 = vmatpush1.msra.mxu0 0.0
  %878 = vmatprep.subr.mxu0 0.0
  %879 = vmatpush1.msra.mxu0 0.0
  %880 = vmatprep.subr.mxu0 0.0
  %881 = vmatpush1.msra.mxu0 0.0
  %882 = vmatprep.subr.mxu0 0.0
  %883 = vmatpush1.msra.mxu0 0.0
  %884 = vmatprep.subr.mxu0 0.0
  %885 = vmatpush1.msra.mxu0 0.0
  %886 = vmatprep.subr.mxu0 0.0
  %887 = vmatpush1.msra.mxu0 0.0
  %888 = vmatprep.subr.mxu0 0.0
  %889 = vmatpush1.msra.mxu0 0.0
  %890 = vmatprep.subr.mxu0 0.0
  %891 = vmatpush1.msra.mxu0 0.0
  %892 = vmatprep.subr.mxu0 0.0
  %893 = vmatpush1.msra.mxu0 0.0
  %894 = vmatprep.subr.mxu0 0.0
  %895 = vmatpush1.msra.mxu0 %v851
  %896 = vmatprep.subr.mxu0 0.0
  %897 = vmatpush1.msra.mxu0 %v850
  %898 = vmatprep.subr.mxu0 0.0
  %899 = vmatpush1.msra.mxu0 %v849
  %900 = vmatprep.subr.mxu0 0.0
  %901 = vmatpush1.msra.mxu0 %v848
  %902 = vmatprep.subr.mxu0 0.0
  %903 = vmatpush2.msra.mxu0 0.0
  %904 = vmatprep.subr.mxu0 0.0
  %905 = vmatpush2.msra.mxu0 0.0
  %906 = vmatprep.subr.mxu0 0.0
  %907 = vmatpush2.msra.mxu0 0.0
  %908 = vmatprep.subr.mxu0 0.0
  %909 = vmatpush2.msra.mxu0 0.0
  %910 = vmatprep.subr.mxu0 0.0
  %911 = vmatpush2.msra.mxu0 0.0
  %912 = vmatprep.subr.mxu0 0.0
  %913 = vmatpush2.msra.mxu0 0.0
  %914 = vmatprep.subr.mxu0 0.0
  %915 = vmatpush2.msra.mxu0 0.0
  %916 = vmatprep.subr.mxu0 0.0
  %917 = vmatpush2.msra.mxu0 0.0
  %918 = vmatprep.subr.mxu0 0.0
  %919 = vmatpush2.msra.mxu0 0.0
  %920 = vmatprep.subr.mxu0 0.0
  %921 = vmatpush2.msra.mxu0 0.0
  %922 = vmatprep.subr.mxu0 0.0
  %923 = vmatpush2.msra.mxu0 0.0
  %924 = vmatprep.subr.mxu0 0.0
  %925 = vmatpush2.msra.mxu0 0.0
  %926 = vmatprep.subr.mxu0 0.0
  %927 = vmatpush2.msra.mxu0 0.0
  %928 = vmatprep.subr.mxu0 0.0
  %929 = vmatpush2.msra.mxu0 0.0
  %930 = vmatprep.subr.mxu0 0.0
  %931 = vmatpush2.msra.mxu0 0.0
  %932 = vmatprep.subr.mxu0 0.0
  %933 = vmatpush2.msra.mxu0 0.0
  %934 = vmatprep.mubr.f32.mxu0 0.0
  %935 = vmatmul.mubr.f32.gmra.mxu0 %v865
  %v936 = vpop.f32.mrf.mxu0
  %v937 = vadd.f32 %v862, %v936
  %v938 = vpop.f32.mrf.mxu0
  %939 = vmatprep.mubr.f32.mxu0 0.0
  %940 = vmatmul.mubr.f32.gmra.mxu0 %v868
  %v941 = vpop.f32.mrf.mxu0
  %v942 = vadd.f32 %v862, %v941
  %v943 = vpop.f32.mrf.mxu0
  %944 = vdwg.mxu0
  %v946 = vrot.slane %v942, 7
  %v948 = vsel %vm220, %v937, %v946
  %v950 = vlaneseq
  %v951 = vshrl.u32 %v950, 7
  %v952 = vsub.s32 0, %v951
  %v953 = vrot.slane %v857, %v952
  %v956 = vsel %vm247, 0.0, 0
  %958 = vmatprep.subr.mxu0 0.0
  %959 = vmatpush1.msra.mxu0 0.0
  %960 = vmatprep.subr.mxu0 0.0
  %961 = vmatpush1.msra.mxu0 0.0
  %962 = vmatprep.subr.mxu0 0.0
  %963 = vmatpush1.msra.mxu0 0.0
  %964 = vmatprep.subr.mxu0 0.0
  %965 = vmatpush1.msra.mxu0 0.0
  %966 = vmatprep.subr.mxu0 0.0
  %967 = vmatpush1.msra.mxu0 0.0
  %968 = vmatprep.subr.mxu0 0.0
  %969 = vmatpush1.msra.mxu0 0.0
  %970 = vmatprep.subr.mxu0 0.0
  %971 = vmatpush1.msra.mxu0 0.0
  %972 = vmatprep.subr.mxu0 0.0
  %973 = vmatpush1.msra.mxu0 0.0
  %974 = vmatprep.subr.mxu0 0.0
  %975 = vmatpush1.msra.mxu0 0.0
  %976 = vmatprep.subr.mxu0 0.0
  %977 = vmatpush1.msra.mxu0 0.0
  %978 = vmatprep.subr.mxu0 0.0
  %979 = vmatpush1.msra.mxu0 0.0
  %980 = vmatprep.subr.mxu0 0.0
  %981 = vmatpush1.msra.mxu0 0.0
  %982 = vmatprep.subr.mxu0 0.0
  %983 = vmatpush1.msra.mxu0 %v856
  %984 = vmatprep.subr.mxu0 0.0
  %985 = vmatpush1.msra.mxu0 %v855
  %986 = vmatprep.subr.mxu0 0.0
  %987 = vmatpush1.msra.mxu0 %v854
  %988 = vmatprep.subr.mxu0 0.0
  %989 = vmatpush1.msra.mxu0 %v853
  %990 = vmatprep.subr.mxu0 0.0
  %991 = vmatpush2.msra.mxu0 0.0
  %992 = vmatprep.subr.mxu0 0.0
  %993 = vmatpush2.msra.mxu0 0.0
  %994 = vmatprep.subr.mxu0 0.0
  %995 = vmatpush2.msra.mxu0 0.0
  %996 = vmatprep.subr.mxu0 0.0
  %997 = vmatpush2.msra.mxu0 0.0
  %998 = vmatprep.subr.mxu0 0.0
  %999 = vmatpush2.msra.mxu0 0.0
  %1000 = vmatprep.subr.mxu0 0.0
  %1001 = vmatpush2.msra.mxu0 0.0
  %1002 = vmatprep.subr.mxu0 0.0
  %1003 = vmatpush2.msra.mxu0 0.0
  %1004 = vmatprep.subr.mxu0 0.0
  %1005 = vmatpush2.msra.mxu0 0.0
  %1006 = vmatprep.subr.mxu0 0.0
  %1007 = vmatpush2.msra.mxu0 0.0
  %1008 = vmatprep.subr.mxu0 0.0
  %1009 = vmatpush2.msra.mxu0 0.0
  %1010 = vmatprep.subr.mxu0 0.0
  %1011 = vmatpush2.msra.mxu0 0.0
  %1012 = vmatprep.subr.mxu0 0.0
  %1013 = vmatpush2.msra.mxu0 0.0
  %1014 = vmatprep.subr.mxu0 0.0
  %1015 = vmatpush2.msra.mxu0 0.0
  %1016 = vmatprep.subr.mxu0 0.0
  %1017 = vmatpush2.msra.mxu0 0.0
  %1018 = vmatprep.subr.mxu0 0.0
  %1019 = vmatpush2.msra.mxu0 0.0
  %1020 = vmatprep.subr.mxu0 0.0
  %1021 = vmatpush2.msra.mxu0 0.0
  %1022 = vmatprep.mubr.f32.mxu0 0.0
  %1023 = vmatmul.mubr.f32.gmra.mxu0 %v956
  %v1024 = vpop.f32.mrf.mxu0
  %v1025 = vadd.f32 %v953, %v1024
  %v1026 = vpop.f32.mrf.mxu0
  %1027 = vdwg.mxu0
  %v1028 = vadd.f32 %v948, %v1025
  %v1029 = vxor.u32 %v1028, 2147483648
  %v1030 = vmul.f32 %v1029, 1.442695
  %v1031 = vpow.pop %v1030
  %v1032 = vadd.f32 %v1031, 1.0
  %v1033 = vrcp.pop %v1032
  %v1034 = vmul.f32 1.0, %v1033
  %1036 = vrot.lane.b32.xlu0 %v1025, 64
  %v1037 = vpop.permute.xlu0 %1036
  %v1039 = vmul.f32 %v1034, %v1037
  %1041 = vrot.lane.b32.xlu0 %v1039, 64
  %v1042 = vpop.permute.xlu0 %1041
  %v1044 = vadd.f32 %v948, %v1042
  %v1045 = vtanh.pop %v1044
  %v1046 = vsub.f32 1.0, %v1034
  %1048 = vrot.lane.b32.xlu0 %v1045, 96
  %v1049 = vpop.permute.xlu0 %1048
  %v1051 = vmul.f32 %v1046, %v1049
  %v1052 = vmul.f32 %v1034, 0.0
  %v1053 = vadd.f32 %v1051, %v1052
  %v1055 = vrot.slane %v937, 1
  %v1057 = vsel %vm220, %v1055, %v942
  %1059 = vrot.lane.b32.xlu0 %v1053, 96
  %v1060 = vpop.permute.xlu0 %1059
  %v1061 = vsel %vm247, %v1060, 0
  %1063 = vmatprep.subr.mxu0 0.0
  %1064 = vmatpush1.msra.mxu0 0.0
  %1065 = vmatprep.subr.mxu0 0.0
  %1066 = vmatpush1.msra.mxu0 0.0
  %1067 = vmatprep.subr.mxu0 0.0
  %1068 = vmatpush1.msra.mxu0 0.0
  %1069 = vmatprep.subr.mxu0 0.0
  %1070 = vmatpush1.msra.mxu0 0.0
  %1071 = vmatprep.subr.mxu0 0.0
  %1072 = vmatpush1.msra.mxu0 0.0
  %1073 = vmatprep.subr.mxu0 0.0
  %1074 = vmatpush1.msra.mxu0 0.0
  %1075 = vmatprep.subr.mxu0 0.0
  %1076 = vmatpush1.msra.mxu0 0.0
  %1077 = vmatprep.subr.mxu0 0.0
  %1078 = vmatpush1.msra.mxu0 0.0
  %1079 = vmatprep.subr.mxu0 0.0
  %1080 = vmatpush1.msra.mxu0 0.0
  %1081 = vmatprep.subr.mxu0 0.0
  %1082 = vmatpush1.msra.mxu0 0.0
  %1083 = vmatprep.subr.mxu0 0.0
  %1084 = vmatpush1.msra.mxu0 0.0
  %1085 = vmatprep.subr.mxu0 0.0
  %1086 = vmatpush1.msra.mxu0 0.0
  %1087 = vmatprep.subr.mxu0 0.0
  %1088 = vmatpush1.msra.mxu0 %v856
  %1089 = vmatprep.subr.mxu0 0.0
  %1090 = vmatpush1.msra.mxu0 %v855
  %1091 = vmatprep.subr.mxu0 0.0
  %1092 = vmatpush1.msra.mxu0 %v854
  %1093 = vmatprep.subr.mxu0 0.0
  %1094 = vmatpush1.msra.mxu0 %v853
  %1095 = vmatprep.subr.mxu0 0.0
  %1096 = vmatpush2.msra.mxu0 0.0
  %1097 = vmatprep.subr.mxu0 0.0
  %1098 = vmatpush2.msra.mxu0 0.0
  %1099 = vmatprep.subr.mxu0 0.0
  %1100 = vmatpush2.msra.mxu0 0.0
  %1101 = vmatprep.subr.mxu0 0.0
  %1102 = vmatpush2.msra.mxu0 0.0
  %1103 = vmatprep.subr.mxu0 0.0
  %1104 = vmatpush2.msra.mxu0 0.0
  %1105 = vmatprep.subr.mxu0 0.0
  %1106 = vmatpush2.msra.mxu0 0.0
  %1107 = vmatprep.subr.mxu0 0.0
  %1108 = vmatpush2.msra.mxu0 0.0
  %1109 = vmatprep.subr.mxu0 0.0
  %1110 = vmatpush2.msra.mxu0 0.0
  %1111 = vmatprep.subr.mxu0 0.0
  %1112 = vmatpush2.msra.mxu0 0.0
  %1113 = vmatprep.subr.mxu0 0.0
  %1114 = vmatpush2.msra.mxu0 0.0
  %1115 = vmatprep.subr.mxu0 0.0
  %1116 = vmatpush2.msra.mxu0 0.0
  %1117 = vmatprep.subr.mxu0 0.0
  %1118 = vmatpush2.msra.mxu0 0.0
  %1119 = vmatprep.subr.mxu0 0.0
  %1120 = vmatpush2.msra.mxu0 0.0
  %1121 = vmatprep.subr.mxu0 0.0
  %1122 = vmatpush2.msra.mxu0 0.0
  %1123 = vmatprep.subr.mxu0 0.0
  %1124 = vmatpush2.msra.mxu0 0.0
  %1125 = vmatprep.subr.mxu0 0.0
  %1126 = vmatpush2.msra.mxu0 0.0
  %1127 = vmatprep.mubr.f32.mxu0 0.0
  %1128 = vmatmul.mubr.f32.gmra.mxu0 %v1061
  %v1129 = vpop.f32.mrf.mxu0
  %v1130 = vadd.f32 %v953, %v1129
  %v1131 = vpop.f32.mrf.mxu0
  %1132 = vdwg.mxu0
  %v1133 = vadd.f32 %v1057, %v1130
  %v1134 = vxor.u32 %v1133, 2147483648
  %v1135 = vmul.f32 %v1134, 1.442695
  %v1136 = vpow.pop %v1135
  %v1137 = vadd.f32 %v1136, 1.0
  %v1138 = vrcp.pop %v1137
  %v1139 = vmul.f32 1.0, %v1138
  %1141 = vrot.lane.b32.xlu0 %v1130, 64
  %v1142 = vpop.permute.xlu0 %1141
  %v1144 = vmul.f32 %v1139, %v1142
  %1146 = vrot.lane.b32.xlu0 %v1144, 64
  %v1147 = vpop.permute.xlu0 %1146
  %v1149 = vadd.f32 %v1057, %v1147
  %v1150 = vtanh.pop %v1149
  %v1151 = vsub.f32 1.0, %v1139
  %1153 = vrot.lane.b32.xlu0 %v1150, 96
  %v1154 = vpop.permute.xlu0 %1153
  %v1156 = vmul.f32 %v1151, %v1154
  %v1157 = vmul.f32 %v1139, %v1053
  %v1158 = vadd.f32 %v1156, %v1157
  %v1159 = vrot.slane %v937, 2
  %v1161 = vrot.slane %v942, 1
  %v1163 = vsel %vm220, %v1159, %v1161
  %1165 = vrot.lane.b32.xlu0 %v1158, 96
  %v1166 = vpop.permute.xlu0 %1165
  %v1167 = vsel %vm247, %v1166, 0
  %1169 = vmatprep.subr.mxu0 0.0
  %1170 = vmatpush1.msra.mxu0 0.0
  %1171 = vmatprep.subr.mxu0 0.0
  %1172 = vmatpush1.msra.mxu0 0.0
  %1173 = vmatprep.subr.mxu0 0.0
  %1174 = vmatpush1.msra.mxu0 0.0
  %1175 = vmatprep.subr.mxu0 0.0
  %1176 = vmatpush1.msra.mxu0 0.0
  %1177 = vmatprep.subr.mxu0 0.0
  %1178 = vmatpush1.msra.mxu0 0.0
  %1179 = vmatprep.subr.mxu0 0.0
  %1180 = vmatpush1.msra.mxu0 0.0
  %1181 = vmatprep.subr.mxu0 0.0
  %1182 = vmatpush1.msra.mxu0 0.0
  %1183 = vmatprep.subr.mxu0 0.0
  %1184 = vmatpush1.msra.mxu0 0.0
  %1185 = vmatprep.subr.mxu0 0.0
  %1186 = vmatpush1.msra.mxu0 0.0
  %1187 = vmatprep.subr.mxu0 0.0
  %1188 = vmatpush1.msra.mxu0 0.0
  %1189 = vmatprep.subr.mxu0 0.0
  %1190 = vmatpush1.msra.mxu0 0.0
  %1191 = vmatprep.subr.mxu0 0.0
  %1192 = vmatpush1.msra.mxu0 0.0
  %1193 = vmatprep.subr.mxu0 0.0
  %1194 = vmatpush1.msra.mxu0 %v856
  %1195 = vmatprep.subr.mxu0 0.0
  %1196 = vmatpush1.msra.mxu0 %v855
  %1197 = vmatprep.subr.mxu0 0.0
  %1198 = vmatpush1.msra.mxu0 %v854
  %1199 = vmatprep.subr.mxu0 0.0
  %1200 = vmatpush1.msra.mxu0 %v853
  %1201 = vmatprep.subr.mxu0 0.0
  %1202 = vmatpush2.msra.mxu0 0.0
  %1203 = vmatprep.subr.mxu0 0.0
  %1204 = vmatpush2.msra.mxu0 0.0
  %1205 = vmatprep.subr.mxu0 0.0
  %1206 = vmatpush2.msra.mxu0 0.0
  %1207 = vmatprep.subr.mxu0 0.0
  %1208 = vmatpush2.msra.mxu0 0.0
  %1209 = vmatprep.subr.mxu0 0.0
  %1210 = vmatpush2.msra.mxu0 0.0
  %1211 = vmatprep.subr.mxu0 0.0
  %1212 = vmatpush2.msra.mxu0 0.0
  %1213 = vmatprep.subr.mxu0 0.0
  %1214 = vmatpush2.msra.mxu0 0.0
  %1215 = vmatprep.subr.mxu0 0.0
  %1216 = vmatpush2.msra.mxu0 0.0
  %1217 = vmatprep.subr.mxu0 0.0
  %1218 = vmatpush2.msra.mxu0 0.0
  %1219 = vmatprep.subr.mxu0 0.0
  %1220 = vmatpush2.msra.mxu0 0.0
  %1221 = vmatprep.subr.mxu0 0.0
  %1222 = vmatpush2.msra.mxu0 0.0
  %1223 = vmatprep.subr.mxu0 0.0
  %1224 = vmatpush2.msra.mxu0 0.0
  %1225 = vmatprep.subr.mxu0 0.0
  %1226 = vmatpush2.msra.mxu0 0.0
  %1227 = vmatprep.subr.mxu0 0.0
  %1228 = vmatpush2.msra.mxu0 0.0
  %1229 = vmatprep.subr.mxu0 0.0
  %1230 = vmatpush2.msra.mxu0 0.0
  %1231 = vmatprep.subr.mxu0 0.0
  %1232 = vmatpush2.msra.mxu0 0.0
  %1233 = vmatprep.mubr.f32.mxu0 0.0
  %1234 = vmatmul.mubr.f32.gmra.mxu0 %v1167
  %v1235 = vpop.f32.mrf.mxu0
  %v1236 = vadd.f32 %v953, %v1235
  %v1237 = vpop.f32.mrf.mxu0
  %1238 = vdwg.mxu0
  %v1239 = vadd.f32 %v1163, %v1236
  %v1240 = vxor.u32 %v1239, 2147483648
  %v1241 = vmul.f32 %v1240, 1.442695
  %v1242 = vpow.pop %v1241
  %v1243 = vadd.f32 %v1242, 1.0
  %v1244 = vrcp.pop %v1243
  %v1245 = vmul.f32 1.0, %v1244
  %1247 = vrot.lane.b32.xlu0 %v1236, 64
  %v1248 = vpop.permute.xlu0 %1247
  %v1250 = vmul.f32 %v1245, %v1248
  %1252 = vrot.lane.b32.xlu0 %v1250, 64
  %v1253 = vpop.permute.xlu0 %1252
  %v1255 = vadd.f32 %v1163, %v1253
  %v1256 = vtanh.pop %v1255
  %v1257 = vsub.f32 1.0, %v1245
  %1259 = vrot.lane.b32.xlu0 %v1256, 96
  %v1260 = vpop.permute.xlu0 %1259
  %v1262 = vmul.f32 %v1257, %v1260
  %v1263 = vmul.f32 %v1245, %v1158
  %v1264 = vadd.f32 %v1262, %v1263
  %v1265 = vrot.slane %v937, 3
  %v1267 = vrot.slane %v942, 2
  %v1269 = vsel %vm220, %v1265, %v1267
  %1271 = vrot.lane.b32.xlu0 %v1264, 96
  %v1272 = vpop.permute.xlu0 %1271
  %v1273 = vsel %vm247, %v1272, 0
  %1275 = vmatprep.subr.mxu0 0.0
  %1276 = vmatpush1.msra.mxu0 0.0
  %1277 = vmatprep.subr.mxu0 0.0
  %1278 = vmatpush1.msra.mxu0 0.0
  %1279 = vmatprep.subr.mxu0 0.0
  %1280 = vmatpush1.msra.mxu0 0.0
  %1281 = vmatprep.subr.mxu0 0.0
  %1282 = vmatpush1.msra.mxu0 0.0
  %1283 = vmatprep.subr.mxu0 0.0
  %1284 = vmatpush1.msra.mxu0 0.0
  %1285 = vmatprep.subr.mxu0 0.0
  %1286 = vmatpush1.msra.mxu0 0.0
  %1287 = vmatprep.subr.mxu0 0.0
  %1288 = vmatpush1.msra.mxu0 0.0
  %1289 = vmatprep.subr.mxu0 0.0
  %1290 = vmatpush1.msra.mxu0 0.0
  %1291 = vmatprep.subr.mxu0 0.0
  %1292 = vmatpush1.msra.mxu0 0.0
  %1293 = vmatprep.subr.mxu0 0.0
  %1294 = vmatpush1.msra.mxu0 0.0
  %1295 = vmatprep.subr.mxu0 0.0
  %1296 = vmatpush1.msra.mxu0 0.0
  %1297 = vmatprep.subr.mxu0 0.0
  %1298 = vmatpush1.msra.mxu0 0.0
  %1299 = vmatprep.subr.mxu0 0.0
  %1300 = vmatpush1.msra.mxu0 %v856
  %1301 = vmatprep.subr.mxu0 0.0
  %1302 = vmatpush1.msra.mxu0 %v855
  %1303 = vmatprep.subr.mxu0 0.0
  %1304 = vmatpush1.msra.mxu0 %v854
  %1305 = vmatprep.subr.mxu0 0.0
  %1306 = vmatpush1.msra.mxu0 %v853
  %1307 = vmatprep.subr.mxu0 0.0
  %1308 = vmatpush2.msra.mxu0 0.0
  %1309 = vmatprep.subr.mxu0 0.0
  %1310 = vmatpush2.msra.mxu0 0.0
  %1311 = vmatprep.subr.mxu0 0.0
  %1312 = vmatpush2.msra.mxu0 0.0
  %1313 = vmatprep.subr.mxu0 0.0
  %1314 = vmatpush2.msra.mxu0 0.0
  %1315 = vmatprep.subr.mxu0 0.0
  %1316 = vmatpush2.msra.mxu0 0.0
  %1317 = vmatprep.subr.mxu0 0.0
  %1318 = vmatpush2.msra.mxu0 0.0
  %1319 = vmatprep.subr.mxu0 0.0
  %1320 = vmatpush2.msra.mxu0 0.0
  %1321 = vmatprep.subr.mxu0 0.0
  %1322 = vmatpush2.msra.mxu0 0.0
  %1323 = vmatprep.subr.mxu0 0.0
  %1324 = vmatpush2.msra.mxu0 0.0
  %1325 = vmatprep.subr.mxu0 0.0
  %1326 = vmatpush2.msra.mxu0 0.0
  %1327 = vmatprep.subr.mxu0 0.0
  %1328 = vmatpush2.msra.mxu0 0.0
  %1329 = vmatprep.subr.mxu0 0.0
  %1330 = vmatpush2.msra.mxu0 0.0
  %1331 = vmatprep.subr.mxu0 0.0
  %1332 = vmatpush2.msra.mxu0 0.0
  %1333 = vmatprep.subr.mxu0 0.0
  %1334 = vmatpush2.msra.mxu0 0.0
  %1335 = vmatprep.subr.mxu0 0.0
  %1336 = vmatpush2.msra.mxu0 0.0
  %1337 = vmatprep.subr.mxu0 0.0
  %1338 = vmatpush2.msra.mxu0 0.0
  %1339 = vmatprep.mubr.f32.mxu0 0.0
  %1340 = vmatmul.mubr.f32.gmra.mxu0 %v1273
  %v1341 = vpop.f32.mrf.mxu0
  %v1342 = vadd.f32 %v953, %v1341
  %v1343 = vpop.f32.mrf.mxu0
  %1344 = vdwg.mxu0
  %v1345 = vadd.f32 %v1269, %v1342
  %v1346 = vxor.u32 %v1345, 2147483648
  %v1347 = vmul.f32 %v1346, 1.442695
  %v1348 = vpow.pop %v1347
  %v1349 = vadd.f32 %v1348, 1.0
  %v1350 = vrcp.pop %v1349
  %v1351 = vmul.f32 1.0, %v1350
  %1353 = vrot.lane.b32.xlu0 %v1342, 64
  %v1354 = vpop.permute.xlu0 %1353
  %v1356 = vmul.f32 %v1351, %v1354
  %1358 = vrot.lane.b32.xlu0 %v1356, 64
  %v1359 = vpop.permute.xlu0 %1358
  %v1361 = vadd.f32 %v1269, %v1359
  %v1362 = vtanh.pop %v1361
  %v1363 = vsub.f32 1.0, %v1351
  %1365 = vrot.lane.b32.xlu0 %v1362, 96
  %v1366 = vpop.permute.xlu0 %1365
  %v1368 = vmul.f32 %v1363, %v1366
  %v1369 = vmul.f32 %v1351, %v1264
  %v1370 = vadd.f32 %v1368, %v1369
  %v1371 = vrot.slane %v937, 4
  %v1373 = vrot.slane %v942, 3
  %v1375 = vsel %vm220, %v1371, %v1373
  %1377 = vrot.lane.b32.xlu0 %v1370, 96
  %v1378 = vpop.permute.xlu0 %1377
  %v1379 = vsel %vm247, %v1378, 0
  %1381 = vmatprep.subr.mxu0 0.0
  %1382 = vmatpush1.msra.mxu0 0.0
  %1383 = vmatprep.subr.mxu0 0.0
  %1384 = vmatpush1.msra.mxu0 0.0
  %1385 = vmatprep.subr.mxu0 0.0
  %1386 = vmatpush1.msra.mxu0 0.0
  %1387 = vmatprep.subr.mxu0 0.0
  %1388 = vmatpush1.msra.mxu0 0.0
  %1389 = vmatprep.subr.mxu0 0.0
  %1390 = vmatpush1.msra.mxu0 0.0
  %1391 = vmatprep.subr.mxu0 0.0
  %1392 = vmatpush1.msra.mxu0 0.0
  %1393 = vmatprep.subr.mxu0 0.0
  %1394 = vmatpush1.msra.mxu0 0.0
  %1395 = vmatprep.subr.mxu0 0.0
  %1396 = vmatpush1.msra.mxu0 0.0
  %1397 = vmatprep.subr.mxu0 0.0
  %1398 = vmatpush1.msra.mxu0 0.0
  %1399 = vmatprep.subr.mxu0 0.0
  %1400 = vmatpush1.msra.mxu0 0.0
  %1401 = vmatprep.subr.mxu0 0.0
  %1402 = vmatpush1.msra.mxu0 0.0
  %1403 = vmatprep.subr.mxu0 0.0
  %1404 = vmatpush1.msra.mxu0 0.0
  %1405 = vmatprep.subr.mxu0 0.0
  %1406 = vmatpush1.msra.mxu0 %v856
  %1407 = vmatprep.subr.mxu0 0.0
  %1408 = vmatpush1.msra.mxu0 %v855
  %1409 = vmatprep.subr.mxu0 0.0
  %1410 = vmatpush1.msra.mxu0 %v854
  %1411 = vmatprep.subr.mxu0 0.0
  %1412 = vmatpush1.msra.mxu0 %v853
  %1413 = vmatprep.subr.mxu0 0.0
  %1414 = vmatpush2.msra.mxu0 0.0
  %1415 = vmatprep.subr.mxu0 0.0
  %1416 = vmatpush2.msra.mxu0 0.0
  %1417 = vmatprep.subr.mxu0 0.0
  %1418 = vmatpush2.msra.mxu0 0.0
  %1419 = vmatprep.subr.mxu0 0.0
  %1420 = vmatpush2.msra.mxu0 0.0
  %1421 = vmatprep.subr.mxu0 0.0
  %1422 = vmatpush2.msra.mxu0 0.0
  %1423 = vmatprep.subr.mxu0 0.0
  %1424 = vmatpush2.msra.mxu0 0.0
  %1425 = vmatprep.subr.mxu0 0.0
  %1426 = vmatpush2.msra.mxu0 0.0
  %1427 = vmatprep.subr.mxu0 0.0
  %1428 = vmatpush2.msra.mxu0 0.0
  %1429 = vmatprep.subr.mxu0 0.0
  %1430 = vmatpush2.msra.mxu0 0.0
  %1431 = vmatprep.subr.mxu0 0.0
  %1432 = vmatpush2.msra.mxu0 0.0
  %1433 = vmatprep.subr.mxu0 0.0
  %1434 = vmatpush2.msra.mxu0 0.0
  %1435 = vmatprep.subr.mxu0 0.0
  %1436 = vmatpush2.msra.mxu0 0.0
  %1437 = vmatprep.subr.mxu0 0.0
  %1438 = vmatpush2.msra.mxu0 0.0
  %1439 = vmatprep.subr.mxu0 0.0
  %1440 = vmatpush2.msra.mxu0 0.0
  %1441 = vmatprep.subr.mxu0 0.0
  %1442 = vmatpush2.msra.mxu0 0.0
  %1443 = vmatprep.subr.mxu0 0.0
  %1444 = vmatpush2.msra.mxu0 0.0
  %1445 = vmatprep.mubr.f32.mxu0 0.0
  %1446 = vmatmul.mubr.f32.gmra.mxu0 %v1379
  %v1447 = vpop.f32.mrf.mxu0
  %v1448 = vadd.f32 %v953, %v1447
  %v1449 = vpop.f32.mrf.mxu0
  %1450 = vdwg.mxu0
  %v1451 = vadd.f32 %v1375, %v1448
  %v1452 = vxor.u32 %v1451, 2147483648
  %v1453 = vmul.f32 %v1452, 1.442695
  %v1454 = vpow.pop %v1453
  %v1455 = vadd.f32 %v1454, 1.0
  %v1456 = vrcp.pop %v1455
  %v1457 = vmul.f32 1.0, %v1456
  %1459 = vrot.lane.b32.xlu0 %v1448, 64
  %v1460 = vpop.permute.xlu0 %1459
  %v1462 = vmul.f32 %v1457, %v1460
  %1464 = vrot.lane.b32.xlu0 %v1462, 64
  %v1465 = vpop.permute.xlu0 %1464
  %v1467 = vadd.f32 %v1375, %v1465
  %v1468 = vtanh.pop %v1467
  %v1469 = vsub.f32 1.0, %v1457
  %1471 = vrot.lane.b32.xlu0 %v1468, 96
  %v1472 = vpop.permute.xlu0 %1471
  %v1474 = vmul.f32 %v1469, %v1472
  %v1475 = vmul.f32 %v1457, %v1370
  %v1476 = vadd.f32 %v1474, %v1475
  %v1477 = vrot.slane %v937, 5
  %v1479 = vrot.slane %v942, 4
  %v1481 = vsel %vm220, %v1477, %v1479
  %1483 = vrot.lane.b32.xlu0 %v1476, 96
  %v1484 = vpop.permute.xlu0 %1483
  %v1485 = vsel %vm247, %v1484, 0
  %1487 = vmatprep.subr.mxu0 0.0
  %1488 = vmatpush1.msra.mxu0 0.0
  %1489 = vmatprep.subr.mxu0 0.0
  %1490 = vmatpush1.msra.mxu0 0.0
  %1491 = vmatprep.subr.mxu0 0.0
  %1492 = vmatpush1.msra.mxu0 0.0
  %1493 = vmatprep.subr.mxu0 0.0
  %1494 = vmatpush1.msra.mxu0 0.0
  %1495 = vmatprep.subr.mxu0 0.0
  %1496 = vmatpush1.msra.mxu0 0.0
  %1497 = vmatprep.subr.mxu0 0.0
  %1498 = vmatpush1.msra.mxu0 0.0
  %1499 = vmatprep.subr.mxu0 0.0
  %1500 = vmatpush1.msra.mxu0 0.0
  %1501 = vmatprep.subr.mxu0 0.0
  %1502 = vmatpush1.msra.mxu0 0.0
  %1503 = vmatprep.subr.mxu0 0.0
  %1504 = vmatpush1.msra.mxu0 0.0
  %1505 = vmatprep.subr.mxu0 0.0
  %1506 = vmatpush1.msra.mxu0 0.0
  %1507 = vmatprep.subr.mxu0 0.0
  %1508 = vmatpush1.msra.mxu0 0.0
  %1509 = vmatprep.subr.mxu0 0.0
  %1510 = vmatpush1.msra.mxu0 0.0
  %1511 = vmatprep.subr.mxu0 0.0
  %1512 = vmatpush1.msra.mxu0 %v856
  %1513 = vmatprep.subr.mxu0 0.0
  %1514 = vmatpush1.msra.mxu0 %v855
  %1515 = vmatprep.subr.mxu0 0.0
  %1516 = vmatpush1.msra.mxu0 %v854
  %1517 = vmatprep.subr.mxu0 0.0
  %1518 = vmatpush1.msra.mxu0 %v853
  %1519 = vmatprep.subr.mxu0 0.0
  %1520 = vmatpush2.msra.mxu0 0.0
  %1521 = vmatprep.subr.mxu0 0.0
  %1522 = vmatpush2.msra.mxu0 0.0
  %1523 = vmatprep.subr.mxu0 0.0
  %1524 = vmatpush2.msra.mxu0 0.0
  %1525 = vmatprep.subr.mxu0 0.0
  %1526 = vmatpush2.msra.mxu0 0.0
  %1527 = vmatprep.subr.mxu0 0.0
  %1528 = vmatpush2.msra.mxu0 0.0
  %1529 = vmatprep.subr.mxu0 0.0
  %1530 = vmatpush2.msra.mxu0 0.0
  %1531 = vmatprep.subr.mxu0 0.0
  %1532 = vmatpush2.msra.mxu0 0.0
  %1533 = vmatprep.subr.mxu0 0.0
  %1534 = vmatpush2.msra.mxu0 0.0
  %1535 = vmatprep.subr.mxu0 0.0
  %1536 = vmatpush2.msra.mxu0 0.0
  %1537 = vmatprep.subr.mxu0 0.0
  %1538 = vmatpush2.msra.mxu0 0.0
  %1539 = vmatprep.subr.mxu0 0.0
  %1540 = vmatpush2.msra.mxu0 0.0
  %1541 = vmatprep.subr.mxu0 0.0
  %1542 = vmatpush2.msra.mxu0 0.0
  %1543 = vmatprep.subr.mxu0 0.0
  %1544 = vmatpush2.msra.mxu0 0.0
  %1545 = vmatprep.subr.mxu0 0.0
  %1546 = vmatpush2.msra.mxu0 0.0
  %1547 = vmatprep.subr.mxu0 0.0
  %1548 = vmatpush2.msra.mxu0 0.0
  %1549 = vmatprep.subr.mxu0 0.0
  %1550 = vmatpush2.msra.mxu0 0.0
  %1551 = vmatprep.mubr.f32.mxu0 0.0
  %1552 = vmatmul.mubr.f32.gmra.mxu0 %v1485
  %v1553 = vpop.f32.mrf.mxu0
  %v1554 = vadd.f32 %v953, %v1553
  %v1555 = vpop.f32.mrf.mxu0
  %1556 = vdwg.mxu0
  %v1557 = vadd.f32 %v1481, %v1554
  %v1558 = vxor.u32 %v1557, 2147483648
  %v1559 = vmul.f32 %v1558, 1.442695
  %v1560 = vpow.pop %v1559
  %v1561 = vadd.f32 %v1560, 1.0
  %v1562 = vrcp.pop %v1561
  %v1563 = vmul.f32 1.0, %v1562
  %1565 = vrot.lane.b32.xlu0 %v1554, 64
  %v1566 = vpop.permute.xlu0 %1565
  %v1568 = vmul.f32 %v1563, %v1566
  %1570 = vrot.lane.b32.xlu0 %v1568, 64
  %v1571 = vpop.permute.xlu0 %1570
  %v1573 = vadd.f32 %v1481, %v1571
  %v1574 = vtanh.pop %v1573
  %v1575 = vsub.f32 1.0, %v1563
  %1577 = vrot.lane.b32.xlu0 %v1574, 96
  %v1578 = vpop.permute.xlu0 %1577
  %v1580 = vmul.f32 %v1575, %v1578
  %v1581 = vmul.f32 %v1563, %v1476
  %v1582 = vadd.f32 %v1580, %v1581
  %v1583 = vrot.slane %v937, 6
  %v1585 = vrot.slane %v942, 5
  %v1587 = vsel %vm220, %v1583, %v1585
  %1589 = vrot.lane.b32.xlu0 %v1582, 96
  %v1590 = vpop.permute.xlu0 %1589
  %v1591 = vsel %vm247, %v1590, 0
  %1593 = vmatprep.subr.mxu0 0.0
  %1594 = vmatpush1.msra.mxu0 0.0
  %1595 = vmatprep.subr.mxu0 0.0
  %1596 = vmatpush1.msra.mxu0 0.0
  %1597 = vmatprep.subr.mxu0 0.0
  %1598 = vmatpush1.msra.mxu0 0.0
  %1599 = vmatprep.subr.mxu0 0.0
  %1600 = vmatpush1.msra.mxu0 0.0
  %1601 = vmatprep.subr.mxu0 0.0
  %1602 = vmatpush1.msra.mxu0 0.0
  %1603 = vmatprep.subr.mxu0 0.0
  %1604 = vmatpush1.msra.mxu0 0.0
  %1605 = vmatprep.subr.mxu0 0.0
  %1606 = vmatpush1.msra.mxu0 0.0
  %1607 = vmatprep.subr.mxu0 0.0
  %1608 = vmatpush1.msra.mxu0 0.0
  %1609 = vmatprep.subr.mxu0 0.0
  %1610 = vmatpush1.msra.mxu0 0.0
  %1611 = vmatprep.subr.mxu0 0.0
  %1612 = vmatpush1.msra.mxu0 0.0
  %1613 = vmatprep.subr.mxu0 0.0
  %1614 = vmatpush1.msra.mxu0 0.0
  %1615 = vmatprep.subr.mxu0 0.0
  %1616 = vmatpush1.msra.mxu0 0.0
  %1617 = vmatprep.subr.mxu0 0.0
  %1618 = vmatpush1.msra.mxu0 %v856
  %1619 = vmatprep.subr.mxu0 0.0
  %1620 = vmatpush1.msra.mxu0 %v855
  %1621 = vmatprep.subr.mxu0 0.0
  %1622 = vmatpush1.msra.mxu0 %v854
  %1623 = vmatprep.subr.mxu0 0.0
  %1624 = vmatpush1.msra.mxu0 %v853
  %1625 = vmatprep.subr.mxu0 0.0
  %1626 = vmatpush2.msra.mxu0 0.0
  %1627 = vmatprep.subr.mxu0 0.0
  %1628 = vmatpush2.msra.mxu0 0.0
  %1629 = vmatprep.subr.mxu0 0.0
  %1630 = vmatpush2.msra.mxu0 0.0
  %1631 = vmatprep.subr.mxu0 0.0
  %1632 = vmatpush2.msra.mxu0 0.0
  %1633 = vmatprep.subr.mxu0 0.0
  %1634 = vmatpush2.msra.mxu0 0.0
  %1635 = vmatprep.subr.mxu0 0.0
  %1636 = vmatpush2.msra.mxu0 0.0
  %1637 = vmatprep.subr.mxu0 0.0
  %1638 = vmatpush2.msra.mxu0 0.0
  %1639 = vmatprep.subr.mxu0 0.0
  %1640 = vmatpush2.msra.mxu0 0.0
  %1641 = vmatprep.subr.mxu0 0.0
  %1642 = vmatpush2.msra.mxu0 0.0
  %1643 = vmatprep.subr.mxu0 0.0
  %1644 = vmatpush2.msra.mxu0 0.0
  %1645 = vmatprep.subr.mxu0 0.0
  %1646 = vmatpush2.msra.mxu0 0.0
  %1647 = vmatprep.subr.mxu0 0.0
  %1648 = vmatpush2.msra.mxu0 0.0
  %1649 = vmatprep.subr.mxu0 0.0
  %1650 = vmatpush2.msra.mxu0 0.0
  %1651 = vmatprep.subr.mxu0 0.0
  %1652 = vmatpush2.msra.mxu0 0.0
  %1653 = vmatprep.subr.mxu0 0.0
  %1654 = vmatpush2.msra.mxu0 0.0
  %1655 = vmatprep.subr.mxu0 0.0
  %1656 = vmatpush2.msra.mxu0 0.0
  %1657 = vmatprep.mubr.f32.mxu0 0.0
  %1658 = vmatmul.mubr.f32.gmra.mxu0 %v1591
  %v1659 = vpop.f32.mrf.mxu0
  %v1660 = vadd.f32 %v953, %v1659
  %v1661 = vpop.f32.mrf.mxu0
  %1662 = vdwg.mxu0
  %v1663 = vadd.f32 %v1587, %v1660
  %v1664 = vxor.u32 %v1663, 2147483648
  %v1665 = vmul.f32 %v1664, 1.442695
  %v1666 = vpow.pop %v1665
  %v1667 = vadd.f32 %v1666, 1.0
  %v1668 = vrcp.pop %v1667
  %v1669 = vmul.f32 1.0, %v1668
  %1671 = vrot.lane.b32.xlu0 %v1660, 64
  %v1672 = vpop.permute.xlu0 %1671
  %v1674 = vmul.f32 %v1669, %v1672
  %1676 = vrot.lane.b32.xlu0 %v1674, 64
  %v1677 = vpop.permute.xlu0 %1676
  %v1679 = vadd.f32 %v1587, %v1677
  %v1680 = vtanh.pop %v1679
  %v1681 = vsub.f32 1.0, %v1669
  %1683 = vrot.lane.b32.xlu0 %v1680, 96
  %v1684 = vpop.permute.xlu0 %1683
  %v1686 = vmul.f32 %v1681, %v1684
  %v1687 = vmul.f32 %v1669, %v1582
  %v1688 = vadd.f32 %v1686, %v1687
  %v1689 = vrot.slane %v937, 7
  %v1691 = vrot.slane %v942, 6
  %v1693 = vsel %vm220, %v1689, %v1691
  %1695 = vrot.lane.b32.xlu0 %v1688, 96
  %v1696 = vpop.permute.xlu0 %1695
  %v1697 = vsel %vm247, %v1696, 0
  %1699 = vmatprep.subr.mxu0 0.0
  %1700 = vmatpush1.msra.mxu0 0.0
  %1701 = vmatprep.subr.mxu0 0.0
  %1702 = vmatpush1.msra.mxu0 0.0
  %1703 = vmatprep.subr.mxu0 0.0
  %1704 = vmatpush1.msra.mxu0 0.0
  %1705 = vmatprep.subr.mxu0 0.0
  %1706 = vmatpush1.msra.mxu0 0.0
  %1707 = vmatprep.subr.mxu0 0.0
  %1708 = vmatpush1.msra.mxu0 0.0
  %1709 = vmatprep.subr.mxu0 0.0
  %1710 = vmatpush1.msra.mxu0 0.0
  %1711 = vmatprep.subr.mxu0 0.0
  %1712 = vmatpush1.msra.mxu0 0.0
  %1713 = vmatprep.subr.mxu0 0.0
  %1714 = vmatpush1.msra.mxu0 0.0
  %1715 = vmatprep.subr.mxu0 0.0
  %1716 = vmatpush1.msra.mxu0 0.0
  %1717 = vmatprep.subr.mxu0 0.0
  %1718 = vmatpush1.msra.mxu0 0.0
  %1719 = vmatprep.subr.mxu0 0.0
  %1720 = vmatpush1.msra.mxu0 0.0
  %1721 = vmatprep.subr.mxu0 0.0
  %1722 = vmatpush1.msra.mxu0 0.0
  %1723 = vmatprep.subr.mxu0 0.0
  %1724 = vmatpush1.msra.mxu0 %v856
  %1725 = vmatprep.subr.mxu0 0.0
  %1726 = vmatpush1.msra.mxu0 %v855
  %1727 = vmatprep.subr.mxu0 0.0
  %1728 = vmatpush1.msra.mxu0 %v854
  %1729 = vmatprep.subr.mxu0 0.0
  %1730 = vmatpush1.msra.mxu0 %v853
  %1731 = vmatprep.subr.mxu0 0.0
  %1732 = vmatpush2.msra.mxu0 0.0
  %1733 = vmatprep.subr.mxu0 0.0
  %1734 = vmatpush2.msra.mxu0 0.0
  %1735 = vmatprep.subr.mxu0 0.0
  %1736 = vmatpush2.msra.mxu0 0.0
  %1737 = vmatprep.subr.mxu0 0.0
  %1738 = vmatpush2.msra.mxu0 0.0
  %1739 = vmatprep.subr.mxu0 0.0
  %1740 = vmatpush2.msra.mxu0 0.0
  %1741 = vmatprep.subr.mxu0 0.0
  %1742 = vmatpush2.msra.mxu0 0.0
  %1743 = vmatprep.subr.mxu0 0.0
  %1744 = vmatpush2.msra.mxu0 0.0
  %1745 = vmatprep.subr.mxu0 0.0
  %1746 = vmatpush2.msra.mxu0 0.0
  %1747 = vmatprep.subr.mxu0 0.0
  %1748 = vmatpush2.msra.mxu0 0.0
  %1749 = vmatprep.subr.mxu0 0.0
  %1750 = vmatpush2.msra.mxu0 0.0
  %1751 = vmatprep.subr.mxu0 0.0
  %1752 = vmatpush2.msra.mxu0 0.0
  %1753 = vmatprep.subr.mxu0 0.0
  %1754 = vmatpush2.msra.mxu0 0.0
  %1755 = vmatprep.subr.mxu0 0.0
  %1756 = vmatpush2.msra.mxu0 0.0
  %1757 = vmatprep.subr.mxu0 0.0
  %1758 = vmatpush2.msra.mxu0 0.0
  %1759 = vmatprep.subr.mxu0 0.0
  %1760 = vmatpush2.msra.mxu0 0.0
  %1761 = vmatprep.subr.mxu0 0.0
  %1762 = vmatpush2.msra.mxu0 0.0
  %1763 = vmatprep.mubr.f32.mxu0 0.0
  %1764 = vmatmul.mubr.f32.gmra.mxu0 %v1697
  %v1765 = vpop.f32.mrf.mxu0
  %v1766 = vadd.f32 %v953, %v1765
  %v1767 = vpop.f32.mrf.mxu0
  %1768 = vdwg.mxu0
  %v1769 = vadd.f32 %v1693, %v1766
  %v1770 = vxor.u32 %v1769, 2147483648
  %v1771 = vmul.f32 %v1770, 1.442695
  %v1772 = vpow.pop %v1771
  %v1773 = vadd.f32 %v1772, 1.0
  %v1774 = vrcp.pop %v1773
  %v1775 = vmul.f32 1.0, %v1774
  %1777 = vrot.lane.b32.xlu0 %v1766, 64
  %v1778 = vpop.permute.xlu0 %1777
  %v1780 = vmul.f32 %v1775, %v1778
  %1782 = vrot.lane.b32.xlu0 %v1780, 64
  %v1783 = vpop.permute.xlu0 %1782
  %v1785 = vadd.f32 %v1693, %v1783
  %v1786 = vtanh.pop %v1785
  %v1787 = vsub.f32 1.0, %v1775
  %1789 = vrot.lane.b32.xlu0 %v1786, 96
  %v1790 = vpop.permute.xlu0 %1789
  %v1792 = vmul.f32 %v1787, %v1790
  %v1793 = vmul.f32 %v1775, %v1688
  %v1794 = vadd.f32 %v1792, %v1793
  %v1795 = vrot.slane %v1158, 7
  %v1797 = vrot.slane %v1264, 6
  %v1799 = vrot.slane %v1370, 5
  %v1801 = vrot.slane %v1476, 4
  %v1803 = vrot.slane %v1582, 3
  %v1805 = vrot.slane %v1688, 2
  %v1808 = vrot.slane %v1794, 1
  %v1810 = vsel %vm220, %v1053, %v1795
  %vm1811 = vcmask 1041408
  %v1812 = vsel %vm1811, %v1810, %v1797
  %vm1813 = vcmask 1042432
  %v1814 = vsel %vm1813, %v1812, %v1799
  %vm1815 = vcmask 1043456
  %v1816 = vsel %vm1815, %v1814, %v1801
  %vm1817 = vcmask 1044480
  %v1818 = vsel %vm1817, %v1816, %v1803
  %vm1819 = vcmask 1045504
  %v1820 = vsel %vm1819, %v1818, %v1805
  %v1821 = vsel %vm224, %v1820, %v1808
  %v1822 = vrot.slane %v1053, 1
  %v1824 = vrot.slane %v1264, 7
  %v1826 = vrot.slane %v1370, 6
  %v1828 = vrot.slane %v1476, 5
  %v1830 = vrot.slane %v1582, 4
  %v1832 = vrot.slane %v1688, 3
  %v1834 = vrot.slane %v1794, 2
  %v1836 = vsel %vm220, %v1822, %v1158
  %v1837 = vsel %vm1811, %v1836, %v1824
  %v1838 = vsel %vm1813, %v1837, %v1826
  %v1839 = vsel %vm1815, %v1838, %v1828
  %v1840 = vsel %vm1817, %v1839, %v1830
  %v1841 = vsel %vm1819, %v1840, %v1832
  %v1842 = vsel %vm224, %v1841, %v1834
  %1845 = vrot.lane.b32.xlu0 %v1821, 96
  %v1846 = vpop.permute.xlu0 %1845
  %1847 = vrot.lane.b32.xlu0 %v1842, 96
  %v1848 = vpop.permute.xlu0 %1847
  %1853 = vrot.lane.b32.xlu0 %v492, 32
  %v1854 = vpop.permute.xlu0 %1853
  %1855 = vrot.lane.b32.xlu0 %v497, 32
  %v1856 = vpop.permute.xlu0 %1855
  %v1859 = vsel %vm247, %v1846, %v1854
  %v1860 = vsel %vm247, %v1848, %v1856
  %v1861 = vld [vmem:[%s35] sm:$0xff]
  %v1862 = vld [vmem:[%s35 + $0x8] sm:$0xff]
  %v1863 = vld [vmem:[%s35 + $0x10] sm:$0xff]
  %v1864 = vld [vmem:[%s35 + $0x18] sm:$0xff]
  %v1865 = vld [vmem:[%s35 + $0x20] sm:$0xff]
  %v1866 = vld [vmem:[%s35 + $0x28] sm:$0xff]
  %v1867 = vld [vmem:[%s37] sm:$0x1]
  %v1869 = vlaneseq
  %v1870 = vshrl.u32 %v1869, 7
  %v1871 = vsub.s32 0, %v1870
  %v1872 = vrot.slane %v1867, %v1871
  %vm1874 = vcmask 392192
  %v1876 = vsel %vm1874, %v1859, 0
  %v1879 = vsel %vm1874, %v1860, 0
  %1881 = vmatprep.subr.mxu0 0.0
  %1882 = vmatpush1.msra.mxu0 0.0
  %1883 = vmatprep.subr.mxu0 0.0
  %1884 = vmatpush1.msra.mxu0 0.0
  %1885 = vmatprep.subr.mxu0 0.0
  %1886 = vmatpush1.msra.mxu0 0.0
  %1887 = vmatprep.subr.mxu0 0.0
  %1888 = vmatpush1.msra.mxu0 0.0
  %1889 = vmatprep.subr.mxu0 0.0
  %1890 = vmatpush1.msra.mxu0 0.0
  %1891 = vmatprep.subr.mxu0 0.0
  %1892 = vmatpush1.msra.mxu0 0.0
  %1893 = vmatprep.subr.mxu0 0.0
  %1894 = vmatpush1.msra.mxu0 0.0
  %1895 = vmatprep.subr.mxu0 0.0
  %1896 = vmatpush1.msra.mxu0 0.0
  %1897 = vmatprep.subr.mxu0 0.0
  %1898 = vmatpush1.msra.mxu0 0.0
  %1899 = vmatprep.subr.mxu0 0.0
  %1900 = vmatpush1.msra.mxu0 0.0
  %1901 = vmatprep.subr.mxu0 0.0
  %1902 = vmatpush1.msra.mxu0 %v1866
  %1903 = vmatprep.subr.mxu0 0.0
  %1904 = vmatpush1.msra.mxu0 %v1865
  %1905 = vmatprep.subr.mxu0 0.0
  %1906 = vmatpush1.msra.mxu0 %v1864
  %1907 = vmatprep.subr.mxu0 0.0
  %1908 = vmatpush1.msra.mxu0 %v1863
  %1909 = vmatprep.subr.mxu0 0.0
  %1910 = vmatpush1.msra.mxu0 %v1862
  %1911 = vmatprep.subr.mxu0 0.0
  %1912 = vmatpush1.msra.mxu0 %v1861
  %1913 = vmatprep.subr.mxu0 0.0
  %1914 = vmatpush2.msra.mxu0 0.0
  %1915 = vmatprep.subr.mxu0 0.0
  %1916 = vmatpush2.msra.mxu0 0.0
  %1917 = vmatprep.subr.mxu0 0.0
  %1918 = vmatpush2.msra.mxu0 0.0
  %1919 = vmatprep.subr.mxu0 0.0
  %1920 = vmatpush2.msra.mxu0 0.0
  %1921 = vmatprep.subr.mxu0 0.0
  %1922 = vmatpush2.msra.mxu0 0.0
  %1923 = vmatprep.subr.mxu0 0.0
  %1924 = vmatpush2.msra.mxu0 0.0
  %1925 = vmatprep.subr.mxu0 0.0
  %1926 = vmatpush2.msra.mxu0 0.0
  %1927 = vmatprep.subr.mxu0 0.0
  %1928 = vmatpush2.msra.mxu0 0.0
  %1929 = vmatprep.subr.mxu0 0.0
  %1930 = vmatpush2.msra.mxu0 0.0
  %1931 = vmatprep.subr.mxu0 0.0
  %1932 = vmatpush2.msra.mxu0 0.0
  %1933 = vmatprep.subr.mxu0 0.0
  %1934 = vmatpush2.msra.mxu0 0.0
  %1935 = vmatprep.subr.mxu0 0.0
  %1936 = vmatpush2.msra.mxu0 0.0
  %1937 = vmatprep.subr.mxu0 0.0
  %1938 = vmatpush2.msra.mxu0 0.0
  %1939 = vmatprep.subr.mxu0 0.0
  %1940 = vmatpush2.msra.mxu0 0.0
  %1941 = vmatprep.subr.mxu0 0.0
  %1942 = vmatpush2.msra.mxu0 0.0
  %1943 = vmatprep.subr.mxu0 0.0
  %1944 = vmatpush2.msra.mxu0 0.0
  %1945 = vmatprep.mubr.f32.mxu0 0.0
  %1946 = vmatmul.mubr.f32.gmra.mxu0 %v1876
  %v1947 = vpop.f32.mrf.mxu0
  %v1948 = vadd.f32 %v1872, %v1947
  %v1949 = vpop.f32.mrf.mxu0
  %1950 = vmatprep.mubr.f32.mxu0 0.0
  %1951 = vmatmul.mubr.f32.gmra.mxu0 %v1879
  %v1952 = vpop.f32.mrf.mxu0
  %v1953 = vadd.f32 %v1872, %v1952
  %v1954 = vpop.f32.mrf.mxu0
  %1955 = vdwg.mxu0
  %v1956 = vmax.f32 %v1948, 0.0
  %v1957 = vmax.f32 %v1953, 0.0
  %1958 = vmatprep.subr.mxu0 0.0
  %1959 = vmatpush1.msra.mxu0 0.0
  %1960 = vmatprep.subr.mxu0 0.0
  %1961 = vmatpush1.msra.mxu0 0.0
  %1962 = vmatprep.subr.mxu0 0.0
  %1963 = vmatpush1.msra.mxu0 0.0
  %1964 = vmatprep.subr.mxu0 0.0
  %1965 = vmatpush1.msra.mxu0 0.0
  %1966 = vmatprep.subr.mxu0 0.0
  %1967 = vmatpush1.msra.mxu0 0.0
  %1968 = vmatprep.subr.mxu0 0.0
  %1969 = vmatpush1.msra.mxu0 0.0
  %1970 = vmatprep.subr.mxu0 0.0
  %1971 = vmatpush1.msra.mxu0 0.0
  %1972 = vmatprep.subr.mxu0 0.0
  %1973 = vmatpush1.msra.mxu0 0.0
  %1974 = vmatprep.subr.mxu0 0.0
  %1975 = vmatpush1.msra.mxu0 0.0
  %1976 = vmatprep.subr.mxu0 0.0
  %1977 = vmatpush1.msra.mxu0 0.0
  %1978 = vmatprep.subr.mxu0 0.0
  %1979 = vmatpush1.msra.mxu0 0.0
  %1980 = vmatprep.subr.mxu0 0.0
  %1981 = vmatpush1.msra.mxu0 0.0
  %1982 = vmatprep.subr.mxu0 0.0
  %1983 = vmatpush1.msra.mxu0 0.0
  %1984 = vmatprep.subr.mxu0 0.0
  %1985 = vmatpush1.msra.mxu0 0.0
  %1986 = vmatprep.subr.mxu0 0.0
  %1987 = vmatpush1.msra.mxu0 %v1957
  %1988 = vmatprep.subr.mxu0 0.0
  %1989 = vmatpush1.msra.mxu0 %v1956
  %1990 = vmatprep.subr.mxu0 0.0
  %1991 = vmatpush2.msra.mxu0 0.0
  %1992 = vmatprep.subr.mxu0 0.0
  %1993 = vmatpush2.msra.mxu0 0.0
  %1994 = vmatprep.subr.mxu0 0.0
  %1995 = vmatpush2.msra.mxu0 0.0
  %1996 = vmatprep.subr.mxu0 0.0
  %1997 = vmatpush2.msra.mxu0 0.0
  %1998 = vmatprep.subr.mxu0 0.0
  %1999 = vmatpush2.msra.mxu0 0.0
  %2000 = vmatprep.subr.mxu0 0.0
  %2001 = vmatpush2.msra.mxu0 0.0
  %2002 = vmatprep.subr.mxu0 0.0
  %2003 = vmatpush2.msra.mxu0 0.0
  %2004 = vmatprep.subr.mxu0 0.0
  %2005 = vmatpush2.msra.mxu0 0.0
  %2006 = vmatprep.subr.mxu0 0.0
  %2007 = vmatpush2.msra.mxu0 0.0
  %2008 = vmatprep.subr.mxu0 0.0
  %2009 = vmatpush2.msra.mxu0 0.0
  %2010 = vmatprep.subr.mxu0 0.0
  %2011 = vmatpush2.msra.mxu0 0.0
  %2012 = vmatprep.subr.mxu0 0.0
  %2013 = vmatpush2.msra.mxu0 0.0
  %2014 = vmatprep.subr.mxu0 0.0
  %2015 = vmatpush2.msra.mxu0 0.0
  %2016 = vmatprep.subr.mxu0 0.0
  %2017 = vmatpush2.msra.mxu0 0.0
  %2018 = vmatprep.subr.mxu0 0.0
  %2019 = vmatpush2.msra.mxu0 0.0
  %2020 = vmatprep.subr.mxu0 0.0
  %2021 = vmatpush2.msra.mxu0 0.0
  %2022 = vmatprep.mubr.f32.mxu0 0.0
  %2023 = vmatmul.mubr.f32.gmra.mxu0 %v503
  %v2024 = vpop.f32.mrf.mxu0
  %v2025 = vadd.f32 0.0, %v2024
  %v2026 = vpop.f32.mrf.mxu0
  %2027 = vmatprep.mubr.f32.mxu0 0.0
  %2028 = vmatmul.mubr.f32.gmra.mxu0 %v506
  %v2029 = vpop.f32.mrf.mxu0
  %v2030 = vadd.f32 0.0, %v2029
  %v2031 = vpop.f32.mrf.mxu0
  %2032 = vdwg.mxu0
  %v2033 = vld [vmem:[%s39] sm:$0xff]
  %v2034 = vld [vmem:[%s39 + $0x8] sm:$0xff]
  %v2035 = vld [vmem:[%s39 + $0x10] sm:$0xff]
  %v2036 = vld [vmem:[%s39 + $0x18] sm:$0xff]
  %v2037 = vld [vmem:[%s41] sm:$0x1]
  %v2039 = vlaneseq
  %v2040 = vshrl.u32 %v2039, 7
  %v2041 = vsub.s32 0, %v2040
  %v2042 = vrot.slane %v2037, %v2041
  %v2045 = vsel %vm247, %v2025, 0
  %v2048 = vsel %vm247, %v2030, 0
  %2050 = vmatprep.subr.mxu0 0.0
  %2051 = vmatpush1.msra.mxu0 0.0
  %2052 = vmatprep.subr.mxu0 0.0
  %2053 = vmatpush1.msra.mxu0 0.0
  %2054 = vmatprep.subr.mxu0 0.0
  %2055 = vmatpush1.msra.mxu0 0.0
  %2056 = vmatprep.subr.mxu0 0.0
  %2057 = vmatpush1.msra.mxu0 0.0
  %2058 = vmatprep.subr.mxu0 0.0
  %2059 = vmatpush1.msra.mxu0 0.0
  %2060 = vmatprep.subr.mxu0 0.0
  %2061 = vmatpush1.msra.mxu0 0.0
  %2062 = vmatprep.subr.mxu0 0.0
  %2063 = vmatpush1.msra.mxu0 0.0
  %2064 = vmatprep.subr.mxu0 0.0
  %2065 = vmatpush1.msra.mxu0 0.0
  %2066 = vmatprep.subr.mxu0 0.0
  %2067 = vmatpush1.msra.mxu0 0.0
  %2068 = vmatprep.subr.mxu0 0.0
  %2069 = vmatpush1.msra.mxu0 0.0
  %2070 = vmatprep.subr.mxu0 0.0
  %2071 = vmatpush1.msra.mxu0 0.0
  %2072 = vmatprep.subr.mxu0 0.0
  %2073 = vmatpush1.msra.mxu0 0.0
  %2074 = vmatprep.subr.mxu0 0.0
  %2075 = vmatpush1.msra.mxu0 %v2036
  %2076 = vmatprep.subr.mxu0 0.0
  %2077 = vmatpush1.msra.mxu0 %v2035
  %2078 = vmatprep.subr.mxu0 0.0
  %2079 = vmatpush1.msra.mxu0 %v2034
  %2080 = vmatprep.subr.mxu0 0.0
  %2081 = vmatpush1.msra.mxu0 %v2033
  %2082 = vmatprep.subr.mxu0 0.0
  %2083 = vmatpush2.msra.mxu0 0.0
  %2084 = vmatprep.subr.mxu0 0.0
  %2085 = vmatpush2.msra.mxu0 0.0
  %2086 = vmatprep.subr.mxu0 0.0
  %2087 = vmatpush2.msra.mxu0 0.0
  %2088 = vmatprep.subr.mxu0 0.0
  %2089 = vmatpush2.msra.mxu0 0.0
  %2090 = vmatprep.subr.mxu0 0.0
  %2091 = vmatpush2.msra.mxu0 0.0
  %2092 = vmatprep.subr.mxu0 0.0
  %2093 = vmatpush2.msra.mxu0 0.0
  %2094 = vmatprep.subr.mxu0 0.0
  %2095 = vmatpush2.msra.mxu0 0.0
  %2096 = vmatprep.subr.mxu0 0.0
  %2097 = vmatpush2.msra.mxu0 0.0
  %2098 = vmatprep.subr.mxu0 0.0
  %2099 = vmatpush2.msra.mxu0 0.0
  %2100 = vmatprep.subr.mxu0 0.0
  %2101 = vmatpush2.msra.mxu0 0.0
  %2102 = vmatprep.subr.mxu0 0.0
  %2103 = vmatpush2.msra.mxu0 0.0
  %2104 = vmatprep.subr.mxu0 0.0
  %2105 = vmatpush2.msra.mxu0 0.0
  %2106 = vmatprep.subr.mxu0 0.0
  %2107 = vmatpush2.msra.mxu0 0.0
  %2108 = vmatprep.subr.mxu0 0.0
  %2109 = vmatpush2.msra.mxu0 0.0
  %2110 = vmatprep.subr.mxu0 0.0
  %2111 = vmatpush2.msra.mxu0 0.0
  %2112 = vmatprep.subr.mxu0 0.0
  %2113 = vmatpush2.msra.mxu0 0.0
  %2114 = vmatprep.mubr.f32.mxu0 0.0
  %2115 = vmatmul.mubr.f32.gmra.mxu0 %v2045
  %v2116 = vpop.f32.mrf.mxu0
  %v2117 = vadd.f32 %v2042, %v2116
  %v2118 = vpop.f32.mrf.mxu0
  %2119 = vmatprep.mubr.f32.mxu0 0.0
  %2120 = vmatmul.mubr.f32.gmra.mxu0 %v2048
  %v2121 = vpop.f32.mrf.mxu0
  %v2122 = vadd.f32 %v2042, %v2121
  %v2123 = vpop.f32.mrf.mxu0
  %2124 = vdwg.mxu0
  %v2125 = vmax.f32 %v2117, 0.0
  %v2126 = vmax.f32 %v2122, 0.0
  %2127 = vmatprep.subr.mxu0 0.0
  %2128 = vmatpush1.msra.mxu0 0.0
  %2129 = vmatprep.subr.mxu0 0.0
  %2130 = vmatpush1.msra.mxu0 0.0
  %2131 = vmatprep.subr.mxu0 0.0
  %2132 = vmatpush1.msra.mxu0 0.0
  %2133 = vmatprep.subr.mxu0 0.0
  %2134 = vmatpush1.msra.mxu0 0.0
  %2135 = vmatprep.subr.mxu0 0.0
  %2136 = vmatpush1.msra.mxu0 0.0
  %2137 = vmatprep.subr.mxu0 0.0
  %2138 = vmatpush1.msra.mxu0 0.0
  %2139 = vmatprep.subr.mxu0 0.0
  %2140 = vmatpush1.msra.mxu0 0.0
  %2141 = vmatprep.subr.mxu0 0.0
  %2142 = vmatpush1.msra.mxu0 0.0
  %2143 = vmatprep.subr.mxu0 0.0
  %2144 = vmatpush1.msra.mxu0 0.0
  %2145 = vmatprep.subr.mxu0 0.0
  %2146 = vmatpush1.msra.mxu0 0.0
  %2147 = vmatprep.subr.mxu0 0.0
  %2148 = vmatpush1.msra.mxu0 0.0
  %2149 = vmatprep.subr.mxu0 0.0
  %2150 = vmatpush1.msra.mxu0 0.0
  %2151 = vmatprep.subr.mxu0 0.0
  %2152 = vmatpush1.msra.mxu0 0.0
  %2153 = vmatprep.subr.mxu0 0.0
  %2154 = vmatpush1.msra.mxu0 0.0
  %2155 = vmatprep.subr.mxu0 0.0
  %2156 = vmatpush1.msra.mxu0 %v2126
  %2157 = vmatprep.subr.mxu0 0.0
  %2158 = vmatpush1.msra.mxu0 %v2125
  %2159 = vmatprep.subr.mxu0 0.0
  %2160 = vmatpush2.msra.mxu0 0.0
  %2161 = vmatprep.subr.mxu0 0.0
  %2162 = vmatpush2.msra.mxu0 0.0
  %2163 = vmatprep.subr.mxu0 0.0
  %2164 = vmatpush2.msra.mxu0 0.0
  %2165 = vmatprep.subr.mxu0 0.0
  %2166 = vmatpush2.msra.mxu0 0.0
  %2167 = vmatprep.subr.mxu0 0.0
  %2168 = vmatpush2.msra.mxu0 0.0
  %2169 = vmatprep.subr.mxu0 0.0
  %2170 = vmatpush2.msra.mxu0 0.0
  %2171 = vmatprep.subr.mxu0 0.0
  %2172 = vmatpush2.msra.mxu0 0.0
  %2173 = vmatprep.subr.mxu0 0.0
  %2174 = vmatpush2.msra.mxu0 0.0
  %2175 = vmatprep.subr.mxu0 0.0
  %2176 = vmatpush2.msra.mxu0 0.0
  %2177 = vmatprep.subr.mxu0 0.0
  %2178 = vmatpush2.msra.mxu0 0.0
  %2179 = vmatprep.subr.mxu0 0.0
  %2180 = vmatpush2.msra.mxu0 0.0
  %2181 = vmatprep.subr.mxu0 0.0
  %2182 = vmatpush2.msra.mxu0 0.0
  %2183 = vmatprep.subr.mxu0 0.0
  %2184 = vmatpush2.msra.mxu0 0.0
  %2185 = vmatprep.subr.mxu0 0.0
  %2186 = vmatpush2.msra.mxu0 0.0
  %2187 = vmatprep.subr.mxu0 0.0
  %2188 = vmatpush2.msra.mxu0 0.0
  %2189 = vmatprep.subr.mxu0 0.0
  %2190 = vmatpush2.msra.mxu0 0.0
  %2191 = vmatprep.mubr.f32.mxu0 0.0
  %2192 = vmatmul.mubr.f32.gmra.mxu0 %v503
  %v2193 = vpop.f32.mrf.mxu0
  %v2194 = vadd.f32 0.0, %v2193
  %v2195 = vpop.f32.mrf.mxu0
  %2196 = vmatprep.mubr.f32.mxu0 0.0
  %2197 = vmatmul.mubr.f32.gmra.mxu0 %v506
  %v2198 = vpop.f32.mrf.mxu0
  %v2199 = vadd.f32 0.0, %v2198
  %v2200 = vpop.f32.mrf.mxu0
  %2201 = vdwg.mxu0
  %s2202 = scalar_lea.vmem %s39, 32
  %v2203 = vld [vmem:[%s2202] sm:$0xff]
  %v2204 = vld [vmem:[%s2202 + $0x8] sm:$0xff]
  %v2205 = vld [vmem:[%s2202 + $0x10] sm:$0xff]
  %v2206 = vld [vmem:[%s2202 + $0x18] sm:$0xff]
  %s2207 = scalar_lea.vmem %s41, 1
  %v2208 = vld [vmem:[%s2207] sm:$0x1]
  %v2210 = vlaneseq
  %v2211 = vshrl.u32 %v2210, 7
  %v2212 = vsub.s32 0, %v2211
  %v2213 = vrot.slane %v2208, %v2212
  %v2216 = vsel %vm247, %v2194, 0
  %v2219 = vsel %vm247, %v2199, 0
  %2221 = vmatprep.subr.mxu0 0.0
  %2222 = vmatpush1.msra.mxu0 0.0
  %2223 = vmatprep.subr.mxu0 0.0
  %2224 = vmatpush1.msra.mxu0 0.0
  %2225 = vmatprep.subr.mxu0 0.0
  %2226 = vmatpush1.msra.mxu0 0.0
  %2227 = vmatprep.subr.mxu0 0.0
  %2228 = vmatpush1.msra.mxu0 0.0
  %2229 = vmatprep.subr.mxu0 0.0
  %2230 = vmatpush1.msra.mxu0 0.0
  %2231 = vmatprep.subr.mxu0 0.0
  %2232 = vmatpush1.msra.mxu0 0.0
  %2233 = vmatprep.subr.mxu0 0.0
  %2234 = vmatpush1.msra.mxu0 0.0
  %2235 = vmatprep.subr.mxu0 0.0
  %2236 = vmatpush1.msra.mxu0 0.0
  %2237 = vmatprep.subr.mxu0 0.0
  %2238 = vmatpush1.msra.mxu0 0.0
  %2239 = vmatprep.subr.mxu0 0.0
  %2240 = vmatpush1.msra.mxu0 0.0
  %2241 = vmatprep.subr.mxu0 0.0
  %2242 = vmatpush1.msra.mxu0 0.0
  %2243 = vmatprep.subr.mxu0 0.0
  %2244 = vmatpush1.msra.mxu0 0.0
  %2245 = vmatprep.subr.mxu0 0.0
  %2246 = vmatpush1.msra.mxu0 %v2206
  %2247 = vmatprep.subr.mxu0 0.0
  %2248 = vmatpush1.msra.mxu0 %v2205
  %2249 = vmatprep.subr.mxu0 0.0
  %2250 = vmatpush1.msra.mxu0 %v2204
  %2251 = vmatprep.subr.mxu0 0.0
  %2252 = vmatpush1.msra.mxu0 %v2203
  %2253 = vmatprep.subr.mxu0 0.0
  %2254 = vmatpush2.msra.mxu0 0.0
  %2255 = vmatprep.subr.mxu0 0.0
  %2256 = vmatpush2.msra.mxu0 0.0
  %2257 = vmatprep.subr.mxu0 0.0
  %2258 = vmatpush2.msra.mxu0 0.0
  %2259 = vmatprep.subr.mxu0 0.0
  %2260 = vmatpush2.msra.mxu0 0.0
  %2261 = vmatprep.subr.mxu0 0.0
  %2262 = vmatpush2.msra.mxu0 0.0
  %2263 = vmatprep.subr.mxu0 0.0
  %2264 = vmatpush2.msra.mxu0 0.0
  %2265 = vmatprep.subr.mxu0 0.0
  %2266 = vmatpush2.msra.mxu0 0.0
  %2267 = vmatprep.subr.mxu0 0.0
  %2268 = vmatpush2.msra.mxu0 0.0
  %2269 = vmatprep.subr.mxu0 0.0
  %2270 = vmatpush2.msra.mxu0 0.0
  %2271 = vmatprep.subr.mxu0 0.0
  %2272 = vmatpush2.msra.mxu0 0.0
  %2273 = vmatprep.subr.mxu0 0.0
  %2274 = vmatpush2.msra.mxu0 0.0
  %2275 = vmatprep.subr.mxu0 0.0
  %2276 = vmatpush2.msra.mxu0 0.0
  %2277 = vmatprep.subr.mxu0 0.0
  %2278 = vmatpush2.msra.mxu0 0.0
  %2279 = vmatprep.subr.mxu0 0.0
  %2280 = vmatpush2.msra.mxu0 0.0
  %2281 = vmatprep.subr.mxu0 0.0
  %2282 = vmatpush2.msra.mxu0 0.0
  %2283 = vmatprep.subr.mxu0 0.0
  %2284 = vmatpush2.msra.mxu0 0.0
  %2285 = vmatprep.mubr.f32.mxu0 0.0
  %2286 = vmatmul.mubr.f32.gmra.mxu0 %v2216
  %v2287 = vpop.f32.mrf.mxu0
  %v2288 = vadd.f32 %v2213, %v2287
  %v2289 = vpop.f32.mrf.mxu0
  %2290 = vmatprep.mubr.f32.mxu0 0.0
  %2291 = vmatmul.mubr.f32.gmra.mxu0 %v2219
  %v2292 = vpop.f32.mrf.mxu0
  %v2293 = vadd.f32 %v2213, %v2292
  %v2294 = vpop.f32.mrf.mxu0
  %2295 = vdwg.mxu0
  %v2296 = vmax.f32 %v2288, 0.0
  %v2297 = vmax.f32 %v2293, 0.0
  %v2298 = vld [vmem:[%s43] sm:$0xff]
  %v2299 = vld [vmem:[%s43 + $0x8] sm:$0xff]
  %v2300 = vld [vmem:[%s43 + $0x10] sm:$0xff]
  %v2301 = vld [vmem:[%s43 + $0x18] sm:$0xff]
  %v2302 = vld [vmem:[%s45] sm:$0x1]
  %v2303 = vld [vmem:[%s47] sm:$0xff]
  %v2304 = vld [vmem:[%s47 + $0x8] sm:$0xff]
  %v2305 = vld [vmem:[%s47 + $0x10] sm:$0xff]
  %v2306 = vld [vmem:[%s47 + $0x18] sm:$0xff]
  %v2307 = vld [vmem:[%s49] sm:$0x1]
  %v2309 = vlaneseq
  %v2310 = vshrl.u32 %v2309, 7
  %v2311 = vsub.s32 0, %v2310
  %v2312 = vrot.slane %v2302, %v2311
  %v2315 = vsel %vm247, %v2296, 0
  %v2318 = vsel %vm247, %v2297, 0
  %2320 = vmatprep.subr.mxu0 0.0
  %2321 = vmatpush1.msra.mxu0 0.0
  %2322 = vmatprep.subr.mxu0 0.0
  %2323 = vmatpush1.msra.mxu0 0.0
  %2324 = vmatprep.subr.mxu0 0.0
  %2325 = vmatpush1.msra.mxu0 0.0
  %2326 = vmatprep.subr.mxu0 0.0
  %2327 = vmatpush1.msra.mxu0 0.0
  %2328 = vmatprep.subr.mxu0 0.0
  %2329 = vmatpush1.msra.mxu0 0.0
  %2330 = vmatprep.subr.mxu0 0.0
  %2331 = vmatpush1.msra.mxu0 0.0
  %2332 = vmatprep.subr.mxu0 0.0
  %2333 = vmatpush1.msra.mxu0 0.0
  %2334 = vmatprep.subr.mxu0 0.0
  %2335 = vmatpush1.msra.mxu0 0.0
  %2336 = vmatprep.subr.mxu0 0.0
  %2337 = vmatpush1.msra.mxu0 0.0
  %2338 = vmatprep.subr.mxu0 0.0
  %2339 = vmatpush1.msra.mxu0 0.0
  %2340 = vmatprep.subr.mxu0 0.0
  %2341 = vmatpush1.msra.mxu0 0.0
  %2342 = vmatprep.subr.mxu0 0.0
  %2343 = vmatpush1.msra.mxu0 0.0
  %2344 = vmatprep.subr.mxu0 0.0
  %2345 = vmatpush1.msra.mxu0 %v2301
  %2346 = vmatprep.subr.mxu0 0.0
  %2347 = vmatpush1.msra.mxu0 %v2300
  %2348 = vmatprep.subr.mxu0 0.0
  %2349 = vmatpush1.msra.mxu0 %v2299
  %2350 = vmatprep.subr.mxu0 0.0
  %2351 = vmatpush1.msra.mxu0 %v2298
  %2352 = vmatprep.subr.mxu0 0.0
  %2353 = vmatpush2.msra.mxu0 0.0
  %2354 = vmatprep.subr.mxu0 0.0
  %2355 = vmatpush2.msra.mxu0 0.0
  %2356 = vmatprep.subr.mxu0 0.0
  %2357 = vmatpush2.msra.mxu0 0.0
  %2358 = vmatprep.subr.mxu0 0.0
  %2359 = vmatpush2.msra.mxu0 0.0
  %2360 = vmatprep.subr.mxu0 0.0
  %2361 = vmatpush2.msra.mxu0 0.0
  %2362 = vmatprep.subr.mxu0 0.0
  %2363 = vmatpush2.msra.mxu0 0.0
  %2364 = vmatprep.subr.mxu0 0.0
  %2365 = vmatpush2.msra.mxu0 0.0
  %2366 = vmatprep.subr.mxu0 0.0
  %2367 = vmatpush2.msra.mxu0 0.0
  %2368 = vmatprep.subr.mxu0 0.0
  %2369 = vmatpush2.msra.mxu0 0.0
  %2370 = vmatprep.subr.mxu0 0.0
  %2371 = vmatpush2.msra.mxu0 0.0
  %2372 = vmatprep.subr.mxu0 0.0
  %2373 = vmatpush2.msra.mxu0 0.0
  %2374 = vmatprep.subr.mxu0 0.0
  %2375 = vmatpush2.msra.mxu0 0.0
  %2376 = vmatprep.subr.mxu0 0.0
  %2377 = vmatpush2.msra.mxu0 0.0
  %2378 = vmatprep.subr.mxu0 0.0
  %2379 = vmatpush2.msra.mxu0 0.0
  %2380 = vmatprep.subr.mxu0 0.0
  %2381 = vmatpush2.msra.mxu0 0.0
  %2382 = vmatprep.subr.mxu0 0.0
  %2383 = vmatpush2.msra.mxu0 0.0
  %2384 = vmatprep.mubr.f32.mxu0 0.0
  %2385 = vmatmul.mubr.f32.gmra.mxu0 %v2315
  %v2386 = vpop.f32.mrf.mxu0
  %v2387 = vadd.f32 %v2312, %v2386
  %v2388 = vpop.f32.mrf.mxu0
  %2389 = vmatprep.mubr.f32.mxu0 0.0
  %2390 = vmatmul.mubr.f32.gmra.mxu0 %v2318
  %v2391 = vpop.f32.mrf.mxu0
  %v2392 = vadd.f32 %v2312, %v2391
  %v2393 = vpop.f32.mrf.mxu0
  %2394 = vdwg.mxu0
  %v2396 = vrot.slane %v2392, 7
  %v2398 = vsel %vm220, %v2387, %v2396
  %v2400 = vlaneseq
  %v2401 = vshrl.u32 %v2400, 7
  %v2402 = vsub.s32 0, %v2401
  %v2403 = vrot.slane %v2307, %v2402
  %2405 = vmatprep.subr.mxu0 0.0
  %2406 = vmatpush1.msra.mxu0 0.0
  %2407 = vmatprep.subr.mxu0 0.0
  %2408 = vmatpush1.msra.mxu0 0.0
  %2409 = vmatprep.subr.mxu0 0.0
  %2410 = vmatpush1.msra.mxu0 0.0
  %2411 = vmatprep.subr.mxu0 0.0
  %2412 = vmatpush1.msra.mxu0 0.0
  %2413 = vmatprep.subr.mxu0 0.0
  %2414 = vmatpush1.msra.mxu0 0.0
  %2415 = vmatprep.subr.mxu0 0.0
  %2416 = vmatpush1.msra.mxu0 0.0
  %2417 = vmatprep.subr.mxu0 0.0
  %2418 = vmatpush1.msra.mxu0 0.0
  %2419 = vmatprep.subr.mxu0 0.0
  %2420 = vmatpush1.msra.mxu0 0.0
  %2421 = vmatprep.subr.mxu0 0.0
  %2422 = vmatpush1.msra.mxu0 0.0
  %2423 = vmatprep.subr.mxu0 0.0
  %2424 = vmatpush1.msra.mxu0 0.0
  %2425 = vmatprep.subr.mxu0 0.0
  %2426 = vmatpush1.msra.mxu0 0.0
  %2427 = vmatprep.subr.mxu0 0.0
  %2428 = vmatpush1.msra.mxu0 0.0
  %2429 = vmatprep.subr.mxu0 0.0
  %2430 = vmatpush1.msra.mxu0 %v2306
  %2431 = vmatprep.subr.mxu0 0.0
  %2432 = vmatpush1.msra.mxu0 %v2305
  %2433 = vmatprep.subr.mxu0 0.0
  %2434 = vmatpush1.msra.mxu0 %v2304
  %2435 = vmatprep.subr.mxu0 0.0
  %2436 = vmatpush1.msra.mxu0 %v2303
  %2437 = vmatprep.subr.mxu0 0.0
  %2438 = vmatpush2.msra.mxu0 0.0
  %2439 = vmatprep.subr.mxu0 0.0
  %2440 = vmatpush2.msra.mxu0 0.0
  %2441 = vmatprep.subr.mxu0 0.0
  %2442 = vmatpush2.msra.mxu0 0.0
  %2443 = vmatprep.subr.mxu0 0.0
  %2444 = vmatpush2.msra.mxu0 0.0
  %2445 = vmatprep.subr.mxu0 0.0
  %2446 = vmatpush2.msra.mxu0 0.0
  %2447 = vmatprep.subr.mxu0 0.0
  %2448 = vmatpush2.msra.mxu0 0.0
  %2449 = vmatprep.subr.mxu0 0.0
  %2450 = vmatpush2.msra.mxu0 0.0
  %2451 = vmatprep.subr.mxu0 0.0
  %2452 = vmatpush2.msra.mxu0 0.0
  %2453 = vmatprep.subr.mxu0 0.0
  %2454 = vmatpush2.msra.mxu0 0.0
  %2455 = vmatprep.subr.mxu0 0.0
  %2456 = vmatpush2.msra.mxu0 0.0
  %2457 = vmatprep.subr.mxu0 0.0
  %2458 = vmatpush2.msra.mxu0 0.0
  %2459 = vmatprep.subr.mxu0 0.0
  %2460 = vmatpush2.msra.mxu0 0.0
  %2461 = vmatprep.subr.mxu0 0.0
  %2462 = vmatpush2.msra.mxu0 0.0
  %2463 = vmatprep.subr.mxu0 0.0
  %2464 = vmatpush2.msra.mxu0 0.0
  %2465 = vmatprep.subr.mxu0 0.0
  %2466 = vmatpush2.msra.mxu0 0.0
  %2467 = vmatprep.subr.mxu0 0.0
  %2468 = vmatpush2.msra.mxu0 0.0
  %2469 = vmatprep.mubr.f32.mxu0 0.0
  %2470 = vmatmul.mubr.f32.gmra.mxu0 %v956
  %v2471 = vpop.f32.mrf.mxu0
  %v2472 = vadd.f32 %v2403, %v2471
  %v2473 = vpop.f32.mrf.mxu0
  %2474 = vdwg.mxu0
  %v2475 = vadd.f32 %v2398, %v2472
  %v2476 = vxor.u32 %v2475, 2147483648
  %v2477 = vmul.f32 %v2476, 1.442695
  %v2478 = vpow.pop %v2477
  %v2479 = vadd.f32 %v2478, 1.0
  %v2480 = vrcp.pop %v2479
  %v2481 = vmul.f32 1.0, %v2480
  %2483 = vrot.lane.b32.xlu0 %v2472, 64
  %v2484 = vpop.permute.xlu0 %2483
  %v2486 = vmul.f32 %v2481, %v2484
  %2488 = vrot.lane.b32.xlu0 %v2486, 64
  %v2489 = vpop.permute.xlu0 %2488
  %v2491 = vadd.f32 %v2398, %v2489
  %v2492 = vtanh.pop %v2491
  %v2493 = vsub.f32 1.0, %v2481
  %2495 = vrot.lane.b32.xlu0 %v2492, 96
  %v2496 = vpop.permute.xlu0 %2495
  %v2498 = vmul.f32 %v2493, %v2496
  %v2499 = vmul.f32 %v2481, 0.0
  %v2500 = vadd.f32 %v2498, %v2499
  %v2502 = vrot.slane %v2387, 1
  %v2504 = vsel %vm220, %v2502, %v2392
  %2506 = vrot.lane.b32.xlu0 %v2500, 96
  %v2507 = vpop.permute.xlu0 %2506
  %v2508 = vsel %vm247, %v2507, 0
  %2510 = vmatprep.subr.mxu0 0.0
  %2511 = vmatpush1.msra.mxu0 0.0
  %2512 = vmatprep.subr.mxu0 0.0
  %2513 = vmatpush1.msra.mxu0 0.0
  %2514 = vmatprep.subr.mxu0 0.0
  %2515 = vmatpush1.msra.mxu0 0.0
  %2516 = vmatprep.subr.mxu0 0.0
  %2517 = vmatpush1.msra.mxu0 0.0
  %2518 = vmatprep.subr.mxu0 0.0
  %2519 = vmatpush1.msra.mxu0 0.0
  %2520 = vmatprep.subr.mxu0 0.0
  %2521 = vmatpush1.msra.mxu0 0.0
  %2522 = vmatprep.subr.mxu0 0.0
  %2523 = vmatpush1.msra.mxu0 0.0
  %2524 = vmatprep.subr.mxu0 0.0
  %2525 = vmatpush1.msra.mxu0 0.0
  %2526 = vmatprep.subr.mxu0 0.0
  %2527 = vmatpush1.msra.mxu0 0.0
  %2528 = vmatprep.subr.mxu0 0.0
  %2529 = vmatpush1.msra.mxu0 0.0
  %2530 = vmatprep.subr.mxu0 0.0
  %2531 = vmatpush1.msra.mxu0 0.0
  %2532 = vmatprep.subr.mxu0 0.0
  %2533 = vmatpush1.msra.mxu0 0.0
  %2534 = vmatprep.subr.mxu0 0.0
  %2535 = vmatpush1.msra.mxu0 %v2306
  %2536 = vmatprep.subr.mxu0 0.0
  %2537 = vmatpush1.msra.mxu0 %v2305
  %2538 = vmatprep.subr.mxu0 0.0
  %2539 = vmatpush1.msra.mxu0 %v2304
  %2540 = vmatprep.subr.mxu0 0.0
  %2541 = vmatpush1.msra.mxu0 %v2303
  %2542 = vmatprep.subr.mxu0 0.0
  %2543 = vmatpush2.msra.mxu0 0.0
  %2544 = vmatprep.subr.mxu0 0.0
  %2545 = vmatpush2.msra.mxu0 0.0
  %2546 = vmatprep.subr.mxu0 0.0
  %2547 = vmatpush2.msra.mxu0 0.0
  %2548 = vmatprep.subr.mxu0 0.0
  %2549 = vmatpush2.msra.mxu0 0.0
  %2550 = vmatprep.subr.mxu0 0.0
  %2551 = vmatpush2.msra.mxu0 0.0
  %2552 = vmatprep.subr.mxu0 0.0
  %2553 = vmatpush2.msra.mxu0 0.0
  %2554 = vmatprep.subr.mxu0 0.0
  %2555 = vmatpush2.msra.mxu0 0.0
  %2556 = vmatprep.subr.mxu0 0.0
  %2557 = vmatpush2.msra.mxu0 0.0
  %2558 = vmatprep.subr.mxu0 0.0
  %2559 = vmatpush2.msra.mxu0 0.0
  %2560 = vmatprep.subr.mxu0 0.0
  %2561 = vmatpush2.msra.mxu0 0.0
  %2562 = vmatprep.subr.mxu0 0.0
  %2563 = vmatpush2.msra.mxu0 0.0
  %2564 = vmatprep.subr.mxu0 0.0
  %2565 = vmatpush2.msra.mxu0 0.0
  %2566 = vmatprep.subr.mxu0 0.0
  %2567 = vmatpush2.msra.mxu0 0.0
  %2568 = vmatprep.subr.mxu0 0.0
  %2569 = vmatpush2.msra.mxu0 0.0
  %2570 = vmatprep.subr.mxu0 0.0
  %2571 = vmatpush2.msra.mxu0 0.0
  %2572 = vmatprep.subr.mxu0 0.0
  %2573 = vmatpush2.msra.mxu0 0.0
  %2574 = vmatprep.mubr.f32.mxu0 0.0
  %2575 = vmatmul.mubr.f32.gmra.mxu0 %v2508
  %v2576 = vpop.f32.mrf.mxu0
  %v2577 = vadd.f32 %v2403, %v2576
  %v2578 = vpop.f32.mrf.mxu0
  %2579 = vdwg.mxu0
  %v2580 = vadd.f32 %v2504, %v2577
  %v2581 = vxor.u32 %v2580, 2147483648
  %v2582 = vmul.f32 %v2581, 1.442695
  %v2583 = vpow.pop %v2582
  %v2584 = vadd.f32 %v2583, 1.0
  %v2585 = vrcp.pop %v2584
  %v2586 = vmul.f32 1.0, %v2585
  %2588 = vrot.lane.b32.xlu0 %v2577, 64
  %v2589 = vpop.permute.xlu0 %2588
  %v2591 = vmul.f32 %v2586, %v2589
  %2593 = vrot.lane.b32.xlu0 %v2591, 64
  %v2594 = vpop.permute.xlu0 %2593
  %v2596 = vadd.f32 %v2504, %v2594
  %v2597 = vtanh.pop %v2596
  %v2598 = vsub.f32 1.0, %v2586
  %2600 = vrot.lane.b32.xlu0 %v2597, 96
  %v2601 = vpop.permute.xlu0 %2600
  %v2603 = vmul.f32 %v2598, %v2601
  %v2604 = vmul.f32 %v2586, %v2500
  %v2605 = vadd.f32 %v2603, %v2604
  %v2606 = vrot.slane %v2387, 2
  %v2608 = vrot.slane %v2392, 1
  %v2610 = vsel %vm220, %v2606, %v2608
  %2612 = vrot.lane.b32.xlu0 %v2605, 96
  %v2613 = vpop.permute.xlu0 %2612
  %v2614 = vsel %vm247, %v2613, 0
  %2616 = vmatprep.subr.mxu0 0.0
  %2617 = vmatpush1.msra.mxu0 0.0
  %2618 = vmatprep.subr.mxu0 0.0
  %2619 = vmatpush1.msra.mxu0 0.0
  %2620 = vmatprep.subr.mxu0 0.0
  %2621 = vmatpush1.msra.mxu0 0.0
  %2622 = vmatprep.subr.mxu0 0.0
  %2623 = vmatpush1.msra.mxu0 0.0
  %2624 = vmatprep.subr.mxu0 0.0
  %2625 = vmatpush1.msra.mxu0 0.0
  %2626 = vmatprep.subr.mxu0 0.0
  %2627 = vmatpush1.msra.mxu0 0.0
  %2628 = vmatprep.subr.mxu0 0.0
  %2629 = vmatpush1.msra.mxu0 0.0
  %2630 = vmatprep.subr.mxu0 0.0
  %2631 = vmatpush1.msra.mxu0 0.0
  %2632 = vmatprep.subr.mxu0 0.0
  %2633 = vmatpush1.msra.mxu0 0.0
  %2634 = vmatprep.subr.mxu0 0.0
  %2635 = vmatpush1.msra.mxu0 0.0
  %2636 = vmatprep.subr.mxu0 0.0
  %2637 = vmatpush1.msra.mxu0 0.0
  %2638 = vmatprep.subr.mxu0 0.0
  %2639 = vmatpush1.msra.mxu0 0.0
  %2640 = vmatprep.subr.mxu0 0.0
  %2641 = vmatpush1.msra.mxu0 %v2306
  %2642 = vmatprep.subr.mxu0 0.0
  %2643 = vmatpush1.msra.mxu0 %v2305
  %2644 = vmatprep.subr.mxu0 0.0
  %2645 = vmatpush1.msra.mxu0 %v2304
  %2646 = vmatprep.subr.mxu0 0.0
  %2647 = vmatpush1.msra.mxu0 %v2303
  %2648 = vmatprep.subr.mxu0 0.0
  %2649 = vmatpush2.msra.mxu0 0.0
  %2650 = vmatprep.subr.mxu0 0.0
  %2651 = vmatpush2.msra.mxu0 0.0
  %2652 = vmatprep.subr.mxu0 0.0
  %2653 = vmatpush2.msra.mxu0 0.0
  %2654 = vmatprep.subr.mxu0 0.0
  %2655 = vmatpush2.msra.mxu0 0.0
  %2656 = vmatprep.subr.mxu0 0.0
  %2657 = vmatpush2.msra.mxu0 0.0
  %2658 = vmatprep.subr.mxu0 0.0
  %2659 = vmatpush2.msra.mxu0 0.0
  %2660 = vmatprep.subr.mxu0 0.0
  %2661 = vmatpush2.msra.mxu0 0.0
  %2662 = vmatprep.subr.mxu0 0.0
  %2663 = vmatpush2.msra.mxu0 0.0
  %2664 = vmatprep.subr.mxu0 0.0
  %2665 = vmatpush2.msra.mxu0 0.0
  %2666 = vmatprep.subr.mxu0 0.0
  %2667 = vmatpush2.msra.mxu0 0.0
  %2668 = vmatprep.subr.mxu0 0.0
  %2669 = vmatpush2.msra.mxu0 0.0
  %2670 = vmatprep.subr.mxu0 0.0
  %2671 = vmatpush2.msra.mxu0 0.0
  %2672 = vmatprep.subr.mxu0 0.0
  %2673 = vmatpush2.msra.mxu0 0.0
  %2674 = vmatprep.subr.mxu0 0.0
  %2675 = vmatpush2.msra.mxu0 0.0
  %2676 = vmatprep.subr.mxu0 0.0
  %2677 = vmatpush2.msra.mxu0 0.0
  %2678 = vmatprep.subr.mxu0 0.0
  %2679 = vmatpush2.msra.mxu0 0.0
  %2680 = vmatprep.mubr.f32.mxu0 0.0
  %2681 = vmatmul.mubr.f32.gmra.mxu0 %v2614
  %v2682 = vpop.f32.mrf.mxu0
  %v2683 = vadd.f32 %v2403, %v2682
  %v2684 = vpop.f32.mrf.mxu0
  %2685 = vdwg.mxu0
  %v2686 = vadd.f32 %v2610, %v2683
  %v2687 = vxor.u32 %v2686, 2147483648
  %v2688 = vmul.f32 %v2687, 1.442695
  %v2689 = vpow.pop %v2688
  %v2690 = vadd.f32 %v2689, 1.0
  %v2691 = vrcp.pop %v2690
  %v2692 = vmul.f32 1.0, %v2691
  %2694 = vrot.lane.b32.xlu0 %v2683, 64
  %v2695 = vpop.permute.xlu0 %2694
  %v2697 = vmul.f32 %v2692, %v2695
  %2699 = vrot.lane.b32.xlu0 %v2697, 64
  %v2700 = vpop.permute.xlu0 %2699
  %v2702 = vadd.f32 %v2610, %v2700
  %v2703 = vtanh.pop %v2702
  %v2704 = vsub.f32 1.0, %v2692
  %2706 = vrot.lane.b32.xlu0 %v2703, 96
  %v2707 = vpop.permute.xlu0 %2706
  %v2709 = vmul.f32 %v2704, %v2707
  %v2710 = vmul.f32 %v2692, %v2605
  %v2711 = vadd.f32 %v2709, %v2710
  %v2712 = vrot.slane %v2387, 3
  %v2714 = vrot.slane %v2392, 2
  %v2716 = vsel %vm220, %v2712, %v2714
  %2718 = vrot.lane.b32.xlu0 %v2711, 96
  %v2719 = vpop.permute.xlu0 %2718
  %v2720 = vsel %vm247, %v2719, 0
  %2722 = vmatprep.subr.mxu0 0.0
  %2723 = vmatpush1.msra.mxu0 0.0
  %2724 = vmatprep.subr.mxu0 0.0
  %2725 = vmatpush1.msra.mxu0 0.0
  %2726 = vmatprep.subr.mxu0 0.0
  %2727 = vmatpush1.msra.mxu0 0.0
  %2728 = vmatprep.subr.mxu0 0.0
  %2729 = vmatpush1.msra.mxu0 0.0
  %2730 = vmatprep.subr.mxu0 0.0
  %2731 = vmatpush1.msra.mxu0 0.0
  %2732 = vmatprep.subr.mxu0 0.0
  %2733 = vmatpush1.msra.mxu0 0.0
  %2734 = vmatprep.subr.mxu0 0.0
  %2735 = vmatpush1.msra.mxu0 0.0
  %2736 = vmatprep.subr.mxu0 0.0
  %2737 = vmatpush1.msra.mxu0 0.0
  %2738 = vmatprep.subr.mxu0 0.0
  %2739 = vmatpush1.msra.mxu0 0.0
  %2740 = vmatprep.subr.mxu0 0.0
  %2741 = vmatpush1.msra.mxu0 0.0
  %2742 = vmatprep.subr.mxu0 0.0
  %2743 = vmatpush1.msra.mxu0 0.0
  %2744 = vmatprep.subr.mxu0 0.0
  %2745 = vmatpush1.msra.mxu0 0.0
  %2746 = vmatprep.subr.mxu0 0.0
  %2747 = vmatpush1.msra.mxu0 %v2306
  %2748 = vmatprep.subr.mxu0 0.0
  %2749 = vmatpush1.msra.mxu0 %v2305
  %2750 = vmatprep.subr.mxu0 0.0
  %2751 = vmatpush1.msra.mxu0 %v2304
  %2752 = vmatprep.subr.mxu0 0.0
  %2753 = vmatpush1.msra.mxu0 %v2303
  %2754 = vmatprep.subr.mxu0 0.0
  %2755 = vmatpush2.msra.mxu0 0.0
  %2756 = vmatprep.subr.mxu0 0.0
  %2757 = vmatpush2.msra.mxu0 0.0
  %2758 = vmatprep.subr.mxu0 0.0
  %2759 = vmatpush2.msra.mxu0 0.0
  %2760 = vmatprep.subr.mxu0 0.0
  %2761 = vmatpush2.msra.mxu0 0.0
  %2762 = vmatprep.subr.mxu0 0.0
  %2763 = vmatpush2.msra.mxu0 0.0
  %2764 = vmatprep.subr.mxu0 0.0
  %2765 = vmatpush2.msra.mxu0 0.0
  %2766 = vmatprep.subr.mxu0 0.0
  %2767 = vmatpush2.msra.mxu0 0.0
  %2768 = vmatprep.subr.mxu0 0.0
  %2769 = vmatpush2.msra.mxu0 0.0
  %2770 = vmatprep.subr.mxu0 0.0
  %2771 = vmatpush2.msra.mxu0 0.0
  %2772 = vmatprep.subr.mxu0 0.0
  %2773 = vmatpush2.msra.mxu0 0.0
  %2774 = vmatprep.subr.mxu0 0.0
  %2775 = vmatpush2.msra.mxu0 0.0
  %2776 = vmatprep.subr.mxu0 0.0
  %2777 = vmatpush2.msra.mxu0 0.0
  %2778 = vmatprep.subr.mxu0 0.0
  %2779 = vmatpush2.msra.mxu0 0.0
  %2780 = vmatprep.subr.mxu0 0.0
  %2781 = vmatpush2.msra.mxu0 0.0
  %2782 = vmatprep.subr.mxu0 0.0
  %2783 = vmatpush2.msra.mxu0 0.0
  %2784 = vmatprep.subr.mxu0 0.0
  %2785 = vmatpush2.msra.mxu0 0.0
  %2786 = vmatprep.mubr.f32.mxu0 0.0
  %2787 = vmatmul.mubr.f32.gmra.mxu0 %v2720
  %v2788 = vpop.f32.mrf.mxu0
  %v2789 = vadd.f32 %v2403, %v2788
  %v2790 = vpop.f32.mrf.mxu0
  %2791 = vdwg.mxu0
  %v2792 = vadd.f32 %v2716, %v2789
  %v2793 = vxor.u32 %v2792, 2147483648
  %v2794 = vmul.f32 %v2793, 1.442695
  %v2795 = vpow.pop %v2794
  %v2796 = vadd.f32 %v2795, 1.0
  %v2797 = vrcp.pop %v2796
  %v2798 = vmul.f32 1.0, %v2797
  %2800 = vrot.lane.b32.xlu0 %v2789, 64
  %v2801 = vpop.permute.xlu0 %2800
  %v2803 = vmul.f32 %v2798, %v2801
  %2805 = vrot.lane.b32.xlu0 %v2803, 64
  %v2806 = vpop.permute.xlu0 %2805
  %v2808 = vadd.f32 %v2716, %v2806
  %v2809 = vtanh.pop %v2808
  %v2810 = vsub.f32 1.0, %v2798
  %2812 = vrot.lane.b32.xlu0 %v2809, 96
  %v2813 = vpop.permute.xlu0 %2812
  %v2815 = vmul.f32 %v2810, %v2813
  %v2816 = vmul.f32 %v2798, %v2711
  %v2817 = vadd.f32 %v2815, %v2816
  %v2818 = vrot.slane %v2387, 4
  %v2820 = vrot.slane %v2392, 3
  %v2822 = vsel %vm220, %v2818, %v2820
  %2824 = vrot.lane.b32.xlu0 %v2817, 96
  %v2825 = vpop.permute.xlu0 %2824
  %v2826 = vsel %vm247, %v2825, 0
  %2828 = vmatprep.subr.mxu0 0.0
  %2829 = vmatpush1.msra.mxu0 0.0
  %2830 = vmatprep.subr.mxu0 0.0
  %2831 = vmatpush1.msra.mxu0 0.0
  %2832 = vmatprep.subr.mxu0 0.0
  %2833 = vmatpush1.msra.mxu0 0.0
  %2834 = vmatprep.subr.mxu0 0.0
  %2835 = vmatpush1.msra.mxu0 0.0
  %2836 = vmatprep.subr.mxu0 0.0
  %2837 = vmatpush1.msra.mxu0 0.0
  %2838 = vmatprep.subr.mxu0 0.0
  %2839 = vmatpush1.msra.mxu0 0.0
  %2840 = vmatprep.subr.mxu0 0.0
  %2841 = vmatpush1.msra.mxu0 0.0
  %2842 = vmatprep.subr.mxu0 0.0
  %2843 = vmatpush1.msra.mxu0 0.0
  %2844 = vmatprep.subr.mxu0 0.0
  %2845 = vmatpush1.msra.mxu0 0.0
  %2846 = vmatprep.subr.mxu0 0.0
  %2847 = vmatpush1.msra.mxu0 0.0
  %2848 = vmatprep.subr.mxu0 0.0
  %2849 = vmatpush1.msra.mxu0 0.0
  %2850 = vmatprep.subr.mxu0 0.0
  %2851 = vmatpush1.msra.mxu0 0.0
  %2852 = vmatprep.subr.mxu0 0.0
  %2853 = vmatpush1.msra.mxu0 %v2306
  %2854 = vmatprep.subr.mxu0 0.0
  %2855 = vmatpush1.msra.mxu0 %v2305
  %2856 = vmatprep.subr.mxu0 0.0
  %2857 = vmatpush1.msra.mxu0 %v2304
  %2858 = vmatprep.subr.mxu0 0.0
  %2859 = vmatpush1.msra.mxu0 %v2303
  %2860 = vmatprep.subr.mxu0 0.0
  %2861 = vmatpush2.msra.mxu0 0.0
  %2862 = vmatprep.subr.mxu0 0.0
  %2863 = vmatpush2.msra.mxu0 0.0
  %2864 = vmatprep.subr.mxu0 0.0
  %2865 = vmatpush2.msra.mxu0 0.0
  %2866 = vmatprep.subr.mxu0 0.0
  %2867 = vmatpush2.msra.mxu0 0.0
  %2868 = vmatprep.subr.mxu0 0.0
  %2869 = vmatpush2.msra.mxu0 0.0
  %2870 = vmatprep.subr.mxu0 0.0
  %2871 = vmatpush2.msra.mxu0 0.0
  %2872 = vmatprep.subr.mxu0 0.0
  %2873 = vmatpush2.msra.mxu0 0.0
  %2874 = vmatprep.subr.mxu0 0.0
  %2875 = vmatpush2.msra.mxu0 0.0
  %2876 = vmatprep.subr.mxu0 0.0
  %2877 = vmatpush2.msra.mxu0 0.0
  %2878 = vmatprep.subr.mxu0 0.0
  %2879 = vmatpush2.msra.mxu0 0.0
  %2880 = vmatprep.subr.mxu0 0.0
  %2881 = vmatpush2.msra.mxu0 0.0
  %2882 = vmatprep.subr.mxu0 0.0
  %2883 = vmatpush2.msra.mxu0 0.0
  %2884 = vmatprep.subr.mxu0 0.0
  %2885 = vmatpush2.msra.mxu0 0.0
  %2886 = vmatprep.subr.mxu0 0.0
  %2887 = vmatpush2.msra.mxu0 0.0
  %2888 = vmatprep.subr.mxu0 0.0
  %2889 = vmatpush2.msra.mxu0 0.0
  %2890 = vmatprep.subr.mxu0 0.0
  %2891 = vmatpush2.msra.mxu0 0.0
  %2892 = vmatprep.mubr.f32.mxu0 0.0
  %2893 = vmatmul.mubr.f32.gmra.mxu0 %v2826
  %v2894 = vpop.f32.mrf.mxu0
  %v2895 = vadd.f32 %v2403, %v2894
  %v2896 = vpop.f32.mrf.mxu0
  %2897 = vdwg.mxu0
  %v2898 = vadd.f32 %v2822, %v2895
  %v2899 = vxor.u32 %v2898, 2147483648
  %v2900 = vmul.f32 %v2899, 1.442695
  %v2901 = vpow.pop %v2900
  %v2902 = vadd.f32 %v2901, 1.0
  %v2903 = vrcp.pop %v2902
  %v2904 = vmul.f32 1.0, %v2903
  %2906 = vrot.lane.b32.xlu0 %v2895, 64
  %v2907 = vpop.permute.xlu0 %2906
  %v2909 = vmul.f32 %v2904, %v2907
  %2911 = vrot.lane.b32.xlu0 %v2909, 64
  %v2912 = vpop.permute.xlu0 %2911
  %v2914 = vadd.f32 %v2822, %v2912
  %v2915 = vtanh.pop %v2914
  %v2916 = vsub.f32 1.0, %v2904
  %2918 = vrot.lane.b32.xlu0 %v2915, 96
  %v2919 = vpop.permute.xlu0 %2918
  %v2921 = vmul.f32 %v2916, %v2919
  %v2922 = vmul.f32 %v2904, %v2817
  %v2923 = vadd.f32 %v2921, %v2922
  %v2924 = vrot.slane %v2387, 5
  %v2926 = vrot.slane %v2392, 4
  %v2928 = vsel %vm220, %v2924, %v2926
  %2930 = vrot.lane.b32.xlu0 %v2923, 96
  %v2931 = vpop.permute.xlu0 %2930
  %v2932 = vsel %vm247, %v2931, 0
  %2934 = vmatprep.subr.mxu0 0.0
  %2935 = vmatpush1.msra.mxu0 0.0
  %2936 = vmatprep.subr.mxu0 0.0
  %2937 = vmatpush1.msra.mxu0 0.0
  %2938 = vmatprep.subr.mxu0 0.0
  %2939 = vmatpush1.msra.mxu0 0.0
  %2940 = vmatprep.subr.mxu0 0.0
  %2941 = vmatpush1.msra.mxu0 0.0
  %2942 = vmatprep.subr.mxu0 0.0
  %2943 = vmatpush1.msra.mxu0 0.0
  %2944 = vmatprep.subr.mxu0 0.0
  %2945 = vmatpush1.msra.mxu0 0.0
  %2946 = vmatprep.subr.mxu0 0.0
  %2947 = vmatpush1.msra.mxu0 0.0
  %2948 = vmatprep.subr.mxu0 0.0
  %2949 = vmatpush1.msra.mxu0 0.0
  %2950 = vmatprep.subr.mxu0 0.0
  %2951 = vmatpush1.msra.mxu0 0.0
  %2952 = vmatprep.subr.mxu0 0.0
  %2953 = vmatpush1.msra.mxu0 0.0
  %2954 = vmatprep.subr.mxu0 0.0
  %2955 = vmatpush1.msra.mxu0 0.0
  %2956 = vmatprep.subr.mxu0 0.0
  %2957 = vmatpush1.msra.mxu0 0.0
  %2958 = vmatprep.subr.mxu0 0.0
  %2959 = vmatpush1.msra.mxu0 %v2306
  %2960 = vmatprep.subr.mxu0 0.0
  %2961 = vmatpush1.msra.mxu0 %v2305
  %2962 = vmatprep.subr.mxu0 0.0
  %2963 = vmatpush1.msra.mxu0 %v2304
  %2964 = vmatprep.subr.mxu0 0.0
  %2965 = vmatpush1.msra.mxu0 %v2303
  %2966 = vmatprep.subr.mxu0 0.0
  %2967 = vmatpush2.msra.mxu0 0.0
  %2968 = vmatprep.subr.mxu0 0.0
  %2969 = vmatpush2.msra.mxu0 0.0
  %2970 = vmatprep.subr.mxu0 0.0
  %2971 = vmatpush2.msra.mxu0 0.0
  %2972 = vmatprep.subr.mxu0 0.0
  %2973 = vmatpush2.msra.mxu0 0.0
  %2974 = vmatprep.subr.mxu0 0.0
  %2975 = vmatpush2.msra.mxu0 0.0
  %2976 = vmatprep.subr.mxu0 0.0
  %2977 = vmatpush2.msra.mxu0 0.0
  %2978 = vmatprep.subr.mxu0 0.0
  %2979 = vmatpush2.msra.mxu0 0.0
  %2980 = vmatprep.subr.mxu0 0.0
  %2981 = vmatpush2.msra.mxu0 0.0
  %2982 = vmatprep.subr.mxu0 0.0
  %2983 = vmatpush2.msra.mxu0 0.0
  %2984 = vmatprep.subr.mxu0 0.0
  %2985 = vmatpush2.msra.mxu0 0.0
  %2986 = vmatprep.subr.mxu0 0.0
  %2987 = vmatpush2.msra.mxu0 0.0
  %2988 = vmatprep.subr.mxu0 0.0
  %2989 = vmatpush2.msra.mxu0 0.0
  %2990 = vmatprep.subr.mxu0 0.0
  %2991 = vmatpush2.msra.mxu0 0.0
  %2992 = vmatprep.subr.mxu0 0.0
  %2993 = vmatpush2.msra.mxu0 0.0
  %2994 = vmatprep.subr.mxu0 0.0
  %2995 = vmatpush2.msra.mxu0 0.0
  %2996 = vmatprep.subr.mxu0 0.0
  %2997 = vmatpush2.msra.mxu0 0.0
  %2998 = vmatprep.mubr.f32.mxu0 0.0
  %2999 = vmatmul.mubr.f32.gmra.mxu0 %v2932
  %v3000 = vpop.f32.mrf.mxu0
  %v3001 = vadd.f32 %v2403, %v3000
  %v3002 = vpop.f32.mrf.mxu0
  %3003 = vdwg.mxu0
  %v3004 = vadd.f32 %v2928, %v3001
  %v3005 = vxor.u32 %v3004, 2147483648
  %v3006 = vmul.f32 %v3005, 1.442695
  %v3007 = vpow.pop %v3006
  %v3008 = vadd.f32 %v3007, 1.0
  %v3009 = vrcp.pop %v3008
  %v3010 = vmul.f32 1.0, %v3009
  %3012 = vrot.lane.b32.xlu0 %v3001, 64
  %v3013 = vpop.permute.xlu0 %3012
  %v3015 = vmul.f32 %v3010, %v3013
  %3017 = vrot.lane.b32.xlu0 %v3015, 64
  %v3018 = vpop.permute.xlu0 %3017
  %v3020 = vadd.f32 %v2928, %v3018
  %v3021 = vtanh.pop %v3020
  %v3022 = vsub.f32 1.0, %v3010
  %3024 = vrot.lane.b32.xlu0 %v3021, 96
  %v3025 = vpop.permute.xlu0 %3024
  %v3027 = vmul.f32 %v3022, %v3025
  %v3028 = vmul.f32 %v3010, %v2923
  %v3029 = vadd.f32 %v3027, %v3028
  %v3030 = vrot.slane %v2387, 6
  %v3032 = vrot.slane %v2392, 5
  %v3034 = vsel %vm220, %v3030, %v3032
  %3036 = vrot.lane.b32.xlu0 %v3029, 96
  %v3037 = vpop.permute.xlu0 %3036
  %v3038 = vsel %vm247, %v3037, 0
  %3040 = vmatprep.subr.mxu0 0.0
  %3041 = vmatpush1.msra.mxu0 0.0
  %3042 = vmatprep.subr.mxu0 0.0
  %3043 = vmatpush1.msra.mxu0 0.0
  %3044 = vmatprep.subr.mxu0 0.0
  %3045 = vmatpush1.msra.mxu0 0.0
  %3046 = vmatprep.subr.mxu0 0.0
  %3047 = vmatpush1.msra.mxu0 0.0
  %3048 = vmatprep.subr.mxu0 0.0
  %3049 = vmatpush1.msra.mxu0 0.0
  %3050 = vmatprep.subr.mxu0 0.0
  %3051 = vmatpush1.msra.mxu0 0.0
  %3052 = vmatprep.subr.mxu0 0.0
  %3053 = vmatpush1.msra.mxu0 0.0
  %3054 = vmatprep.subr.mxu0 0.0
  %3055 = vmatpush1.msra.mxu0 0.0
  %3056 = vmatprep.subr.mxu0 0.0
  %3057 = vmatpush1.msra.mxu0 0.0
  %3058 = vmatprep.subr.mxu0 0.0
  %3059 = vmatpush1.msra.mxu0 0.0
  %3060 = vmatprep.subr.mxu0 0.0
  %3061 = vmatpush1.msra.mxu0 0.0
  %3062 = vmatprep.subr.mxu0 0.0
  %3063 = vmatpush1.msra.mxu0 0.0
  %3064 = vmatprep.subr.mxu0 0.0
  %3065 = vmatpush1.msra.mxu0 %v2306
  %3066 = vmatprep.subr.mxu0 0.0
  %3067 = vmatpush1.msra.mxu0 %v2305
  %3068 = vmatprep.subr.mxu0 0.0
  %3069 = vmatpush1.msra.mxu0 %v2304
  %3070 = vmatprep.subr.mxu0 0.0
  %3071 = vmatpush1.msra.mxu0 %v2303
  %3072 = vmatprep.subr.mxu0 0.0
  %3073 = vmatpush2.msra.mxu0 0.0
  %3074 = vmatprep.subr.mxu0 0.0
  %3075 = vmatpush2.msra.mxu0 0.0
  %3076 = vmatprep.subr.mxu0 0.0
  %3077 = vmatpush2.msra.mxu0 0.0
  %3078 = vmatprep.subr.mxu0 0.0
  %3079 = vmatpush2.msra.mxu0 0.0
  %3080 = vmatprep.subr.mxu0 0.0
  %3081 = vmatpush2.msra.mxu0 0.0
  %3082 = vmatprep.subr.mxu0 0.0
  %3083 = vmatpush2.msra.mxu0 0.0
  %3084 = vmatprep.subr.mxu0 0.0
  %3085 = vmatpush2.msra.mxu0 0.0
  %3086 = vmatprep.subr.mxu0 0.0
  %3087 = vmatpush2.msra.mxu0 0.0
  %3088 = vmatprep.subr.mxu0 0.0
  %3089 = vmatpush2.msra.mxu0 0.0
  %3090 = vmatprep.subr.mxu0 0.0
  %3091 = vmatpush2.msra.mxu0 0.0
  %3092 = vmatprep.subr.mxu0 0.0
  %3093 = vmatpush2.msra.mxu0 0.0
  %3094 = vmatprep.subr.mxu0 0.0
  %3095 = vmatpush2.msra.mxu0 0.0
  %3096 = vmatprep.subr.mxu0 0.0
  %3097 = vmatpush2.msra.mxu0 0.0
  %3098 = vmatprep.subr.mxu0 0.0
  %3099 = vmatpush2.msra.mxu0 0.0
  %3100 = vmatprep.subr.mxu0 0.0
  %3101 = vmatpush2.msra.mxu0 0.0
  %3102 = vmatprep.subr.mxu0 0.0
  %3103 = vmatpush2.msra.mxu0 0.0
  %3104 = vmatprep.mubr.f32.mxu0 0.0
  %3105 = vmatmul.mubr.f32.gmra.mxu0 %v3038
  %v3106 = vpop.f32.mrf.mxu0
  %v3107 = vadd.f32 %v2403, %v3106
  %v3108 = vpop.f32.mrf.mxu0
  %3109 = vdwg.mxu0
  %v3110 = vadd.f32 %v3034, %v3107
  %v3111 = vxor.u32 %v3110, 2147483648
  %v3112 = vmul.f32 %v3111, 1.442695
  %v3113 = vpow.pop %v3112
  %v3114 = vadd.f32 %v3113, 1.0
  %v3115 = vrcp.pop %v3114
  %v3116 = vmul.f32 1.0, %v3115
  %3118 = vrot.lane.b32.xlu0 %v3107, 64
  %v3119 = vpop.permute.xlu0 %3118
  %v3121 = vmul.f32 %v3116, %v3119
  %3123 = vrot.lane.b32.xlu0 %v3121, 64
  %v3124 = vpop.permute.xlu0 %3123
  %v3126 = vadd.f32 %v3034, %v3124
  %v3127 = vtanh.pop %v3126
  %v3128 = vsub.f32 1.0, %v3116
  %3130 = vrot.lane.b32.xlu0 %v3127, 96
  %v3131 = vpop.permute.xlu0 %3130
  %v3133 = vmul.f32 %v3128, %v3131
  %v3134 = vmul.f32 %v3116, %v3029
  %v3135 = vadd.f32 %v3133, %v3134
  %v3136 = vrot.slane %v2387, 7
  %v3138 = vrot.slane %v2392, 6
  %v3140 = vsel %vm220, %v3136, %v3138
  %3142 = vrot.lane.b32.xlu0 %v3135, 96
  %v3143 = vpop.permute.xlu0 %3142
  %v3144 = vsel %vm247, %v3143, 0
  %3146 = vmatprep.subr.mxu0 0.0
  %3147 = vmatpush1.msra.mxu0 0.0
  %3148 = vmatprep.subr.mxu0 0.0
  %3149 = vmatpush1.msra.mxu0 0.0
  %3150 = vmatprep.subr.mxu0 0.0
  %3151 = vmatpush1.msra.mxu0 0.0
  %3152 = vmatprep.subr.mxu0 0.0
  %3153 = vmatpush1.msra.mxu0 0.0
  %3154 = vmatprep.subr.mxu0 0.0
  %3155 = vmatpush1.msra.mxu0 0.0
  %3156 = vmatprep.subr.mxu0 0.0
  %3157 = vmatpush1.msra.mxu0 0.0
  %3158 = vmatprep.subr.mxu0 0.0
  %3159 = vmatpush1.msra.mxu0 0.0
  %3160 = vmatprep.subr.mxu0 0.0
  %3161 = vmatpush1.msra.mxu0 0.0
  %3162 = vmatprep.subr.mxu0 0.0
  %3163 = vmatpush1.msra.mxu0 0.0
  %3164 = vmatprep.subr.mxu0 0.0
  %3165 = vmatpush1.msra.mxu0 0.0
  %3166 = vmatprep.subr.mxu0 0.0
  %3167 = vmatpush1.msra.mxu0 0.0
  %3168 = vmatprep.subr.mxu0 0.0
  %3169 = vmatpush1.msra.mxu0 0.0
  %3170 = vmatprep.subr.mxu0 0.0
  %3171 = vmatpush1.msra.mxu0 %v2306
  %3172 = vmatprep.subr.mxu0 0.0
  %3173 = vmatpush1.msra.mxu0 %v2305
  %3174 = vmatprep.subr.mxu0 0.0
  %3175 = vmatpush1.msra.mxu0 %v2304
  %3176 = vmatprep.subr.mxu0 0.0
  %3177 = vmatpush1.msra.mxu0 %v2303
  %3178 = vmatprep.subr.mxu0 0.0
  %3179 = vmatpush2.msra.mxu0 0.0
  %3180 = vmatprep.subr.mxu0 0.0
  %3181 = vmatpush2.msra.mxu0 0.0
  %3182 = vmatprep.subr.mxu0 0.0
  %3183 = vmatpush2.msra.mxu0 0.0
  %3184 = vmatprep.subr.mxu0 0.0
  %3185 = vmatpush2.msra.mxu0 0.0
  %3186 = vmatprep.subr.mxu0 0.0
  %3187 = vmatpush2.msra.mxu0 0.0
  %3188 = vmatprep.subr.mxu0 0.0
  %3189 = vmatpush2.msra.mxu0 0.0
  %3190 = vmatprep.subr.mxu0 0.0
  %3191 = vmatpush2.msra.mxu0 0.0
  %3192 = vmatprep.subr.mxu0 0.0
  %3193 = vmatpush2.msra.mxu0 0.0
  %3194 = vmatprep.subr.mxu0 0.0
  %3195 = vmatpush2.msra.mxu0 0.0
  %3196 = vmatprep.subr.mxu0 0.0
  %3197 = vmatpush2.msra.mxu0 0.0
  %3198 = vmatprep.subr.mxu0 0.0
  %3199 = vmatpush2.msra.mxu0 0.0
  %3200 = vmatprep.subr.mxu0 0.0
  %3201 = vmatpush2.msra.mxu0 0.0
  %3202 = vmatprep.subr.mxu0 0.0
  %3203 = vmatpush2.msra.mxu0 0.0
  %3204 = vmatprep.subr.mxu0 0.0
  %3205 = vmatpush2.msra.mxu0 0.0
  %3206 = vmatprep.subr.mxu0 0.0
  %3207 = vmatpush2.msra.mxu0 0.0
  %3208 = vmatprep.subr.mxu0 0.0
  %3209 = vmatpush2.msra.mxu0 0.0
  %3210 = vmatprep.mubr.f32.mxu0 0.0
  %3211 = vmatmul.mubr.f32.gmra.mxu0 %v3144
  %v3212 = vpop.f32.mrf.mxu0
  %v3213 = vadd.f32 %v2403, %v3212
  %v3214 = vpop.f32.mrf.mxu0
  %3215 = vdwg.mxu0
  %v3216 = vadd.f32 %v3140, %v3213
  %v3217 = vxor.u32 %v3216, 2147483648
  %v3218 = vmul.f32 %v3217, 1.442695
  %v3219 = vpow.pop %v3218
  %v3220 = vadd.f32 %v3219, 1.0
  %v3221 = vrcp.pop %v3220
  %v3222 = vmul.f32 1.0, %v3221
  %3224 = vrot.lane.b32.xlu0 %v3213, 64
  %v3225 = vpop.permute.xlu0 %3224
  %v3227 = vmul.f32 %v3222, %v3225
  %3229 = vrot.lane.b32.xlu0 %v3227, 64
  %v3230 = vpop.permute.xlu0 %3229
  %v3232 = vadd.f32 %v3140, %v3230
  %v3233 = vtanh.pop %v3232
  %v3234 = vsub.f32 1.0, %v3222
  %3236 = vrot.lane.b32.xlu0 %v3233, 96
  %v3237 = vpop.permute.xlu0 %3236
  %v3239 = vmul.f32 %v3234, %v3237
  %v3240 = vmul.f32 %v3222, %v3135
  %v3241 = vadd.f32 %v3239, %v3240
  %v3242 = vrot.slane %v2605, 7
  %v3244 = vrot.slane %v2711, 6
  %v3246 = vrot.slane %v2817, 5
  %v3248 = vrot.slane %v2923, 4
  %v3250 = vrot.slane %v3029, 3
  %v3252 = vrot.slane %v3135, 2
  %v3255 = vrot.slane %v3241, 1
  %v3257 = vsel %vm220, %v2500, %v3242
  %v3258 = vsel %vm1811, %v3257, %v3244
  %v3259 = vsel %vm1813, %v3258, %v3246
  %v3260 = vsel %vm1815, %v3259, %v3248
  %v3261 = vsel %vm1817, %v3260, %v3250
  %v3262 = vsel %vm1819, %v3261, %v3252
  %v3263 = vsel %vm224, %v3262, %v3255
  %v3264 = vrot.slane %v2500, 1
  %v3266 = vrot.slane %v2711, 7
  %v3268 = vrot.slane %v2817, 6
  %v3270 = vrot.slane %v2923, 5
  %v3272 = vrot.slane %v3029, 4
  %v3274 = vrot.slane %v3135, 3
  %v3276 = vrot.slane %v3241, 2
  %v3278 = vsel %vm220, %v3264, %v2605
  %v3279 = vsel %vm1811, %v3278, %v3266
  %v3280 = vsel %vm1813, %v3279, %v3268
  %v3281 = vsel %vm1815, %v3280, %v3270
  %v3282 = vsel %vm1817, %v3281, %v3272
  %v3283 = vsel %vm1819, %v3282, %v3274
  %v3284 = vsel %vm224, %v3283, %v3276
  %v3285 = vld [vmem:[%s51] sm:$0xff]
  %v3286 = vld [vmem:[%s51 + $0x8] sm:$0xff]
  %v3287 = vld [vmem:[%s51 + $0x10] sm:$0xff]
  %v3288 = vld [vmem:[%s51 + $0x18] sm:$0xff]
  %v3289 = vld [vmem:[%s53] sm:$0x1]
  %v3291 = vlaneseq
  %v3292 = vshrl.u32 %v3291, 7
  %v3293 = vsub.s32 0, %v3292
  %v3294 = vrot.slane %v3289, %v3293
  %3298 = vrot.lane.b32.xlu0 %v3263, 96
  %v3299 = vpop.permute.xlu0 %3298
  %3300 = vrot.lane.b32.xlu0 %v3284, 96
  %v3301 = vpop.permute.xlu0 %3300
  %v3302 = vsel %vm247, %v3299, 0
  %v3304 = vsel %vm247, %v3301, 0
  %3306 = vmatprep.subr.mxu0 0.0
  %3307 = vmatpush1.msra.mxu0 0.0
  %3308 = vmatprep.subr.mxu0 0.0
  %3309 = vmatpush1.msra.mxu0 0.0
  %3310 = vmatprep.subr.mxu0 0.0
  %3311 = vmatpush1.msra.mxu0 0.0
  %3312 = vmatprep.subr.mxu0 0.0
  %3313 = vmatpush1.msra.mxu0 0.0
  %3314 = vmatprep.subr.mxu0 0.0
  %3315 = vmatpush1.msra.mxu0 0.0
  %3316 = vmatprep.subr.mxu0 0.0
  %3317 = vmatpush1.msra.mxu0 0.0
  %3318 = vmatprep.subr.mxu0 0.0
  %3319 = vmatpush1.msra.mxu0 0.0
  %3320 = vmatprep.subr.mxu0 0.0
  %3321 = vmatpush1.msra.mxu0 0.0
  %3322 = vmatprep.subr.mxu0 0.0
  %3323 = vmatpush1.msra.mxu0 0.0
  %3324 = vmatprep.subr.mxu0 0.0
  %3325 = vmatpush1.msra.mxu0 0.0
  %3326 = vmatprep.subr.mxu0 0.0
  %3327 = vmatpush1.msra.mxu0 0.0
  %3328 = vmatprep.subr.mxu0 0.0
  %3329 = vmatpush1.msra.mxu0 0.0
  %3330 = vmatprep.subr.mxu0 0.0
  %3331 = vmatpush1.msra.mxu0 %v3288
  %3332 = vmatprep.subr.mxu0 0.0
  %3333 = vmatpush1.msra.mxu0 %v3287
  %3334 = vmatprep.subr.mxu0 0.0
  %3335 = vmatpush1.msra.mxu0 %v3286
  %3336 = vmatprep.subr.mxu0 0.0
  %3337 = vmatpush1.msra.mxu0 %v3285
  %3338 = vmatprep.subr.mxu0 0.0
  %3339 = vmatpush2.msra.mxu0 0.0
  %3340 = vmatprep.subr.mxu0 0.0
  %3341 = vmatpush2.msra.mxu0 0.0
  %3342 = vmatprep.subr.mxu0 0.0
  %3343 = vmatpush2.msra.mxu0 0.0
  %3344 = vmatprep.subr.mxu0 0.0
  %3345 = vmatpush2.msra.mxu0 0.0
  %3346 = vmatprep.subr.mxu0 0.0
  %3347 = vmatpush2.msra.mxu0 0.0
  %3348 = vmatprep.subr.mxu0 0.0
  %3349 = vmatpush2.msra.mxu0 0.0
  %3350 = vmatprep.subr.mxu0 0.0
  %3351 = vmatpush2.msra.mxu0 0.0
  %3352 = vmatprep.subr.mxu0 0.0
  %3353 = vmatpush2.msra.mxu0 0.0
  %3354 = vmatprep.subr.mxu0 0.0
  %3355 = vmatpush2.msra.mxu0 0.0
  %3356 = vmatprep.subr.mxu0 0.0
  %3357 = vmatpush2.msra.mxu0 0.0
  %3358 = vmatprep.subr.mxu0 0.0
  %3359 = vmatpush2.msra.mxu0 0.0
  %3360 = vmatprep.subr.mxu0 0.0
  %3361 = vmatpush2.msra.mxu0 0.0
  %3362 = vmatprep.subr.mxu0 0.0
  %3363 = vmatpush2.msra.mxu0 0.0
  %3364 = vmatprep.subr.mxu0 0.0
  %3365 = vmatpush2.msra.mxu0 0.0
  %3366 = vmatprep.subr.mxu0 0.0
  %3367 = vmatpush2.msra.mxu0 0.0
  %3368 = vmatprep.subr.mxu0 0.0
  %3369 = vmatpush2.msra.mxu0 0.0
  %3370 = vmatprep.mubr.f32.mxu0 0.0
  %3371 = vmatmul.mubr.f32.gmra.mxu0 %v3302
  %v3372 = vpop.f32.mrf.mxu0
  %v3373 = vadd.f32 %v3294, %v3372
  %v3374 = vpop.f32.mrf.mxu0
  %3375 = vmatprep.mubr.f32.mxu0 0.0
  %3376 = vmatmul.mubr.f32.gmra.mxu0 %v3304
  %v3377 = vpop.f32.mrf.mxu0
  %v3378 = vadd.f32 %v3294, %v3377
  %v3379 = vpop.f32.mrf.mxu0
  %3380 = vdwg.mxu0
  %v3381 = vlaneseq
  %v3382 = vshrl.u32 %v3381, 7
  %v3383 = vsub.s32 7, %v3382
  %v3384 = vrot.slane %v401, %v3383
  %v3385 = vadd.f32 %v3373, %v3384
  %v3386 = vmax.f32 %v3385, 0.0
  %v3387 = vlaneseq
  %v3388 = vshrl.u32 %v3387, 7
  %v3389 = vsub.s32 7, %v3388
  %v3390 = vrot.slane %v402, %v3389
  %v3391 = vadd.f32 %v3378, %v3390
  %v3392 = vmax.f32 %v3391, 0.0
  %v3393 = vld [vmem:[%s55] sm:$0xff]
  %v3394 = vld [vmem:[%s55 + $0x8] sm:$0xff]
  %v3395 = vld [vmem:[%s55 + $0x10] sm:$0xff]
  %v3396 = vld [vmem:[%s55 + $0x18] sm:$0xff]
  %v3397 = vld [vmem:[#allocation2] sm:$0x1]
  %v3399 = vlaneseq
  %v3400 = vshrl.u32 %v3399, 7
  %v3401 = vsub.s32 0, %v3400
  %v3402 = vrot.slane %v3397, %v3401
  %v3405 = vsel %vm247, %v3386, 0
  %v3408 = vsel %vm247, %v3392, 0
  %3410 = vmatprep.subr.mxu0 0.0
  %3411 = vmatpush1.msra.mxu0 0.0
  %3412 = vmatprep.subr.mxu0 0.0
  %3413 = vmatpush1.msra.mxu0 0.0
  %3414 = vmatprep.subr.mxu0 0.0
  %3415 = vmatpush1.msra.mxu0 0.0
  %3416 = vmatprep.subr.mxu0 0.0
  %3417 = vmatpush1.msra.mxu0 0.0
  %3418 = vmatprep.subr.mxu0 0.0
  %3419 = vmatpush1.msra.mxu0 0.0
  %3420 = vmatprep.subr.mxu0 0.0
  %3421 = vmatpush1.msra.mxu0 0.0
  %3422 = vmatprep.subr.mxu0 0.0
  %3423 = vmatpush1.msra.mxu0 0.0
  %3424 = vmatprep.subr.mxu0 0.0
  %3425 = vmatpush1.msra.mxu0 0.0
  %3426 = vmatprep.subr.mxu0 0.0
  %3427 = vmatpush1.msra.mxu0 0.0
  %3428 = vmatprep.subr.mxu0 0.0
  %3429 = vmatpush1.msra.mxu0 0.0
  %3430 = vmatprep.subr.mxu0 0.0
  %3431 = vmatpush1.msra.mxu0 0.0
  %3432 = vmatprep.subr.mxu0 0.0
  %3433 = vmatpush1.msra.mxu0 0.0
  %3434 = vmatprep.subr.mxu0 0.0
  %3435 = vmatpush1.msra.mxu0 %v3396
  %3436 = vmatprep.subr.mxu0 0.0
  %3437 = vmatpush1.msra.mxu0 %v3395
  %3438 = vmatprep.subr.mxu0 0.0
  %3439 = vmatpush1.msra.mxu0 %v3394
  %3440 = vmatprep.subr.mxu0 0.0
  %3441 = vmatpush1.msra.mxu0 %v3393
  %3442 = vmatprep.subr.mxu0 0.0
  %3443 = vmatpush2.msra.mxu0 0.0
  %3444 = vmatprep.subr.mxu0 0.0
  %3445 = vmatpush2.msra.mxu0 0.0
  %3446 = vmatprep.subr.mxu0 0.0
  %3447 = vmatpush2.msra.mxu0 0.0
  %3448 = vmatprep.subr.mxu0 0.0
  %3449 = vmatpush2.msra.mxu0 0.0
  %3450 = vmatprep.subr.mxu0 0.0
  %3451 = vmatpush2.msra.mxu0 0.0
  %3452 = vmatprep.subr.mxu0 0.0
  %3453 = vmatpush2.msra.mxu0 0.0
  %3454 = vmatprep.subr.mxu0 0.0
  %3455 = vmatpush2.msra.mxu0 0.0
  %3456 = vmatprep.subr.mxu0 0.0
  %3457 = vmatpush2.msra.mxu0 0.0
  %3458 = vmatprep.subr.mxu0 0.0
  %3459 = vmatpush2.msra.mxu0 0.0
  %3460 = vmatprep.subr.mxu0 0.0
  %3461 = vmatpush2.msra.mxu0 0.0
  %3462 = vmatprep.subr.mxu0 0.0
  %3463 = vmatpush2.msra.mxu0 0.0
  %3464 = vmatprep.subr.mxu0 0.0
  %3465 = vmatpush2.msra.mxu0 0.0
  %3466 = vmatprep.subr.mxu0 0.0
  %3467 = vmatpush2.msra.mxu0 0.0
  %3468 = vmatprep.subr.mxu0 0.0
  %3469 = vmatpush2.msra.mxu0 0.0
  %3470 = vmatprep.subr.mxu0 0.0
  %3471 = vmatpush2.msra.mxu0 0.0
  %3472 = vmatprep.subr.mxu0 0.0
  %3473 = vmatpush2.msra.mxu0 0.0
  %3474 = vmatprep.mubr.f32.mxu0 0.0
  %3475 = vmatmul.mubr.f32.gmra.mxu0 %v3405
  %v3476 = vpop.f32.mrf.mxu0
  %v3477 = vadd.f32 %v3402, %v3476
  %v3478 = vpop.f32.mrf.mxu0
  %3479 = vmatprep.mubr.f32.mxu0 0.0
  %3480 = vmatmul.mubr.f32.gmra.mxu0 %v3408
  %v3481 = vpop.f32.mrf.mxu0
  %v3482 = vadd.f32 %v3402, %v3481
  %v3483 = vpop.f32.mrf.mxu0
  %3484 = vdwg.mxu0
  %v3485 = vxor.u32 %v3477, 2147483648
  %v3486 = vxor.u32 %v3482, 2147483648
  %v3487 = vmul.f32 %v3485, 1.442695
  %v3488 = vpow.pop %v3487
  %v3489 = vmul.f32 %v3486, 1.442695
  %v3490 = vpow.pop %v3489
  %v3491 = vadd.f32 %v3488, 1.0
  %v3492 = vadd.f32 %v3490, 1.0
  %v3493 = vrcp.pop %v3491
  %v3494 = vmul.f32 1.0, %v3493
  %v3495 = vrcp.pop %v3492
  %v3496 = vmul.f32 1.0, %v3495
  %3497 = vst.msk [vmem:[%s59] sm:$0xff] %vm415, %v3494
  %3498 = vst.msk [vmem:[%s59 + $0x8] sm:$0xff] %vm415, %v3496
  // Predicated region
  $region118: #{stgcn_forward_pallas.1} parent=0 // pred_check
    _
  $region119: #{stgcn_forward_pallas.1} parent=0 // pred_check_branch
    %3500 = sbr.rel (0) target = $region121
  $region120: #{stgcn_forward_pallas.1} parent=0 // pred_region
    _
  $region121: #{stgcn_forward_pallas.1} parent=0 // pred_fallthru
    _
  // Predicated region
  $region122: #{stgcn_forward_pallas.1} parent=0 // pred_check
    _
  $region123: #{stgcn_forward_pallas.1} parent=0 // pred_check_branch
    %3502 = sbr.rel (0) target = $region125
  $region124: #{stgcn_forward_pallas.1} parent=0 // pred_region
    _
  $region125: #{stgcn_forward_pallas.1} parent=0 // pred_fallthru
    _

</llo_original>
